<compile_context>
chip_gen: v6e
topology: v6e:2x2x1
jax: 0.10.0
libtpu: 0.0.40
codegen_flags: <defaults>
</compile_context>

<pallas_src>
import functools
import math

import jax
import jax.numpy as jnp
from jax.experimental import pallas as pl
from jax.experimental.pallas import tpu as pltpu


# ----------------------------------------------------------------------------
# small in-kernel helpers
# ----------------------------------------------------------------------------
def _layernorm(y, gamma, beta, eps=1e-5):
    mu = jnp.mean(y, axis=-1, keepdims=True)
    var = jnp.mean(jnp.square(y - mu), axis=-1, keepdims=True)
    return (y - mu) * jax.lax.rsqrt(var + eps) * gamma + beta


def _sigmoid(x):
    # numerically stable sigmoid; tanh runs on the EUP
    return 0.5 * (jnp.tanh(0.5 * x) + 1.0)


# ----------------------------------------------------------------------------
# fused Generator kernel: grid axis = layer index ("arbitrary", sequential)
# ----------------------------------------------------------------------------
def generator_kernel(xz_ref, w_in_ref, b_in_ref,
                     temb_ref,
                     wq_ref, bq_ref, wk_ref, bk_ref, wv_ref, bv_ref,
                     wo_ref, bo_ref, g1_ref, beta1_ref,
                     w1_ref, b1_ref, w2_ref, b2_ref, g2_ref, beta2_ref,
                     w_head_ref, b_head_ref,
                     out_ref,
                     x_ref,
                     *, nhead, batch, seq):
    layer = pl.program_id(0)
    last = pl.num_programs(0) - 1

    # --- layer 0 only: fused input projection  relu(cat(layout,z) @ W + b) ---
    @pl.when(layer == 0)
    def _():
        y0 = (jnp.dot(xz_ref[...], w_in_ref[...],
                      preferred_element_type=jnp.float32) + b_in_ref[...])
        x_ref[...] = jnp.maximum(y0, 0.0)

    rows, d_model = x_ref.shape
    d_head = d_model // nhead
    scale = 1.0 / math.sqrt(d_head)

    # --- Block, attention half:  x += time_emb[t] ; y = LN1(x + MHA(x)) ------
    x = x_ref[...]                                                 # (M, D)
    x = (x.reshape(batch, seq, d_model) + temb_ref[0]).reshape(rows, d_model)

    wq, bq = wq_ref[0], bq_ref[0]      # (H, D, Dh), (H, 1, Dh)
    wk, bk = wk_ref[0], bk_ref[0]
    wv, bv = wv_ref[0], bv_ref[0]
    wo = wo_ref[0]                     # (H, Dh, D)

    attn = jnp.zeros((rows, d_model), jnp.float32)
    for h in range(nhead):             # static unroll; no lane slicing/concat
        qh = (jnp.dot(x, wq[h], preferred_element_type=jnp.float32)
              + bq[h]).reshape(batch, seq, d_head)
        kh = (jnp.dot(x, wk[h], preferred_element_type=jnp.float32)
              + bk[h]).reshape(batch, seq, d_head)
        vh = (jnp.dot(x, wv[h], preferred_element_type=jnp.float32)
              + bv[h]).reshape(batch, seq, d_head)
        s = jnp.einsum('bqd,bkd->bqk', qh, kh,
                       preferred_element_type=jnp.float32) * scale
        s = s - jnp.max(s, axis=-1, keepdims=True)
        p = jnp.exp(s)
        p = p * pl.reciprocal(jnp.sum(p, axis=-1, keepdims=True), approx=True)
        ctx = jnp.einsum('bqk,bkd->bqd', p, vh,
                         preferred_element_type=jnp.float32)
        # fold head context back through the per-head row block of W_o
        attn = attn + jnp.dot(ctx.reshape(rows, d_head), wo[h],
                              preferred_element_type=jnp.float32)
    y = _layernorm(x + attn + bo_ref[0], g1_ref[0], beta1_ref[0])

    # --- Block, FFN half:  y2 = LN2(y + W2 @ relu(W1 @ y)) -------------------
    hdn = jnp.maximum(
        jnp.dot(y, w1_ref[0], preferred_element_type=jnp.float32) + b1_ref[0],
        0.0)
    y2 = y + jnp.dot(hdn, w2_ref[0],
                     preferred_element_type=jnp.float32) + b2_ref[0]
    y2 = _layernorm(y2, g2_ref[0], beta2_ref[0])

    # Generator.forward applies relu between blocks (not after the last one).
    # x_ref is dead after the last layer, so the unconditional relu is safe;
    # the head below uses the pre-relu y2, matching the reference.
    x_ref[...] = jnp.maximum(y2, 0.0)

    # --- last layer only: fused heads  sigmoid(cat(fc_label, fc_bbox)) -------
    @pl.when(layer == last)
    def _():
        logits = (jnp.dot(y2, w_head_ref[...],
                          preferred_element_type=jnp.float32) + b_head_ref[...])
        out_ref[...] = _sigmoid(logits).astype(out_ref.dtype)


# ----------------------------------------------------------------------------
# parameter construction (deterministic, PyTorch-Linear-like uniform init),
# with host-side algebraic pre-composition / per-head splitting / stacking.
# ----------------------------------------------------------------------------
def _linear(key, fan_in, fan_out):
    kw, kb = jax.random.split(key)
    bound = 1.0 / math.sqrt(fan_in)
    w = jax.random.uniform(kw, (fan_in, fan_out), jnp.float32, -bound, bound)
    b = jax.random.uniform(kb, (1, fan_out), jnp.float32, -bound, bound)
    return w, b


def make_params(key, b_size, label_size, d_model, nhead, num_layers,
                z_dim, d_ff, diffusion_step):
    keys = jax.random.split(key, 8)
    d_head = d_model // nhead

    # input path: fc_in / fc_z / fc_all composed into one affine map on
    # cat(layout, z)  (no nonlinearity between them -> mathematically identical)
    w_in, b_in = _linear(keys[0], b_size + label_size, d_model)
    w_z, b_z = _linear(keys[1], z_dim, 32)
    w_all, b_all = _linear(keys[2], d_model + 32, d_model)
    w_all_x, w_all_z = w_all[:d_model], w_all[d_model:]
    w_comb = jnp.concatenate([w_in @ w_all_x, w_z @ w_all_z], axis=0)
    b_comb = b_in @ w_all_x + b_z @ w_all_z + b_all

    # output heads fused into one (D, 4 + label_size) matmul; order = (cls, bbox)
    w_bbox, b_bbox = _linear(keys[3], d_model, label_size)
    w_lbl, b_lbl = _linear(keys[4], d_model, 4)
    w_head = jnp.concatenate([w_lbl, w_bbox], axis=1)
    b_head = jnp.concatenate([b_lbl, b_bbox], axis=1)

    # one Block, cloned num_layers times (_get_clones / deepcopy-at-init
    # semantics: every layer shares identical initial weights)
    bkeys = jax.random.split(keys[5], 8)
    wq, bq = _linear(bkeys[0], d_model, d_model)
    wk, bk = _linear(bkeys[1], d_model, d_model)
    wv, bv = _linear(bkeys[2], d_model, d_model)
    wo, bo = _linear(bkeys[3], d_model, d_model)
    w1, b1 = _linear(bkeys[4], d_model, d_ff)
    w2, b2 = _linear(bkeys[5], d_ff, d_model)
    time_emb = 0.02 * jax.random.normal(bkeys[6], (diffusion_step, d_model),
                                        jnp.float32)

    def split_cols(w):   # (D, D) -> (H, D, Dh): per-head output columns
        return w.reshape(d_model, nhead, d_head).transpose(1, 0, 2)

    def split_bias(b):   # (1, D) -> (H, 1, Dh)
        return b.reshape(nhead, 1, d_head)

    def stack(a):        # clone across layers with a leading L axis
        return jnp.stack([a] * num_layers, axis=0)

    return dict(
        w_in=w_comb, b_in=b_comb,
        w_head=w_head, b_head=b_head,
        time_emb=stack(time_emb),                         # (L, T, D)
        wq=stack(split_cols(wq)), bq=stack(split_bias(bq)),
        wk=stack(split_cols(wk)), bk=stack(split_bias(bk)),
        wv=stack(split_cols(wv)), bv=stack(split_bias(bv)),
        wo=stack(wo.reshape(nhead, d_head, d_model)),     # per-head rows of W_o
        bo=stack(bo),
        g1=stack(jnp.ones((1, d_model), jnp.float32)),
        beta1=stack(jnp.zeros((1, d_model), jnp.float32)),
        w1=stack(w1), b1=stack(b1),
        w2=stack(w2), b2=stack(b2),
        g2=stack(jnp.ones((1, d_model), jnp.float32)),
        beta2=stack(jnp.zeros((1, d_model), jnp.float32)),
    )


# ----------------------------------------------------------------------------
# wrapper: one pallas_call for the whole forward pass
# ----------------------------------------------------------------------------
def _const_spec(shape):
    zeros = (0,) * len(shape)
    return pl.BlockSpec(tuple(shape), lambda l, z=zeros: z)


def _layer_spec(shape):
    rest = (0,) * (len(shape) - 1)
    return pl.BlockSpec((1,) + tuple(shape[1:]), lambda l, r=rest: (l,) + r)


def generator_forward(params, layout, padding_mask, latent_z, timestep, *, nhead):
    del padding_mask  # reference forward() nulls the mask -> unmasked attention
    batch, seq, _ = layout.shape
    rows = batch * seq
    d_model = params["w_in"].shape[1]
    num_layers = params["wq"].shape[0]
    out_dim = params["w_head"].shape[1]

    xz = jnp.concatenate([layout, latent_z], axis=-1).reshape(rows, -1)
    # per-layer, per-sample additive diffusion-step embedding: (L, B, 1, D)
    temb = jnp.take(params["time_emb"], timestep, axis=1)[:, :, None, :]

    const_in = [xz, params["w_in"], params["b_in"]]
    layer_in = [temb,
                params["wq"], params["bq"], params["wk"], params["bk"],
                params["wv"], params["bv"], params["wo"], params["bo"],
                params["g1"], params["beta1"],
                params["w1"], params["b1"], params["w2"], params["b2"],
                params["g2"], params["beta2"]]
    tail_in = [params["w_head"], params["b_head"]]

    in_specs = ([_const_spec(a.shape) for a in const_in]
                + [_layer_spec(a.shape) for a in layer_in]
                + [_const_spec(a.shape) for a in tail_in])

    out = pl.pallas_call(
        functools.partial(generator_kernel, nhead=nhead, batch=batch, seq=seq),
        out_shape=jax.ShapeDtypeStruct((rows, out_dim), jnp.float32),
        grid=(num_layers,),
        in_specs=in_specs,
        out_specs=pl.BlockSpec((rows, out_dim), lambda l: (0, 0)),
        scratch_shapes=[pltpu.VMEM((rows, d_model), jnp.float32)],
        compiler_params=pltpu.CompilerParams(
            dimension_semantics=("arbitrary",)),
    )(*const_in, *layer_in, *tail_in)
    return out.reshape(batch, seq, out_dim)


# ----------------------------------------------------------------------------
if __name__ == "__main__":
    B, S = 2, 8
    b_size, label_size, z_dim = 4, 4, 4
    d_model, nhead, num_layers = 128, 4, 2
    d_ff, diffusion_step = 256, 4

    key = jax.random.PRNGKey(0)
    k_param, k_layout, k_z, k_t = jax.random.split(key, 4)

    params = make_params(k_param, b_size, label_size, d_model, nhead,
                         num_layers, z_dim, d_ff, diffusion_step)

    layout = jax.random.normal(k_layout, (B, S, b_size + label_size), jnp.float32)
    padding_mask = jnp.zeros((B, S), jnp.bool_)   # ignored (forward nulls it)
    latent_z = jax.random.normal(k_z, (B, S, z_dim), jnp.float32)
    timestep = jax.random.randint(k_t, (B,), 0, diffusion_step, jnp.int32)

    out = generator_forward(params, layout, padding_mask, latent_z, timestep,
                            nhead=nhead)
    jax.block_until_ready(out)
    assert out.shape == (B, S, 4 + label_size)
    assert bool(jnp.all(jnp.isfinite(out)))
    assert bool(jnp.all((out >= -1e-6) & (out <= 1.0 + 1e-6)))  # sigmoid range
    print("KERNEL_OK")
</pallas_src>

<mosaic_0001>
module attributes {stable_mosaic.version = 11 : i64} {
  func.func @generator_kernel(%arg0: i32, %arg1: memref<16x12xf32, #tpu.memory_space<vmem>>, %arg2: memref<12x128xf32, #tpu.memory_space<vmem>>, %arg3: memref<1x128xf32, #tpu.memory_space<vmem>>, %arg4: memref<1x2x1x128xf32, #tpu.memory_space<vmem>>, %arg5: memref<1x4x128x32xf32, #tpu.memory_space<vmem>>, %arg6: memref<1x4x1x32xf32, #tpu.memory_space<vmem>>, %arg7: memref<1x4x128x32xf32, #tpu.memory_space<vmem>>, %arg8: memref<1x4x1x32xf32, #tpu.memory_space<vmem>>, %arg9: memref<1x4x128x32xf32, #tpu.memory_space<vmem>>, %arg10: memref<1x4x1x32xf32, #tpu.memory_space<vmem>>, %arg11: memref<1x4x32x128xf32, #tpu.memory_space<vmem>>, %arg12: memref<1x1x128xf32, #tpu.memory_space<vmem>>, %arg13: memref<1x1x128xf32, #tpu.memory_space<vmem>>, %arg14: memref<1x1x128xf32, #tpu.memory_space<vmem>>, %arg15: memref<1x128x256xf32, #tpu.memory_space<vmem>>, %arg16: memref<1x1x256xf32, #tpu.memory_space<vmem>>, %arg17: memref<1x256x128xf32, #tpu.memory_space<vmem>>, %arg18: memref<1x1x128xf32, #tpu.memory_space<vmem>>, %arg19: memref<1x1x128xf32, #tpu.memory_space<vmem>>, %arg20: memref<1x1x128xf32, #tpu.memory_space<vmem>>, %arg21: memref<128x8xf32, #tpu.memory_space<vmem>>, %arg22: memref<1x8xf32, #tpu.memory_space<vmem>>, %arg23: memref<16x8xf32, #tpu.memory_space<vmem>>, %arg24: memref<16x128xf32, #tpu.memory_space<vmem>>) attributes {dimension_semantics = [#tpu.dimension_semantics<arbitrary>], iteration_bounds = array<i64: 2>, scalar_prefetch = 0 : i64, scratch_operands = 1 : i64, tpu.core_type = #tpu.core_type<tc>, window_params = [{pipeline_mode = #tpu.pipeline_mode<synchronous>, transform_indices = @transform_0, window_bounds = array<i64: 16, 12>}, {pipeline_mode = #tpu.pipeline_mode<synchronous>, transform_indices = @transform_1, window_bounds = array<i64: 12, 128>}, {pipeline_mode = #tpu.pipeline_mode<synchronous>, transform_indices = @transform_2, window_bounds = array<i64: 1, 128>}, {transform_indices = @transform_3, window_bounds = array<i64: 1, 2, 1, 128>}, {transform_indices = @transform_4, window_bounds = array<i64: 1, 4, 128, 32>}, {transform_indices = @transform_5, window_bounds = array<i64: 1, 4, 1, 32>}, {transform_indices = @transform_6, window_bounds = array<i64: 1, 4, 128, 32>}, {transform_indices = @transform_7, window_bounds = array<i64: 1, 4, 1, 32>}, {transform_indices = @transform_8, window_bounds = array<i64: 1, 4, 128, 32>}, {transform_indices = @transform_9, window_bounds = array<i64: 1, 4, 1, 32>}, {transform_indices = @transform_10, window_bounds = array<i64: 1, 4, 32, 128>}, {transform_indices = @transform_11, window_bounds = array<i64: 1, 1, 128>}, {transform_indices = @transform_12, window_bounds = array<i64: 1, 1, 128>}, {transform_indices = @transform_13, window_bounds = array<i64: 1, 1, 128>}, {transform_indices = @transform_14, window_bounds = array<i64: 1, 128, 256>}, {transform_indices = @transform_15, window_bounds = array<i64: 1, 1, 256>}, {transform_indices = @transform_16, window_bounds = array<i64: 1, 256, 128>}, {transform_indices = @transform_17, window_bounds = array<i64: 1, 1, 128>}, {transform_indices = @transform_18, window_bounds = array<i64: 1, 1, 128>}, {transform_indices = @transform_19, window_bounds = array<i64: 1, 1, 128>}, {pipeline_mode = #tpu.pipeline_mode<synchronous>, transform_indices = @transform_20, window_bounds = array<i64: 128, 8>}, {pipeline_mode = #tpu.pipeline_mode<synchronous>, transform_indices = @transform_21, window_bounds = array<i64: 1, 8>}, {pipeline_mode = #tpu.pipeline_mode<synchronous>, transform_indices = @transform_22, window_bounds = array<i64: 16, 8>}]} {
    %c0_i32 = arith.constant 0 : i32
    %0 = arith.cmpi eq, %arg0, %c0_i32 : i32
    %1 = arith.extui %0 : i1 to i32
    %c0_i32_0 = arith.constant 0 : i32
    %2 = arith.cmpi ne, %1, %c0_i32_0 : i32
    scf.if %2 {
      %c0_114 = arith.constant 0 : index
      %c0_115 = arith.constant 0 : index
      %277 = vector.load %arg1[%c0_114, %c0_115] : memref<16x12xf32, #tpu.memory_space<vmem>>, vector<16x12xf32>
      %c0_116 = arith.constant 0 : index
      %c0_117 = arith.constant 0 : index
      %278 = vector.load %arg2[%c0_116, %c0_117] : memref<12x128xf32, #tpu.memory_space<vmem>>, vector<12x128xf32>
      %cst_118 = arith.constant dense<0.000000e+00> : vector<16x128xf32>
      %279 = tpu.matmul %277, %278, %cst_118 {dimension_numbers = #tpu.dot_dimension_numbers<[1], [0], [0], [1], [0, 0, 1, 1], [], []>} : vector<16x12xf32>, vector<12x128xf32>, vector<16x128xf32> -> vector<16x128xf32>
      %c0_119 = arith.constant 0 : index
      %c0_120 = arith.constant 0 : index
      %280 = vector.load %arg3[%c0_119, %c0_120] : memref<1x128xf32, #tpu.memory_space<vmem>>, vector<1x128xf32>
      %281 = vector.broadcast %280 : vector<1x128xf32> to vector<16x128xf32>
      %282 = arith.addf %279, %281 : vector<16x128xf32>
      %cst_121 = arith.constant 0.000000e+00 : f32
      %283 = vector.broadcast %cst_121 : f32 to vector<16x128xf32>
      %284 = arith.maximumf %282, %283 : vector<16x128xf32>
      %c0_122 = arith.constant 0 : index
      %c0_123 = arith.constant 0 : index
      %285 = vector.load %arg24[%c0_122, %c0_123] : memref<16x128xf32, #tpu.memory_space<vmem>>, vector<16x128xf32>
      tpu.vector_store %arg24[%c0_122, %c0_123], %284 {strides = array<i32>} : memref<16x128xf32, #tpu.memory_space<vmem>>, vector<16x128xf32>,
    } else {
    }
    %c0 = arith.constant 0 : index
    %c0_1 = arith.constant 0 : index
    %3 = vector.load %arg24[%c0, %c0_1] : memref<16x128xf32, #tpu.memory_space<vmem>>, vector<16x128xf32>
    %4 = vector.shape_cast %3 : vector<16x128xf32> to vector<2x8x128xf32>
    %c0_2 = arith.constant 0 : index
    %c0_3 = arith.constant 0 : index
    %c0_4 = arith.constant 0 : index
    %c0_5 = arith.constant 0 : index
    %5 = vector.load %arg4[%c0_2, %c0_3, %c0_4, %c0_5] : memref<1x2x1x128xf32, #tpu.memory_space<vmem>>, vector<1x2x1x128xf32>
    %6 = vector.shape_cast %5 : vector<1x2x1x128xf32> to vector<2x1x128xf32>
    %7 = vector.broadcast %6 : vector<2x1x128xf32> to vector<2x8x128xf32>
    %8 = arith.addf %4, %7 : vector<2x8x128xf32>
    %9 = vector.shape_cast %8 : vector<2x8x128xf32> to vector<16x128xf32>
    %c0_6 = arith.constant 0 : index
    %c0_7 = arith.constant 0 : index
    %c0_8 = arith.constant 0 : index
    %c0_9 = arith.constant 0 : index
    %10 = vector.load %arg5[%c0_6, %c0_7, %c0_8, %c0_9] : memref<1x4x128x32xf32, #tpu.memory_space<vmem>>, vector<1x4x128x32xf32>
    %11 = vector.shape_cast %10 : vector<1x4x128x32xf32> to vector<4x128x32xf32>
    %c0_10 = arith.constant 0 : index
    %c0_11 = arith.constant 0 : index
    %c0_12 = arith.constant 0 : index
    %c0_13 = arith.constant 0 : index
    %12 = vector.load %arg6[%c0_10, %c0_11, %c0_12, %c0_13] : memref<1x4x1x32xf32, #tpu.memory_space<vmem>>, vector<1x4x1x32xf32>
    %13 = vector.shape_cast %12 : vector<1x4x1x32xf32> to vector<4x1x32xf32>
    %c0_14 = arith.constant 0 : index
    %c0_15 = arith.constant 0 : index
    %c0_16 = arith.constant 0 : index
    %c0_17 = arith.constant 0 : index
    %14 = vector.load %arg7[%c0_14, %c0_15, %c0_16, %c0_17] : memref<1x4x128x32xf32, #tpu.memory_space<vmem>>, vector<1x4x128x32xf32>
    %15 = vector.shape_cast %14 : vector<1x4x128x32xf32> to vector<4x128x32xf32>
    %c0_18 = arith.constant 0 : index
    %c0_19 = arith.constant 0 : index
    %c0_20 = arith.constant 0 : index
    %c0_21 = arith.constant 0 : index
    %16 = vector.load %arg8[%c0_18, %c0_19, %c0_20, %c0_21] : memref<1x4x1x32xf32, #tpu.memory_space<vmem>>, vector<1x4x1x32xf32>
    %17 = vector.shape_cast %16 : vector<1x4x1x32xf32> to vector<4x1x32xf32>
    %c0_22 = arith.constant 0 : index
    %c0_23 = arith.constant 0 : index
    %c0_24 = arith.constant 0 : index
    %c0_25 = arith.constant 0 : index
    %18 = vector.load %arg9[%c0_22, %c0_23, %c0_24, %c0_25] : memref<1x4x128x32xf32, #tpu.memory_space<vmem>>, vector<1x4x128x32xf32>
    %19 = vector.shape_cast %18 : vector<1x4x128x32xf32> to vector<4x128x32xf32>
    %c0_26 = arith.constant 0 : index
    %c0_27 = arith.constant 0 : index
    %c0_28 = arith.constant 0 : index
    %c0_29 = arith.constant 0 : index
    %20 = vector.load %arg10[%c0_26, %c0_27, %c0_28, %c0_29] : memref<1x4x1x32xf32, #tpu.memory_space<vmem>>, vector<1x4x1x32xf32>
    %21 = vector.shape_cast %20 : vector<1x4x1x32xf32> to vector<4x1x32xf32>
    %c0_30 = arith.constant 0 : index
    %c0_31 = arith.constant 0 : index
    %c0_32 = arith.constant 0 : index
    %c0_33 = arith.constant 0 : index
    %22 = vector.load %arg11[%c0_30, %c0_31, %c0_32, %c0_33] : memref<1x4x32x128xf32, #tpu.memory_space<vmem>>, vector<1x4x32x128xf32>
    %23 = vector.shape_cast %22 : vector<1x4x32x128xf32> to vector<4x32x128xf32>
    %cst = arith.constant 0.000000e+00 : f32
    %24 = vector.broadcast %cst : f32 to vector<16x128xf32>
    %25 = vector.extract_strided_slice %11 {offsets = [0, 0, 0], sizes = [1, 128, 32], strides = [1, 1, 1]} : vector<4x128x32xf32> to vector<1x128x32xf32>
    %26 = vector.shape_cast %25 : vector<1x128x32xf32> to vector<128x32xf32>
    %cst_34 = arith.constant dense<0.000000e+00> : vector<16x32xf32>
    %27 = tpu.matmul %9, %26, %cst_34 {dimension_numbers = #tpu.dot_dimension_numbers<[1], [0], [0], [1], [0, 0, 1, 1], [], []>} : vector<16x128xf32>, vector<128x32xf32>, vector<16x32xf32> -> vector<16x32xf32>
    %28 = vector.extract_strided_slice %13 {offsets = [0, 0, 0], sizes = [1, 1, 32], strides = [1, 1, 1]} : vector<4x1x32xf32> to vector<1x1x32xf32>
    %29 = vector.shape_cast %28 : vector<1x1x32xf32> to vector<1x32xf32>
    %30 = vector.broadcast %29 : vector<1x32xf32> to vector<16x32xf32>
    %31 = arith.addf %27, %30 : vector<16x32xf32>
    %32 = vector.shape_cast %31 : vector<16x32xf32> to vector<2x8x32xf32>
    %33 = vector.extract_strided_slice %15 {offsets = [0, 0, 0], sizes = [1, 128, 32], strides = [1, 1, 1]} : vector<4x128x32xf32> to vector<1x128x32xf32>
    %34 = vector.shape_cast %33 : vector<1x128x32xf32> to vector<128x32xf32>
    %cst_35 = arith.constant dense<0.000000e+00> : vector<16x32xf32>
    %35 = tpu.matmul %9, %34, %cst_35 {dimension_numbers = #tpu.dot_dimension_numbers<[1], [0], [0], [1], [0, 0, 1, 1], [], []>} : vector<16x128xf32>, vector<128x32xf32>, vector<16x32xf32> -> vector<16x32xf32>
    %36 = vector.extract_strided_slice %17 {offsets = [0, 0, 0], sizes = [1, 1, 32], strides = [1, 1, 1]} : vector<4x1x32xf32> to vector<1x1x32xf32>
    %37 = vector.shape_cast %36 : vector<1x1x32xf32> to vector<1x32xf32>
    %38 = vector.broadcast %37 : vector<1x32xf32> to vector<16x32xf32>
    %39 = arith.addf %35, %38 : vector<16x32xf32>
    %40 = vector.shape_cast %39 : vector<16x32xf32> to vector<2x8x32xf32>
    %41 = vector.extract_strided_slice %19 {offsets = [0, 0, 0], sizes = [1, 128, 32], strides = [1, 1, 1]} : vector<4x128x32xf32> to vector<1x128x32xf32>
    %42 = vector.shape_cast %41 : vector<1x128x32xf32> to vector<128x32xf32>
    %cst_36 = arith.constant dense<0.000000e+00> : vector<16x32xf32>
    %43 = tpu.matmul %9, %42, %cst_36 {dimension_numbers = #tpu.dot_dimension_numbers<[1], [0], [0], [1], [0, 0, 1, 1], [], []>} : vector<16x128xf32>, vector<128x32xf32>, vector<16x32xf32> -> vector<16x32xf32>
    %44 = vector.extract_strided_slice %21 {offsets = [0, 0, 0], sizes = [1, 1, 32], strides = [1, 1, 1]} : vector<4x1x32xf32> to vector<1x1x32xf32>
    %45 = vector.shape_cast %44 : vector<1x1x32xf32> to vector<1x32xf32>
    %46 = vector.broadcast %45 : vector<1x32xf32> to vector<16x32xf32>
    %47 = arith.addf %43, %46 : vector<16x32xf32>
    %48 = vector.shape_cast %47 : vector<16x32xf32> to vector<2x8x32xf32>
    "tpu.trace_start"() <{level = 10 : i32, message = "bqd,bkd->bqk"}> : () -> ()
    %cst_37 = arith.constant dense<0.000000e+00> : vector<2x8x8xf32>
    %49 = tpu.matmul %32, %40, %cst_37 {dimension_numbers = #tpu.dot_dimension_numbers<[2], [2], [1], [1], [0, 0, 0, 1, 1, 1], [0], [0]>} : vector<2x8x32xf32>, vector<2x8x32xf32>, vector<2x8x8xf32> -> vector<2x8x8xf32>
    "tpu.trace_stop"() : () -> ()
    %cst_38 = arith.constant 0.176776692 : f32
    %50 = vector.broadcast %cst_38 : f32 to vector<2x8x8xf32>
    %51 = arith.mulf %49, %50 : vector<2x8x8xf32>
    %cst_39 = arith.constant dense<0xFF800000> : vector<2x8xf32>
    %52 = vector.multi_reduction <maximumf>, %51, %cst_39 [2] : vector<2x8x8xf32> to vector<2x8xf32>
    %53 = vector.shape_cast %52 : vector<2x8xf32> to vector<2x8x1xf32>
    %54 = vector.broadcast %53 : vector<2x8x1xf32> to vector<2x8x8xf32>
    %55 = arith.subf %51, %54 : vector<2x8x8xf32>
    %56 = math.exp %55 : vector<2x8x8xf32>
    %cst_40 = arith.constant dense<0.000000e+00> : vector<2x8xf32>
    %57 = vector.multi_reduction <add>, %56, %cst_40 [2] : vector<2x8x8xf32> to vector<2x8xf32>
    %58 = vector.shape_cast %57 : vector<2x8xf32> to vector<2x8x1xf32>
    %59 = tpu.reciprocal %58 {approx = true} : vector<2x8x1xf32> -> vector<2x8x1xf32>
    %60 = vector.broadcast %59 : vector<2x8x1xf32> to vector<2x8x8xf32>
    %61 = arith.mulf %56, %60 : vector<2x8x8xf32>
    "tpu.trace_start"() <{level = 10 : i32, message = "bqk,bkd->bqd"}> : () -> ()
    %cst_41 = arith.constant dense<0.000000e+00> : vector<2x8x32xf32>
    %62 = tpu.matmul %61, %48, %cst_41 {dimension_numbers = #tpu.dot_dimension_numbers<[2], [1], [1], [2], [0, 0, 0, 1, 1, 2], [0], [0]>} : vector<2x8x8xf32>, vector<2x8x32xf32>, vector<2x8x32xf32> -> vector<2x8x32xf32>
    "tpu.trace_stop"() : () -> ()
    %63 = vector.shape_cast %62 : vector<2x8x32xf32> to vector<16x32xf32>
    %64 = vector.extract_strided_slice %23 {offsets = [0, 0, 0], sizes = [1, 32, 128], strides = [1, 1, 1]} : vector<4x32x128xf32> to vector<1x32x128xf32>
    %65 = vector.shape_cast %64 : vector<1x32x128xf32> to vector<32x128xf32>
    %cst_42 = arith.constant dense<0.000000e+00> : vector<16x128xf32>
    %66 = tpu.matmul %63, %65, %cst_42 {dimension_numbers = #tpu.dot_dimension_numbers<[1], [0], [0], [1], [0, 0, 1, 1], [], []>} : vector<16x32xf32>, vector<32x128xf32>, vector<16x128xf32> -> vector<16x128xf32>
    %67 = arith.addf %24, %66 : vector<16x128xf32>
    %68 = vector.extract_strided_slice %11 {offsets = [1, 0, 0], sizes = [1, 128, 32], strides = [1, 1, 1]} : vector<4x128x32xf32> to vector<1x128x32xf32>
    %69 = vector.shape_cast %68 : vector<1x128x32xf32> to vector<128x32xf32>
    %cst_43 = arith.constant dense<0.000000e+00> : vector<16x32xf32>
    %70 = tpu.matmul %9, %69, %cst_43 {dimension_numbers = #tpu.dot_dimension_numbers<[1], [0], [0], [1], [0, 0, 1, 1], [], []>} : vector<16x128xf32>, vector<128x32xf32>, vector<16x32xf32> -> vector<16x32xf32>
    %71 = vector.extract_strided_slice %13 {offsets = [1, 0, 0], sizes = [1, 1, 32], strides = [1, 1, 1]} : vector<4x1x32xf32> to vector<1x1x32xf32>
    %72 = vector.shape_cast %71 : vector<1x1x32xf32> to vector<1x32xf32>
    %73 = vector.broadcast %72 : vector<1x32xf32> to vector<16x32xf32>
    %74 = arith.addf %70, %73 : vector<16x32xf32>
    %75 = vector.shape_cast %74 : vector<16x32xf32> to vector<2x8x32xf32>
    %76 = vector.extract_strided_slice %15 {offsets = [1, 0, 0], sizes = [1, 128, 32], strides = [1, 1, 1]} : vector<4x128x32xf32> to vector<1x128x32xf32>
    %77 = vector.shape_cast %76 : vector<1x128x32xf32> to vector<128x32xf32>
    %cst_44 = arith.constant dense<0.000000e+00> : vector<16x32xf32>
    %78 = tpu.matmul %9, %77, %cst_44 {dimension_numbers = #tpu.dot_dimension_numbers<[1], [0], [0], [1], [0, 0, 1, 1], [], []>} : vector<16x128xf32>, vector<128x32xf32>, vector<16x32xf32> -> vector<16x32xf32>
    %79 = vector.extract_strided_slice %17 {offsets = [1, 0, 0], sizes = [1, 1, 32], strides = [1, 1, 1]} : vector<4x1x32xf32> to vector<1x1x32xf32>
    %80 = vector.shape_cast %79 : vector<1x1x32xf32> to vector<1x32xf32>
    %81 = vector.broadcast %80 : vector<1x32xf32> to vector<16x32xf32>
    %82 = arith.addf %78, %81 : vector<16x32xf32>
    %83 = vector.shape_cast %82 : vector<16x32xf32> to vector<2x8x32xf32>
    %84 = vector.extract_strided_slice %19 {offsets = [1, 0, 0], sizes = [1, 128, 32], strides = [1, 1, 1]} : vector<4x128x32xf32> to vector<1x128x32xf32>
    %85 = vector.shape_cast %84 : vector<1x128x32xf32> to vector<128x32xf32>
    %cst_45 = arith.constant dense<0.000000e+00> : vector<16x32xf32>
    %86 = tpu.matmul %9, %85, %cst_45 {dimension_numbers = #tpu.dot_dimension_numbers<[1], [0], [0], [1], [0, 0, 1, 1], [], []>} : vector<16x128xf32>, vector<128x32xf32>, vector<16x32xf32> -> vector<16x32xf32>
    %87 = vector.extract_strided_slice %21 {offsets = [1, 0, 0], sizes = [1, 1, 32], strides = [1, 1, 1]} : vector<4x1x32xf32> to vector<1x1x32xf32>
    %88 = vector.shape_cast %87 : vector<1x1x32xf32> to vector<1x32xf32>
    %89 = vector.broadcast %88 : vector<1x32xf32> to vector<16x32xf32>
    %90 = arith.addf %86, %89 : vector<16x32xf32>
    %91 = vector.shape_cast %90 : vector<16x32xf32> to vector<2x8x32xf32>
    "tpu.trace_start"() <{level = 10 : i32, message = "bqd,bkd->bqk"}> : () -> ()
    %cst_46 = arith.constant dense<0.000000e+00> : vector<2x8x8xf32>
    %92 = tpu.matmul %75, %83, %cst_46 {dimension_numbers = #tpu.dot_dimension_numbers<[2], [2], [1], [1], [0, 0, 0, 1, 1, 1], [0], [0]>} : vector<2x8x32xf32>, vector<2x8x32xf32>, vector<2x8x8xf32> -> vector<2x8x8xf32>
    "tpu.trace_stop"() : () -> ()
    %cst_47 = arith.constant 0.176776692 : f32
    %93 = vector.broadcast %cst_47 : f32 to vector<2x8x8xf32>
    %94 = arith.mulf %92, %93 : vector<2x8x8xf32>
    %cst_48 = arith.constant dense<0xFF800000> : vector<2x8xf32>
    %95 = vector.multi_reduction <maximumf>, %94, %cst_48 [2] : vector<2x8x8xf32> to vector<2x8xf32>
    %96 = vector.shape_cast %95 : vector<2x8xf32> to vector<2x8x1xf32>
    %97 = vector.broadcast %96 : vector<2x8x1xf32> to vector<2x8x8xf32>
    %98 = arith.subf %94, %97 : vector<2x8x8xf32>
    %99 = math.exp %98 : vector<2x8x8xf32>
    %cst_49 = arith.constant dense<0.000000e+00> : vector<2x8xf32>
    %100 = vector.multi_reduction <add>, %99, %cst_49 [2] : vector<2x8x8xf32> to vector<2x8xf32>
    %101 = vector.shape_cast %100 : vector<2x8xf32> to vector<2x8x1xf32>
    %102 = tpu.reciprocal %101 {approx = true} : vector<2x8x1xf32> -> vector<2x8x1xf32>
    %103 = vector.broadcast %102 : vector<2x8x1xf32> to vector<2x8x8xf32>
    %104 = arith.mulf %99, %103 : vector<2x8x8xf32>
    "tpu.trace_start"() <{level = 10 : i32, message = "bqk,bkd->bqd"}> : () -> ()
    %cst_50 = arith.constant dense<0.000000e+00> : vector<2x8x32xf32>
    %105 = tpu.matmul %104, %91, %cst_50 {dimension_numbers = #tpu.dot_dimension_numbers<[2], [1], [1], [2], [0, 0, 0, 1, 1, 2], [0], [0]>} : vector<2x8x8xf32>, vector<2x8x32xf32>, vector<2x8x32xf32> -> vector<2x8x32xf32>
    "tpu.trace_stop"() : () -> ()
    %106 = vector.shape_cast %105 : vector<2x8x32xf32> to vector<16x32xf32>
    %107 = vector.extract_strided_slice %23 {offsets = [1, 0, 0], sizes = [1, 32, 128], strides = [1, 1, 1]} : vector<4x32x128xf32> to vector<1x32x128xf32>
    %108 = vector.shape_cast %107 : vector<1x32x128xf32> to vector<32x128xf32>
    %cst_51 = arith.constant dense<0.000000e+00> : vector<16x128xf32>
    %109 = tpu.matmul %106, %108, %cst_51 {dimension_numbers = #tpu.dot_dimension_numbers<[1], [0], [0], [1], [0, 0, 1, 1], [], []>} : vector<16x32xf32>, vector<32x128xf32>, vector<16x128xf32> -> vector<16x128xf32>
    %110 = arith.addf %67, %109 : vector<16x128xf32>
    %111 = vector.extract_strided_slice %11 {offsets = [2, 0, 0], sizes = [1, 128, 32], strides = [1, 1, 1]} : vector<4x128x32xf32> to vector<1x128x32xf32>
    %112 = vector.shape_cast %111 : vector<1x128x32xf32> to vector<128x32xf32>
    %cst_52 = arith.constant dense<0.000000e+00> : vector<16x32xf32>
    %113 = tpu.matmul %9, %112, %cst_52 {dimension_numbers = #tpu.dot_dimension_numbers<[1], [0], [0], [1], [0, 0, 1, 1], [], []>} : vector<16x128xf32>, vector<128x32xf32>, vector<16x32xf32> -> vector<16x32xf32>
    %114 = vector.extract_strided_slice %13 {offsets = [2, 0, 0], sizes = [1, 1, 32], strides = [1, 1, 1]} : vector<4x1x32xf32> to vector<1x1x32xf32>
    %115 = vector.shape_cast %114 : vector<1x1x32xf32> to vector<1x32xf32>
    %116 = vector.broadcast %115 : vector<1x32xf32> to vector<16x32xf32>
    %117 = arith.addf %113, %116 : vector<16x32xf32>
    %118 = vector.shape_cast %117 : vector<16x32xf32> to vector<2x8x32xf32>
    %119 = vector.extract_strided_slice %15 {offsets = [2, 0, 0], sizes = [1, 128, 32], strides = [1, 1, 1]} : vector<4x128x32xf32> to vector<1x128x32xf32>
    %120 = vector.shape_cast %119 : vector<1x128x32xf32> to vector<128x32xf32>
    %cst_53 = arith.constant dense<0.000000e+00> : vector<16x32xf32>
    %121 = tpu.matmul %9, %120, %cst_53 {dimension_numbers = #tpu.dot_dimension_numbers<[1], [0], [0], [1], [0, 0, 1, 1], [], []>} : vector<16x128xf32>, vector<128x32xf32>, vector<16x32xf32> -> vector<16x32xf32>
    %122 = vector.extract_strided_slice %17 {offsets = [2, 0, 0], sizes = [1, 1, 32], strides = [1, 1, 1]} : vector<4x1x32xf32> to vector<1x1x32xf32>
    %123 = vector.shape_cast %122 : vector<1x1x32xf32> to vector<1x32xf32>
    %124 = vector.broadcast %123 : vector<1x32xf32> to vector<16x32xf32>
    %125 = arith.addf %121, %124 : vector<16x32xf32>
    %126 = vector.shape_cast %125 : vector<16x32xf32> to vector<2x8x32xf32>
    %127 = vector.extract_strided_slice %19 {offsets = [2, 0, 0], sizes = [1, 128, 32], strides = [1, 1, 1]} : vector<4x128x32xf32> to vector<1x128x32xf32>
    %128 = vector.shape_cast %127 : vector<1x128x32xf32> to vector<128x32xf32>
    %cst_54 = arith.constant dense<0.000000e+00> : vector<16x32xf32>
    %129 = tpu.matmul %9, %128, %cst_54 {dimension_numbers = #tpu.dot_dimension_numbers<[1], [0], [0], [1], [0, 0, 1, 1], [], []>} : vector<16x128xf32>, vector<128x32xf32>, vector<16x32xf32> -> vector<16x32xf32>
    %130 = vector.extract_strided_slice %21 {offsets = [2, 0, 0], sizes = [1, 1, 32], strides = [1, 1, 1]} : vector<4x1x32xf32> to vector<1x1x32xf32>
    %131 = vector.shape_cast %130 : vector<1x1x32xf32> to vector<1x32xf32>
    %132 = vector.broadcast %131 : vector<1x32xf32> to vector<16x32xf32>
    %133 = arith.addf %129, %132 : vector<16x32xf32>
    %134 = vector.shape_cast %133 : vector<16x32xf32> to vector<2x8x32xf32>
    "tpu.trace_start"() <{level = 10 : i32, message = "bqd,bkd->bqk"}> : () -> ()
    %cst_55 = arith.constant dense<0.000000e+00> : vector<2x8x8xf32>
    %135 = tpu.matmul %118, %126, %cst_55 {dimension_numbers = #tpu.dot_dimension_numbers<[2], [2], [1], [1], [0, 0, 0, 1, 1, 1], [0], [0]>} : vector<2x8x32xf32>, vector<2x8x32xf32>, vector<2x8x8xf32> -> vector<2x8x8xf32>
    "tpu.trace_stop"() : () -> ()
    %cst_56 = arith.constant 0.176776692 : f32
    %136 = vector.broadcast %cst_56 : f32 to vector<2x8x8xf32>
    %137 = arith.mulf %135, %136 : vector<2x8x8xf32>
    %cst_57 = arith.constant dense<0xFF800000> : vector<2x8xf32>
    %138 = vector.multi_reduction <maximumf>, %137, %cst_57 [2] : vector<2x8x8xf32> to vector<2x8xf32>
    %139 = vector.shape_cast %138 : vector<2x8xf32> to vector<2x8x1xf32>
    %140 = vector.broadcast %139 : vector<2x8x1xf32> to vector<2x8x8xf32>
    %141 = arith.subf %137, %140 : vector<2x8x8xf32>
    %142 = math.exp %141 : vector<2x8x8xf32>
    %cst_58 = arith.constant dense<0.000000e+00> : vector<2x8xf32>
    %143 = vector.multi_reduction <add>, %142, %cst_58 [2] : vector<2x8x8xf32> to vector<2x8xf32>
    %144 = vector.shape_cast %143 : vector<2x8xf32> to vector<2x8x1xf32>
    %145 = tpu.reciprocal %144 {approx = true} : vector<2x8x1xf32> -> vector<2x8x1xf32>
    %146 = vector.broadcast %145 : vector<2x8x1xf32> to vector<2x8x8xf32>
    %147 = arith.mulf %142, %146 : vector<2x8x8xf32>
    "tpu.trace_start"() <{level = 10 : i32, message = "bqk,bkd->bqd"}> : () -> ()
    %cst_59 = arith.constant dense<0.000000e+00> : vector<2x8x32xf32>
    %148 = tpu.matmul %147, %134, %cst_59 {dimension_numbers = #tpu.dot_dimension_numbers<[2], [1], [1], [2], [0, 0, 0, 1, 1, 2], [0], [0]>} : vector<2x8x8xf32>, vector<2x8x32xf32>, vector<2x8x32xf32> -> vector<2x8x32xf32>
    "tpu.trace_stop"() : () -> ()
    %149 = vector.shape_cast %148 : vector<2x8x32xf32> to vector<16x32xf32>
    %150 = vector.extract_strided_slice %23 {offsets = [2, 0, 0], sizes = [1, 32, 128], strides = [1, 1, 1]} : vector<4x32x128xf32> to vector<1x32x128xf32>
    %151 = vector.shape_cast %150 : vector<1x32x128xf32> to vector<32x128xf32>
    %cst_60 = arith.constant dense<0.000000e+00> : vector<16x128xf32>
    %152 = tpu.matmul %149, %151, %cst_60 {dimension_numbers = #tpu.dot_dimension_numbers<[1], [0], [0], [1], [0, 0, 1, 1], [], []>} : vector<16x32xf32>, vector<32x128xf32>, vector<16x128xf32> -> vector<16x128xf32>
    %153 = arith.addf %110, %152 : vector<16x128xf32>
    %154 = vector.extract_strided_slice %11 {offsets = [3, 0, 0], sizes = [1, 128, 32], strides = [1, 1, 1]} : vector<4x128x32xf32> to vector<1x128x32xf32>
    %155 = vector.shape_cast %154 : vector<1x128x32xf32> to vector<128x32xf32>
    %cst_61 = arith.constant dense<0.000000e+00> : vector<16x32xf32>
    %156 = tpu.matmul %9, %155, %cst_61 {dimension_numbers = #tpu.dot_dimension_numbers<[1], [0], [0], [1], [0, 0, 1, 1], [], []>} : vector<16x128xf32>, vector<128x32xf32>, vector<16x32xf32> -> vector<16x32xf32>
    %157 = vector.extract_strided_slice %13 {offsets = [3, 0, 0], sizes = [1, 1, 32], strides = [1, 1, 1]} : vector<4x1x32xf32> to vector<1x1x32xf32>
    %158 = vector.shape_cast %157 : vector<1x1x32xf32> to vector<1x32xf32>
    %159 = vector.broadcast %158 : vector<1x32xf32> to vector<16x32xf32>
    %160 = arith.addf %156, %159 : vector<16x32xf32>
    %161 = vector.shape_cast %160 : vector<16x32xf32> to vector<2x8x32xf32>
    %162 = vector.extract_strided_slice %15 {offsets = [3, 0, 0], sizes = [1, 128, 32], strides = [1, 1, 1]} : vector<4x128x32xf32> to vector<1x128x32xf32>
    %163 = vector.shape_cast %162 : vector<1x128x32xf32> to vector<128x32xf32>
    %cst_62 = arith.constant dense<0.000000e+00> : vector<16x32xf32>
    %164 = tpu.matmul %9, %163, %cst_62 {dimension_numbers = #tpu.dot_dimension_numbers<[1], [0], [0], [1], [0, 0, 1, 1], [], []>} : vector<16x128xf32>, vector<128x32xf32>, vector<16x32xf32> -> vector<16x32xf32>
    %165 = vector.extract_strided_slice %17 {offsets = [3, 0, 0], sizes = [1, 1, 32], strides = [1, 1, 1]} : vector<4x1x32xf32> to vector<1x1x32xf32>
    %166 = vector.shape_cast %165 : vector<1x1x32xf32> to vector<1x32xf32>
    %167 = vector.broadcast %166 : vector<1x32xf32> to vector<16x32xf32>
    %168 = arith.addf %164, %167 : vector<16x32xf32>
    %169 = vector.shape_cast %168 : vector<16x32xf32> to vector<2x8x32xf32>
    %170 = vector.extract_strided_slice %19 {offsets = [3, 0, 0], sizes = [1, 128, 32], strides = [1, 1, 1]} : vector<4x128x32xf32> to vector<1x128x32xf32>
    %171 = vector.shape_cast %170 : vector<1x128x32xf32> to vector<128x32xf32>
    %cst_63 = arith.constant dense<0.000000e+00> : vector<16x32xf32>
    %172 = tpu.matmul %9, %171, %cst_63 {dimension_numbers = #tpu.dot_dimension_numbers<[1], [0], [0], [1], [0, 0, 1, 1], [], []>} : vector<16x128xf32>, vector<128x32xf32>, vector<16x32xf32> -> vector<16x32xf32>
    %173 = vector.extract_strided_slice %21 {offsets = [3, 0, 0], sizes = [1, 1, 32], strides = [1, 1, 1]} : vector<4x1x32xf32> to vector<1x1x32xf32>
    %174 = vector.shape_cast %173 : vector<1x1x32xf32> to vector<1x32xf32>
    %175 = vector.broadcast %174 : vector<1x32xf32> to vector<16x32xf32>
    %176 = arith.addf %172, %175 : vector<16x32xf32>
    %177 = vector.shape_cast %176 : vector<16x32xf32> to vector<2x8x32xf32>
    "tpu.trace_start"() <{level = 10 : i32, message = "bqd,bkd->bqk"}> : () -> ()
    %cst_64 = arith.constant dense<0.000000e+00> : vector<2x8x8xf32>
    %178 = tpu.matmul %161, %169, %cst_64 {dimension_numbers = #tpu.dot_dimension_numbers<[2], [2], [1], [1], [0, 0, 0, 1, 1, 1], [0], [0]>} : vector<2x8x32xf32>, vector<2x8x32xf32>, vector<2x8x8xf32> -> vector<2x8x8xf32>
    "tpu.trace_stop"() : () -> ()
    %cst_65 = arith.constant 0.176776692 : f32
    %179 = vector.broadcast %cst_65 : f32 to vector<2x8x8xf32>
    %180 = arith.mulf %178, %179 : vector<2x8x8xf32>
    %cst_66 = arith.constant dense<0xFF800000> : vector<2x8xf32>
    %181 = vector.multi_reduction <maximumf>, %180, %cst_66 [2] : vector<2x8x8xf32> to vector<2x8xf32>
    %182 = vector.shape_cast %181 : vector<2x8xf32> to vector<2x8x1xf32>
    %183 = vector.broadcast %182 : vector<2x8x1xf32> to vector<2x8x8xf32>
    %184 = arith.subf %180, %183 : vector<2x8x8xf32>
    %185 = math.exp %184 : vector<2x8x8xf32>
    %cst_67 = arith.constant dense<0.000000e+00> : vector<2x8xf32>
    %186 = vector.multi_reduction <add>, %185, %cst_67 [2] : vector<2x8x8xf32> to vector<2x8xf32>
    %187 = vector.shape_cast %186 : vector<2x8xf32> to vector<2x8x1xf32>
    %188 = tpu.reciprocal %187 {approx = true} : vector<2x8x1xf32> -> vector<2x8x1xf32>
    %189 = vector.broadcast %188 : vector<2x8x1xf32> to vector<2x8x8xf32>
    %190 = arith.mulf %185, %189 : vector<2x8x8xf32>
    "tpu.trace_start"() <{level = 10 : i32, message = "bqk,bkd->bqd"}> : () -> ()
    %cst_68 = arith.constant dense<0.000000e+00> : vector<2x8x32xf32>
    %191 = tpu.matmul %190, %177, %cst_68 {dimension_numbers = #tpu.dot_dimension_numbers<[2], [1], [1], [2], [0, 0, 0, 1, 1, 2], [0], [0]>} : vector<2x8x8xf32>, vector<2x8x32xf32>, vector<2x8x32xf32> -> vector<2x8x32xf32>
    "tpu.trace_stop"() : () -> ()
    %192 = vector.shape_cast %191 : vector<2x8x32xf32> to vector<16x32xf32>
    %193 = vector.extract_strided_slice %23 {offsets = [3, 0, 0], sizes = [1, 32, 128], strides = [1, 1, 1]} : vector<4x32x128xf32> to vector<1x32x128xf32>
    %194 = vector.shape_cast %193 : vector<1x32x128xf32> to vector<32x128xf32>
    %cst_69 = arith.constant dense<0.000000e+00> : vector<16x128xf32>
    %195 = tpu.matmul %192, %194, %cst_69 {dimension_numbers = #tpu.dot_dimension_numbers<[1], [0], [0], [1], [0, 0, 1, 1], [], []>} : vector<16x32xf32>, vector<32x128xf32>, vector<16x128xf32> -> vector<16x128xf32>
    %196 = arith.addf %153, %195 : vector<16x128xf32>
    %197 = arith.addf %9, %196 : vector<16x128xf32>
    %c0_70 = arith.constant 0 : index
    %c0_71 = arith.constant 0 : index
    %c0_72 = arith.constant 0 : index
    %198 = vector.load %arg12[%c0_70, %c0_71, %c0_72] : memref<1x1x128xf32, #tpu.memory_space<vmem>>, vector<1x1x128xf32>
    %199 = vector.shape_cast %198 : vector<1x1x128xf32> to vector<1x128xf32>
    %200 = vector.broadcast %199 : vector<1x128xf32> to vector<16x128xf32>
    %201 = arith.addf %197, %200 : vector<16x128xf32>
    %c0_73 = arith.constant 0 : index
    %c0_74 = arith.constant 0 : index
    %c0_75 = arith.constant 0 : index
    %202 = vector.load %arg13[%c0_73, %c0_74, %c0_75] : memref<1x1x128xf32, #tpu.memory_space<vmem>>, vector<1x1x128xf32>
    %203 = vector.shape_cast %202 : vector<1x1x128xf32> to vector<1x128xf32>
    %c0_76 = arith.constant 0 : index
    %c0_77 = arith.constant 0 : index
    %c0_78 = arith.constant 0 : index
    %204 = vector.load %arg14[%c0_76, %c0_77, %c0_78] : memref<1x1x128xf32, #tpu.memory_space<vmem>>, vector<1x1x128xf32>
    %205 = vector.shape_cast %204 : vector<1x1x128xf32> to vector<1x128xf32>
    %cst_79 = arith.constant dense<0.000000e+00> : vector<16xf32>
    %206 = vector.multi_reduction <add>, %201, %cst_79 [1] : vector<16x128xf32> to vector<16xf32>
    %207 = vector.shape_cast %206 : vector<16xf32> to vector<16x1xf32>
    %cst_80 = arith.constant 1.280000e+02 : f32
    %208 = vector.broadcast %cst_80 : f32 to vector<16x1xf32>
    %209 = arith.divf %207, %208 : vector<16x1xf32>
    %210 = vector.broadcast %209 : vector<16x1xf32> to vector<16x128xf32>
    %211 = arith.subf %201, %210 : vector<16x128xf32>
    %212 = arith.mulf %211, %211 : vector<16x128xf32>
    %cst_81 = arith.constant dense<0.000000e+00> : vector<16xf32>
    %213 = vector.multi_reduction <add>, %212, %cst_81 [1] : vector<16x128xf32> to vector<16xf32>
    %214 = vector.shape_cast %213 : vector<16xf32> to vector<16x1xf32>
    %cst_82 = arith.constant 1.280000e+02 : f32
    %215 = vector.broadcast %cst_82 : f32 to vector<16x1xf32>
    %216 = arith.divf %214, %215 : vector<16x1xf32>
    %217 = vector.broadcast %209 : vector<16x1xf32> to vector<16x128xf32>
    %218 = arith.subf %201, %217 : vector<16x128xf32>
    %cst_83 = arith.constant 9.99999974E-6 : f32
    %219 = vector.broadcast %cst_83 : f32 to vector<16x1xf32>
    %220 = arith.addf %216, %219 : vector<16x1xf32>
    %221 = math.rsqrt %220 : vector<16x1xf32>
    %222 = vector.broadcast %221 : vector<16x1xf32> to vector<16x128xf32>
    %223 = arith.mulf %218, %222 : vector<16x128xf32>
    %224 = vector.broadcast %203 : vector<1x128xf32> to vector<16x128xf32>
    %225 = arith.mulf %223, %224 : vector<16x128xf32>
    %226 = vector.broadcast %205 : vector<1x128xf32> to vector<16x128xf32>
    %227 = arith.addf %225, %226 : vector<16x128xf32>
    %c0_84 = arith.constant 0 : index
    %c0_85 = arith.constant 0 : index
    %c0_86 = arith.constant 0 : index
    %228 = vector.load %arg15[%c0_84, %c0_85, %c0_86] : memref<1x128x256xf32, #tpu.memory_space<vmem>>, vector<1x128x256xf32>
    %229 = vector.shape_cast %228 : vector<1x128x256xf32> to vector<128x256xf32>
    %cst_87 = arith.constant dense<0.000000e+00> : vector<16x256xf32>
    %230 = tpu.matmul %227, %229, %cst_87 {dimension_numbers = #tpu.dot_dimension_numbers<[1], [0], [0], [1], [0, 0, 1, 1], [], []>} : vector<16x128xf32>, vector<128x256xf32>, vector<16x256xf32> -> vector<16x256xf32>
    %c0_88 = arith.constant 0 : index
    %c0_89 = arith.constant 0 : index
    %c0_90 = arith.constant 0 : index
    %231 = vector.load %arg16[%c0_88, %c0_89, %c0_90] : memref<1x1x256xf32, #tpu.memory_space<vmem>>, vector<1x1x256xf32>
    %232 = vector.shape_cast %231 : vector<1x1x256xf32> to vector<1x256xf32>
    %233 = vector.broadcast %232 : vector<1x256xf32> to vector<16x256xf32>
    %234 = arith.addf %230, %233 : vector<16x256xf32>
    %cst_91 = arith.constant 0.000000e+00 : f32
    %235 = vector.broadcast %cst_91 : f32 to vector<16x256xf32>
    %236 = arith.maximumf %234, %235 : vector<16x256xf32>
    %c0_92 = arith.constant 0 : index
    %c0_93 = arith.constant 0 : index
    %c0_94 = arith.constant 0 : index
    %237 = vector.load %arg17[%c0_92, %c0_93, %c0_94] : memref<1x256x128xf32, #tpu.memory_space<vmem>>, vector<1x256x128xf32>
    %238 = vector.shape_cast %237 : vector<1x256x128xf32> to vector<256x128xf32>
    %cst_95 = arith.constant dense<0.000000e+00> : vector<16x128xf32>
    %239 = tpu.matmul %236, %238, %cst_95 {dimension_numbers = #tpu.dot_dimension_numbers<[1], [0], [0], [1], [0, 0, 1, 1], [], []>} : vector<16x256xf32>, vector<256x128xf32>, vector<16x128xf32> -> vector<16x128xf32>
    %240 = arith.addf %227, %239 : vector<16x128xf32>
    %c0_96 = arith.constant 0 : index
    %c0_97 = arith.constant 0 : index
    %c0_98 = arith.constant 0 : index
    %241 = vector.load %arg18[%c0_96, %c0_97, %c0_98] : memref<1x1x128xf32, #tpu.memory_space<vmem>>, vector<1x1x128xf32>
    %242 = vector.shape_cast %241 : vector<1x1x128xf32> to vector<1x128xf32>
    %243 = vector.broadcast %242 : vector<1x128xf32> to vector<16x128xf32>
    %244 = arith.addf %240, %243 : vector<16x128xf32>
    %c0_99 = arith.constant 0 : index
    %c0_100 = arith.constant 0 : index
    %c0_101 = arith.constant 0 : index
    %245 = vector.load %arg19[%c0_99, %c0_100, %c0_101] : memref<1x1x128xf32, #tpu.memory_space<vmem>>, vector<1x1x128xf32>
    %246 = vector.shape_cast %245 : vector<1x1x128xf32> to vector<1x128xf32>
    %c0_102 = arith.constant 0 : index
    %c0_103 = arith.constant 0 : index
    %c0_104 = arith.constant 0 : index
    %247 = vector.load %arg20[%c0_102, %c0_103, %c0_104] : memref<1x1x128xf32, #tpu.memory_space<vmem>>, vector<1x1x128xf32>
    %248 = vector.shape_cast %247 : vector<1x1x128xf32> to vector<1x128xf32>
    %cst_105 = arith.constant dense<0.000000e+00> : vector<16xf32>
    %249 = vector.multi_reduction <add>, %244, %cst_105 [1] : vector<16x128xf32> to vector<16xf32>
    %250 = vector.shape_cast %249 : vector<16xf32> to vector<16x1xf32>
    %cst_106 = arith.constant 1.280000e+02 : f32
    %251 = vector.broadcast %cst_106 : f32 to vector<16x1xf32>
    %252 = arith.divf %250, %251 : vector<16x1xf32>
    %253 = vector.broadcast %252 : vector<16x1xf32> to vector<16x128xf32>
    %254 = arith.subf %244, %253 : vector<16x128xf32>
    %255 = arith.mulf %254, %254 : vector<16x128xf32>
    %cst_107 = arith.constant dense<0.000000e+00> : vector<16xf32>
    %256 = vector.multi_reduction <add>, %255, %cst_107 [1] : vector<16x128xf32> to vector<16xf32>
    %257 = vector.shape_cast %256 : vector<16xf32> to vector<16x1xf32>
    %cst_108 = arith.constant 1.280000e+02 : f32
    %258 = vector.broadcast %cst_108 : f32 to vector<16x1xf32>
    %259 = arith.divf %257, %258 : vector<16x1xf32>
    %260 = vector.broadcast %252 : vector<16x1xf32> to vector<16x128xf32>
    %261 = arith.subf %244, %260 : vector<16x128xf32>
    %cst_109 = arith.constant 9.99999974E-6 : f32
    %262 = vector.broadcast %cst_109 : f32 to vector<16x1xf32>
    %263 = arith.addf %259, %262 : vector<16x1xf32>
    %264 = math.rsqrt %263 : vector<16x1xf32>
    %265 = vector.broadcast %264 : vector<16x1xf32> to vector<16x128xf32>
    %266 = arith.mulf %261, %265 : vector<16x128xf32>
    %267 = vector.broadcast %246 : vector<1x128xf32> to vector<16x128xf32>
    %268 = arith.mulf %266, %267 : vector<16x128xf32>
    %269 = vector.broadcast %248 : vector<1x128xf32> to vector<16x128xf32>
    %270 = arith.addf %268, %269 : vector<16x128xf32>
    %cst_110 = arith.constant 0.000000e+00 : f32
    %271 = vector.broadcast %cst_110 : f32 to vector<16x128xf32>
    %272 = arith.maximumf %270, %271 : vector<16x128xf32>
    %c0_111 = arith.constant 0 : index
    %c0_112 = arith.constant 0 : index
    %273 = vector.load %arg24[%c0_111, %c0_112] : memref<16x128xf32, #tpu.memory_space<vmem>>, vector<16x128xf32>
    tpu.vector_store %arg24[%c0_111, %c0_112], %272 {strides = array<i32>} : memref<16x128xf32, #tpu.memory_space<vmem>>, vector<16x128xf32>,
    %c1_i32 = arith.constant 1 : i32
    %274 = arith.cmpi eq, %arg0, %c1_i32 : i32
    %275 = arith.extui %274 : i1 to i32
    %c0_i32_113 = arith.constant 0 : i32
    %276 = arith.cmpi ne, %275, %c0_i32_113 : i32
    scf.if %276 {
      %c0_114 = arith.constant 0 : index
      %c0_115 = arith.constant 0 : index
      %277 = vector.load %arg21[%c0_114, %c0_115] : memref<128x8xf32, #tpu.memory_space<vmem>>, vector<128x8xf32>
      %cst_116 = arith.constant dense<0.000000e+00> : vector<16x8xf32>
      %278 = tpu.matmul %270, %277, %cst_116 {dimension_numbers = #tpu.dot_dimension_numbers<[1], [0], [0], [1], [0, 0, 1, 1], [], []>} : vector<16x128xf32>, vector<128x8xf32>, vector<16x8xf32> -> vector<16x8xf32>
      %c0_117 = arith.constant 0 : index
      %c0_118 = arith.constant 0 : index
      %279 = vector.load %arg22[%c0_117, %c0_118] : memref<1x8xf32, #tpu.memory_space<vmem>>, vector<1x8xf32>
      %280 = vector.broadcast %279 : vector<1x8xf32> to vector<16x8xf32>
      %281 = arith.addf %278, %280 : vector<16x8xf32>
      %cst_119 = arith.constant 5.000000e-01 : f32
      %282 = vector.broadcast %cst_119 : f32 to vector<16x8xf32>
      %283 = arith.mulf %282, %281 : vector<16x8xf32>
      %284 = math.tanh %283 : vector<16x8xf32>
      %cst_120 = arith.constant 1.000000e+00 : f32
      %285 = vector.broadcast %cst_120 : f32 to vector<16x8xf32>
      %286 = arith.addf %284, %285 : vector<16x8xf32>
      %cst_121 = arith.constant 5.000000e-01 : f32
      %287 = vector.broadcast %cst_121 : f32 to vector<16x8xf32>
      %288 = arith.mulf %287, %286 : vector<16x8xf32>
      %c0_122 = arith.constant 0 : index
      %c0_123 = arith.constant 0 : index
      %289 = vector.load %arg23[%c0_122, %c0_123] : memref<16x8xf32, #tpu.memory_space<vmem>>, vector<16x8xf32>
      tpu.vector_store %arg23[%c0_122, %c0_123], %288 {strides = array<i32>} : memref<16x8xf32, #tpu.memory_space<vmem>>, vector<16x8xf32>,
    } else {
    }
    return
  }
  func.func @transform_0(%arg0: i32) -> (i32, i32) {
    %c0_i32 = arith.constant 0 : i32
    %c0_i32_0 = arith.constant 0 : i32
    %c0_i32_1 = arith.constant 0 : i32
    return %c0_i32, %c0_i32_0 : i32, i32
  }
  func.func @transform_1(%arg0: i32) -> (i32, i32) {
    %c0_i32 = arith.constant 0 : i32
    %c0_i32_0 = arith.constant 0 : i32
    %c0_i32_1 = arith.constant 0 : i32
    return %c0_i32, %c0_i32_0 : i32, i32
  }
  func.func @transform_2(%arg0: i32) -> (i32, i32) {
    %c0_i32 = arith.constant 0 : i32
    %c0_i32_0 = arith.constant 0 : i32
    %c0_i32_1 = arith.constant 0 : i32
    return %c0_i32, %c0_i32_0 : i32, i32
  }
  func.func @transform_3(%arg0: i32) -> (i32, i32, i32, i32) {
    %c0_i32 = arith.constant 0 : i32
    %c0_i32_0 = arith.constant 0 : i32
    %c0_i32_1 = arith.constant 0 : i32
    %c0_i32_2 = arith.constant 0 : i32
    return %arg0, %c0_i32, %c0_i32_0, %c0_i32_1 : i32, i32, i32, i32
  }
  func.func @transform_4(%arg0: i32) -> (i32, i32, i32, i32) {
    %c0_i32 = arith.constant 0 : i32
    %c0_i32_0 = arith.constant 0 : i32
    %c0_i32_1 = arith.constant 0 : i32
    %c0_i32_2 = arith.constant 0 : i32
    return %arg0, %c0_i32, %c0_i32_0, %c0_i32_1 : i32, i32, i32, i32
  }
  func.func @transform_5(%arg0: i32) -> (i32, i32, i32, i32) {
    %c0_i32 = arith.constant 0 : i32
    %c0_i32_0 = arith.constant 0 : i32
    %c0_i32_1 = arith.constant 0 : i32
    %c0_i32_2 = arith.constant 0 : i32
    return %arg0, %c0_i32, %c0_i32_0, %c0_i32_1 : i32, i32, i32, i32
  }
  func.func @transform_6(%arg0: i32) -> (i32, i32, i32, i32) {
    %c0_i32 = arith.constant 0 : i32
    %c0_i32_0 = arith.constant 0 : i32
    %c0_i32_1 = arith.constant 0 : i32
    %c0_i32_2 = arith.constant 0 : i32
    return %arg0, %c0_i32, %c0_i32_0, %c0_i32_1 : i32, i32, i32, i32
  }
  func.func @transform_7(%arg0: i32) -> (i32, i32, i32, i32) {
    %c0_i32 = arith.constant 0 : i32
    %c0_i32_0 = arith.constant 0 : i32
    %c0_i32_1 = arith.constant 0 : i32
    %c0_i32_2 = arith.constant 0 : i32
    return %arg0, %c0_i32, %c0_i32_0, %c0_i32_1 : i32, i32, i32, i32
  }
  func.func @transform_8(%arg0: i32) -> (i32, i32, i32, i32) {
    %c0_i32 = arith.constant 0 : i32
    %c0_i32_0 = arith.constant 0 : i32
    %c0_i32_1 = arith.constant 0 : i32
    %c0_i32_2 = arith.constant 0 : i32
    return %arg0, %c0_i32, %c0_i32_0, %c0_i32_1 : i32, i32, i32, i32
  }
  func.func @transform_9(%arg0: i32) -> (i32, i32, i32, i32) {
    %c0_i32 = arith.constant 0 : i32
    %c0_i32_0 = arith.constant 0 : i32
    %c0_i32_1 = arith.constant 0 : i32
    %c0_i32_2 = arith.constant 0 : i32
    return %arg0, %c0_i32, %c0_i32_0, %c0_i32_1 : i32, i32, i32, i32
  }
  func.func @transform_10(%arg0: i32) -> (i32, i32, i32, i32) {
    %c0_i32 = arith.constant 0 : i32
    %c0_i32_0 = arith.constant 0 : i32
    %c0_i32_1 = arith.constant 0 : i32
    %c0_i32_2 = arith.constant 0 : i32
    return %arg0, %c0_i32, %c0_i32_0, %c0_i32_1 : i32, i32, i32, i32
  }
  func.func @transform_11(%arg0: i32) -> (i32, i32, i32) {
    %c0_i32 = arith.constant 0 : i32
    %c0_i32_0 = arith.constant 0 : i32
    %c0_i32_1 = arith.constant 0 : i32
    return %arg0, %c0_i32, %c0_i32_0 : i32, i32, i32
  }
  func.func @transform_12(%arg0: i32) -> (i32, i32, i32) {
    %c0_i32 = arith.constant 0 : i32
    %c0_i32_0 = arith.constant 0 : i32
    %c0_i32_1 = arith.constant 0 : i32
    return %arg0, %c0_i32, %c0_i32_0 : i32, i32, i32
  }
  func.func @transform_13(%arg0: i32) -> (i32, i32, i32) {
    %c0_i32 = arith.constant 0 : i32
    %c0_i32_0 = arith.constant 0 : i32
    %c0_i32_1 = arith.constant 0 : i32
    return %arg0, %c0_i32, %c0_i32_0 : i32, i32, i32
  }
  func.func @transform_14(%arg0: i32) -> (i32, i32, i32) {
    %c0_i32 = arith.constant 0 : i32
    %c0_i32_0 = arith.constant 0 : i32
    %c0_i32_1 = arith.constant 0 : i32
    return %arg0, %c0_i32, %c0_i32_0 : i32, i32, i32
  }
  func.func @transform_15(%arg0: i32) -> (i32, i32, i32) {
    %c0_i32 = arith.constant 0 : i32
    %c0_i32_0 = arith.constant 0 : i32
    %c0_i32_1 = arith.constant 0 : i32
    return %arg0, %c0_i32, %c0_i32_0 : i32, i32, i32
  }
  func.func @transform_16(%arg0: i32) -> (i32, i32, i32) {
    %c0_i32 = arith.constant 0 : i32
    %c0_i32_0 = arith.constant 0 : i32
    %c0_i32_1 = arith.constant 0 : i32
    return %arg0, %c0_i32, %c0_i32_0 : i32, i32, i32
  }
  func.func @transform_17(%arg0: i32) -> (i32, i32, i32) {
    %c0_i32 = arith.constant 0 : i32
    %c0_i32_0 = arith.constant 0 : i32
    %c0_i32_1 = arith.constant 0 : i32
    return %arg0, %c0_i32, %c0_i32_0 : i32, i32, i32
  }
  func.func @transform_18(%arg0: i32) -> (i32, i32, i32) {
    %c0_i32 = arith.constant 0 : i32
    %c0_i32_0 = arith.constant 0 : i32
    %c0_i32_1 = arith.constant 0 : i32
    return %arg0, %c0_i32, %c0_i32_0 : i32, i32, i32
  }
  func.func @transform_19(%arg0: i32) -> (i32, i32, i32) {
    %c0_i32 = arith.constant 0 : i32
    %c0_i32_0 = arith.constant 0 : i32
    %c0_i32_1 = arith.constant 0 : i32
    return %arg0, %c0_i32, %c0_i32_0 : i32, i32, i32
  }
  func.func @transform_20(%arg0: i32) -> (i32, i32) {
    %c0_i32 = arith.constant 0 : i32
    %c0_i32_0 = arith.constant 0 : i32
    %c0_i32_1 = arith.constant 0 : i32
    return %c0_i32, %c0_i32_0 : i32, i32
  }
  func.func @transform_21(%arg0: i32) -> (i32, i32) {
    %c0_i32 = arith.constant 0 : i32
    %c0_i32_0 = arith.constant 0 : i32
    %c0_i32_1 = arith.constant 0 : i32
    return %c0_i32, %c0_i32_0 : i32, i32
  }
  func.func @transform_22(%arg0: i32) -> (i32, i32) {
    %c0_i32 = arith.constant 0 : i32
    %c0_i32_0 = arith.constant 0 : i32
    %c0_i32_1 = arith.constant 0 : i32
    return %c0_i32, %c0_i32_0 : i32, i32
  }
}

</mosaic_0001>

<llo_original>
// kernel: tpu_custom_call.1
$region0: #{tpu_custom_call.1}
  #allocation0 [shape = 'u32[]', space=smem, size = 0x4, offset = 0x4, fixed_abs, tag = 'smem constant byte address 0x4 - core index']
  #allocation1 [shape = 'u32[144,128]{1,0:T(1,128)}', space=vmem, size = 0x12000, scoped, tag = 'internal scratch']
  #allocation2 [shape = 'f32[16,128]{1,0:T(8,128)}', space=vmem, size = 0x2000, scoped, tag = 'scratch operand']
  %s0 = inlined_call_operand.vmem [shape: f32[16,12], index: 0, kind: input, shape index: {}]
  %s1 = inlined_call_operand.vmem [shape: f32[12,128], index: 1, kind: input, shape index: {}]
  %s2 = inlined_call_operand.vmem [shape: f32[1,128], index: 2, kind: input, shape index: {}]
  %s3 = inlined_call_operand.vmem [shape: f32[2,2,1,128], index: 3, kind: input, shape index: {}]
  %s4 = inlined_call_operand.vmem [shape: f32[2,4,128,32], index: 4, kind: input, shape index: {}]
  %s5 = inlined_call_operand.vmem [shape: f32[2,4,1,32], index: 5, kind: input, shape index: {}]
  %s6 = inlined_call_operand.vmem [shape: f32[2,4,128,32], index: 6, kind: input, shape index: {}]
  %s7 = inlined_call_operand.vmem [shape: f32[2,4,1,32], index: 7, kind: input, shape index: {}]
  %s8 = inlined_call_operand.vmem [shape: f32[2,4,128,32], index: 8, kind: input, shape index: {}]
  %s9 = inlined_call_operand.vmem [shape: f32[2,4,1,32], index: 9, kind: input, shape index: {}]
  %s10 = inlined_call_operand.vmem [shape: f32[2,4,32,128], index: 10, kind: input, shape index: {}]
  %s11 = inlined_call_operand.vmem [shape: f32[2,1,128], index: 11, kind: input, shape index: {}]
  %s12 = inlined_call_operand.vmem [shape: f32[2,1,128], index: 12, kind: input, shape index: {}]
  %s13 = inlined_call_operand.vmem [shape: f32[2,1,128], index: 13, kind: input, shape index: {}]
  %s14 = inlined_call_operand.vmem [shape: f32[2,128,256], index: 14, kind: input, shape index: {}]
  %s15 = inlined_call_operand.vmem [shape: f32[2,1,256], index: 15, kind: input, shape index: {}]
  %s16 = inlined_call_operand.vmem [shape: f32[2,256,128], index: 16, kind: input, shape index: {}]
  %s17 = inlined_call_operand.vmem [shape: f32[2,1,128], index: 17, kind: input, shape index: {}]
  %s18 = inlined_call_operand.vmem [shape: f32[2,1,128], index: 18, kind: input, shape index: {}]
  %s19 = inlined_call_operand.vmem [shape: f32[2,1,128], index: 19, kind: input, shape index: {}]
  %s20 = inlined_call_operand.vmem [shape: f32[128,8], index: 20, kind: input, shape index: {}]
  %s21 = inlined_call_operand.vmem [shape: f32[1,8], index: 21, kind: input, shape index: {}]
  %s22 = inlined_call_operand.vmem [shape: f32[16,8], index: 22, kind: output, shape index: {}]
  %s23 = sld [smem:[#allocation0]]
  $region129: #{tpu_custom_call.1} parent=0
    _
  %s25 = ssub.s32 1, %s23
  %s26 = scalar_select 0, %s25, %s23
  loop: start=0, step=1, limit=4
  $region2: #{tpu_custom_call.1} parent=0 // loop_pre_header
    _
  $region3: #{tpu_custom_call.1} parent=0 // loop_header
    %s28 = sphi 0, %s32
    %p29 = scmp.ge.s32.totalorder %s28, 4
    %s36 = sphi 0, %s36
    %s38 = sphi 0, %s36
    %s39 = sphi 0, %s38
    %s53 = sphi 0, %s39
    %s57 = sphi 0, %s57
    %s59 = sphi 0, %s57
    %s60 = sphi 0, %s59
    %s74 = sphi 0, %s60
    %s78 = sphi 0, %s78
    %s80 = sphi 0, %s78
    %s81 = sphi 0, %s80
    %s95 = sphi 0, %s81
    %s101 = sphi 0, %s103
    %s104 = sphi 0, %s101
    %s105 = sphi 0, %s104
    %s121 = sphi 0, %s105
    %s127 = sphi 0, %s129
    %s130 = sphi 0, %s127
    %s131 = sphi 0, %s130
    %s147 = sphi 0, %s131
    %s153 = sphi 0, %s155
    %s156 = sphi 0, %s153
    %s157 = sphi 0, %s156
    %s173 = sphi 0, %s157
    %s179 = sphi 0, %s181
    %s182 = sphi 0, %s179
    %s183 = sphi 0, %s182
    %s199 = sphi 0, %s183
    %s205 = sphi 0, %s207
    %s208 = sphi 0, %s205
    %s209 = sphi 0, %s208
    %s225 = sphi 0, %s209
    %s231 = sphi 0, %s233
    %s234 = sphi 0, %s231
    %s235 = sphi 0, %s234
    %s251 = sphi 0, %s235
    %s257 = sphi 0, %s259
    %s260 = sphi 0, %s257
    %s261 = sphi 0, %s260
    %s277 = sphi 0, %s261
    %s283 = sphi 0, %s285
    %s286 = sphi 0, %s283
    %s287 = sphi 0, %s286
    %s303 = sphi 0, %s287
    %s309 = sphi 0, %s311
    %s312 = sphi 0, %s309
    %s313 = sphi 0, %s312
    %s329 = sphi 0, %s313
    %s335 = sphi 0, %s337
    %s338 = sphi 0, %s335
    %s339 = sphi 0, %s338
    %s355 = sphi 0, %s339
    %s361 = sphi 0, %s363
    %s364 = sphi 0, %s361
    %s365 = sphi 0, %s364
    %s381 = sphi 0, %s365
    %s387 = sphi 0, %s389
    %s390 = sphi 0, %s387
    %s391 = sphi 0, %s390
    %s407 = sphi 0, %s391
    %s413 = sphi 0, %s415
    %s416 = sphi 0, %s413
    %s417 = sphi 0, %s416
    %s433 = sphi 0, %s417
    %s439 = sphi 0, %s441
    %s442 = sphi 0, %s439
    %s443 = sphi 0, %s442
    %s459 = sphi 0, %s443
    %s465 = sphi 0, %s467
    %s468 = sphi 0, %s465
    %s469 = sphi 0, %s468
    %s485 = sphi 0, %s469
    %s491 = sphi 0, %s493
    %s494 = sphi 0, %s491
    %s495 = sphi 0, %s494
    %s511 = sphi 0, %s495
    %s517 = sphi 0, %s519
    %s520 = sphi 0, %s517
    %s521 = sphi 0, %s520
    %s537 = sphi 0, %s521
    %s541 = sphi 0, %s541
    %s543 = sphi 0, %s541
    %s544 = sphi 0, %s543
    %s558 = sphi 0, %s544
    %s562 = sphi 0, %s562
    %s564 = sphi 0, %s562
    %s565 = sphi 0, %s564
    %s579 = sphi 0, %s565
    %s583 = sphi 0, %s583
    %s585 = sphi 0, %s583
    %s586 = sphi 0, %s585
    %s600 = sphi 0, %s586
  $region4: #{tpu_custom_call.1} parent=0 // loop_header_branch
    %31 = sbr.rel (%p29) target = $region8
  $region5: #{tpu_custom_call.1} parent=0 // loop_body
    %s33 = ssub.s32 %s28, 1
    %s34 = ssub.s32 %s28, 2
    %s35 = sadd.s32 %s28, 1
    %s37 = sadd.s32 %s36, 1
    %p40 = scmp.eq.s32.totalorder %s28, 1
    %p41 = scmp.ne.s32.totalorder %s36, %s38
    %p42 = scmp.eq.s32.totalorder %s28, 0
    %p43 = por %p41, %p42
    %p44 = scmp.ne.s32.totalorder %s36, %s38
    %p45 = scmp.eq.s32.totalorder %s33, 1
    %p46 = por %p44, %p45
    %p47 = scmp.ne.s32.totalorder %s38, %s39
    %p48 = scmp.eq.s32.totalorder %s33, 0
    %p49 = por %p47, %p48
    %p50 = scmp.ne.s32.totalorder %s38, %s39
    %p51 = scmp.eq.s32.totalorder %s34, 1
    %p52 = por %p50, %p51
    %p54 = scmp.ne.s32.totalorder %s39, %s53
    %p55 = scmp.eq.s32.totalorder %s34, 0
    %p56 = por %p54, %p55
    %s58 = sadd.s32 %s57, 1
    %p61 = scmp.eq.s32.totalorder %s28, 1
    %p62 = scmp.ne.s32.totalorder %s57, %s59
    %p63 = scmp.eq.s32.totalorder %s28, 0
    %p64 = por %p62, %p63
    %p65 = scmp.ne.s32.totalorder %s57, %s59
    %p66 = scmp.eq.s32.totalorder %s33, 1
    %p67 = por %p65, %p66
    %p68 = scmp.ne.s32.totalorder %s59, %s60
    %p69 = scmp.eq.s32.totalorder %s33, 0
    %p70 = por %p68, %p69
    %p71 = scmp.ne.s32.totalorder %s59, %s60
    %p72 = scmp.eq.s32.totalorder %s34, 1
    %p73 = por %p71, %p72
    %p75 = scmp.ne.s32.totalorder %s60, %s74
    %p76 = scmp.eq.s32.totalorder %s34, 0
    %p77 = por %p75, %p76
    %s79 = sadd.s32 %s78, 1
    %p82 = scmp.eq.s32.totalorder %s28, 1
    %p83 = scmp.ne.s32.totalorder %s78, %s80
    %p84 = scmp.eq.s32.totalorder %s28, 0
    %p85 = por %p83, %p84
    %p86 = scmp.ne.s32.totalorder %s78, %s80
    %p87 = scmp.eq.s32.totalorder %s33, 1
    %p88 = por %p86, %p87
    %p89 = scmp.ne.s32.totalorder %s80, %s81
    %p90 = scmp.eq.s32.totalorder %s33, 0
    %p91 = por %p89, %p90
    %p92 = scmp.ne.s32.totalorder %s80, %s81
    %p93 = scmp.eq.s32.totalorder %s34, 1
    %p94 = por %p92, %p93
    %p96 = scmp.ne.s32.totalorder %s81, %s95
    %p97 = scmp.eq.s32.totalorder %s34, 0
    %p98 = por %p96, %p97
    %s99 = ssub.s32 %s28, %s35
    %p100 = scmp.eq.s32.totalorder %s99, 0
    %s102 = sadd.s32 %s101, 1
    %s103 = scalar_select %p100, %s101, %s102
    %p106 = pneg %p100
    %p107 = scmp.eq.s32.totalorder %s28, 1
    %p108 = por %p106, %p107
    %p109 = scmp.ne.s32.totalorder %s101, %s104
    %p110 = scmp.eq.s32.totalorder %s28, 0
    %p111 = por %p109, %p110
    %p112 = scmp.ne.s32.totalorder %s101, %s104
    %p113 = scmp.eq.s32.totalorder %s33, 1
    %p114 = por %p112, %p113
    %p115 = scmp.ne.s32.totalorder %s104, %s105
    %p116 = scmp.eq.s32.totalorder %s33, 0
    %p117 = por %p115, %p116
    %p118 = scmp.ne.s32.totalorder %s104, %s105
    %p119 = scmp.eq.s32.totalorder %s34, 1
    %p120 = por %p118, %p119
    %p122 = scmp.ne.s32.totalorder %s105, %s121
    %p123 = scmp.eq.s32.totalorder %s34, 0
    %p124 = por %p122, %p123
    %s125 = ssub.s32 %s28, %s35
    %p126 = scmp.eq.s32.totalorder %s125, 0
    %s128 = sadd.s32 %s127, 1
    %s129 = scalar_select %p126, %s127, %s128
    %p132 = pneg %p126
    %p133 = scmp.eq.s32.totalorder %s28, 1
    %p134 = por %p132, %p133
    %p135 = scmp.ne.s32.totalorder %s127, %s130
    %p136 = scmp.eq.s32.totalorder %s28, 0
    %p137 = por %p135, %p136
    %p138 = scmp.ne.s32.totalorder %s127, %s130
    %p139 = scmp.eq.s32.totalorder %s33, 1
    %p140 = por %p138, %p139
    %p141 = scmp.ne.s32.totalorder %s130, %s131
    %p142 = scmp.eq.s32.totalorder %s33, 0
    %p143 = por %p141, %p142
    %p144 = scmp.ne.s32.totalorder %s130, %s131
    %p145 = scmp.eq.s32.totalorder %s34, 1
    %p146 = por %p144, %p145
    %p148 = scmp.ne.s32.totalorder %s131, %s147
    %p149 = scmp.eq.s32.totalorder %s34, 0
    %p150 = por %p148, %p149
    %s151 = ssub.s32 %s28, %s35
    %p152 = scmp.eq.s32.totalorder %s151, 0
    %s154 = sadd.s32 %s153, 1
    %s155 = scalar_select %p152, %s153, %s154
    %p158 = pneg %p152
    %p159 = scmp.eq.s32.totalorder %s28, 1
    %p160 = por %p158, %p159
    %p161 = scmp.ne.s32.totalorder %s153, %s156
    %p162 = scmp.eq.s32.totalorder %s28, 0
    %p163 = por %p161, %p162
    %p164 = scmp.ne.s32.totalorder %s153, %s156
    %p165 = scmp.eq.s32.totalorder %s33, 1
    %p166 = por %p164, %p165
    %p167 = scmp.ne.s32.totalorder %s156, %s157
    %p168 = scmp.eq.s32.totalorder %s33, 0
    %p169 = por %p167, %p168
    %p170 = scmp.ne.s32.totalorder %s156, %s157
    %p171 = scmp.eq.s32.totalorder %s34, 1
    %p172 = por %p170, %p171
    %p174 = scmp.ne.s32.totalorder %s157, %s173
    %p175 = scmp.eq.s32.totalorder %s34, 0
    %p176 = por %p174, %p175
    %s177 = ssub.s32 %s28, %s35
    %p178 = scmp.eq.s32.totalorder %s177, 0
    %s180 = sadd.s32 %s179, 1
    %s181 = scalar_select %p178, %s179, %s180
    %p184 = pneg %p178
    %p185 = scmp.eq.s32.totalorder %s28, 1
    %p186 = por %p184, %p185
    %p187 = scmp.ne.s32.totalorder %s179, %s182
    %p188 = scmp.eq.s32.totalorder %s28, 0
    %p189 = por %p187, %p188
    %p190 = scmp.ne.s32.totalorder %s179, %s182
    %p191 = scmp.eq.s32.totalorder %s33, 1
    %p192 = por %p190, %p191
    %p193 = scmp.ne.s32.totalorder %s182, %s183
    %p194 = scmp.eq.s32.totalorder %s33, 0
    %p195 = por %p193, %p194
    %p196 = scmp.ne.s32.totalorder %s182, %s183
    %p197 = scmp.eq.s32.totalorder %s34, 1
    %p198 = por %p196, %p197
    %p200 = scmp.ne.s32.totalorder %s183, %s199
    %p201 = scmp.eq.s32.totalorder %s34, 0
    %p202 = por %p200, %p201
    %s203 = ssub.s32 %s28, %s35
    %p204 = scmp.eq.s32.totalorder %s203, 0
    %s206 = sadd.s32 %s205, 1
    %s207 = scalar_select %p204, %s205, %s206
    %p210 = pneg %p204
    %p211 = scmp.eq.s32.totalorder %s28, 1
    %p212 = por %p210, %p211
    %p213 = scmp.ne.s32.totalorder %s205, %s208
    %p214 = scmp.eq.s32.totalorder %s28, 0
    %p215 = por %p213, %p214
    %p216 = scmp.ne.s32.totalorder %s205, %s208
    %p217 = scmp.eq.s32.totalorder %s33, 1
    %p218 = por %p216, %p217
    %p219 = scmp.ne.s32.totalorder %s208, %s209
    %p220 = scmp.eq.s32.totalorder %s33, 0
    %p221 = por %p219, %p220
    %p222 = scmp.ne.s32.totalorder %s208, %s209
    %p223 = scmp.eq.s32.totalorder %s34, 1
    %p224 = por %p222, %p223
    %p226 = scmp.ne.s32.totalorder %s209, %s225
    %p227 = scmp.eq.s32.totalorder %s34, 0
    %p228 = por %p226, %p227
    %s229 = ssub.s32 %s28, %s35
    %p230 = scmp.eq.s32.totalorder %s229, 0
    %s232 = sadd.s32 %s231, 1
    %s233 = scalar_select %p230, %s231, %s232
    %p236 = pneg %p230
    %p237 = scmp.eq.s32.totalorder %s28, 1
    %p238 = por %p236, %p237
    %p239 = scmp.ne.s32.totalorder %s231, %s234
    %p240 = scmp.eq.s32.totalorder %s28, 0
    %p241 = por %p239, %p240
    %p242 = scmp.ne.s32.totalorder %s231, %s234
    %p243 = scmp.eq.s32.totalorder %s33, 1
    %p244 = por %p242, %p243
    %p245 = scmp.ne.s32.totalorder %s234, %s235
    %p246 = scmp.eq.s32.totalorder %s33, 0
    %p247 = por %p245, %p246
    %p248 = scmp.ne.s32.totalorder %s234, %s235
    %p249 = scmp.eq.s32.totalorder %s34, 1
    %p250 = por %p248, %p249
    %p252 = scmp.ne.s32.totalorder %s235, %s251
    %p253 = scmp.eq.s32.totalorder %s34, 0
    %p254 = por %p252, %p253
    %s255 = ssub.s32 %s28, %s35
    %p256 = scmp.eq.s32.totalorder %s255, 0
    %s258 = sadd.s32 %s257, 1
    %s259 = scalar_select %p256, %s257, %s258
    %p262 = pneg %p256
    %p263 = scmp.eq.s32.totalorder %s28, 1
    %p264 = por %p262, %p263
    %p265 = scmp.ne.s32.totalorder %s257, %s260
    %p266 = scmp.eq.s32.totalorder %s28, 0
    %p267 = por %p265, %p266
    %p268 = scmp.ne.s32.totalorder %s257, %s260
    %p269 = scmp.eq.s32.totalorder %s33, 1
    %p270 = por %p268, %p269
    %p271 = scmp.ne.s32.totalorder %s260, %s261
    %p272 = scmp.eq.s32.totalorder %s33, 0
    %p273 = por %p271, %p272
    %p274 = scmp.ne.s32.totalorder %s260, %s261
    %p275 = scmp.eq.s32.totalorder %s34, 1
    %p276 = por %p274, %p275
    %p278 = scmp.ne.s32.totalorder %s261, %s277
    %p279 = scmp.eq.s32.totalorder %s34, 0
    %p280 = por %p278, %p279
    %s281 = ssub.s32 %s28, %s35
    %p282 = scmp.eq.s32.totalorder %s281, 0
    %s284 = sadd.s32 %s283, 1
    %s285 = scalar_select %p282, %s283, %s284
    %p288 = pneg %p282
    %p289 = scmp.eq.s32.totalorder %s28, 1
    %p290 = por %p288, %p289
    %p291 = scmp.ne.s32.totalorder %s283, %s286
    %p292 = scmp.eq.s32.totalorder %s28, 0
    %p293 = por %p291, %p292
    %p294 = scmp.ne.s32.totalorder %s283, %s286
    %p295 = scmp.eq.s32.totalorder %s33, 1
    %p296 = por %p294, %p295
    %p297 = scmp.ne.s32.totalorder %s286, %s287
    %p298 = scmp.eq.s32.totalorder %s33, 0
    %p299 = por %p297, %p298
    %p300 = scmp.ne.s32.totalorder %s286, %s287
    %p301 = scmp.eq.s32.totalorder %s34, 1
    %p302 = por %p300, %p301
    %p304 = scmp.ne.s32.totalorder %s287, %s303
    %p305 = scmp.eq.s32.totalorder %s34, 0
    %p306 = por %p304, %p305
    %s307 = ssub.s32 %s28, %s35
    %p308 = scmp.eq.s32.totalorder %s307, 0
    %s310 = sadd.s32 %s309, 1
    %s311 = scalar_select %p308, %s309, %s310
    %p314 = pneg %p308
    %p315 = scmp.eq.s32.totalorder %s28, 1
    %p316 = por %p314, %p315
    %p317 = scmp.ne.s32.totalorder %s309, %s312
    %p318 = scmp.eq.s32.totalorder %s28, 0
    %p319 = por %p317, %p318
    %p320 = scmp.ne.s32.totalorder %s309, %s312
    %p321 = scmp.eq.s32.totalorder %s33, 1
    %p322 = por %p320, %p321
    %p323 = scmp.ne.s32.totalorder %s312, %s313
    %p324 = scmp.eq.s32.totalorder %s33, 0
    %p325 = por %p323, %p324
    %p326 = scmp.ne.s32.totalorder %s312, %s313
    %p327 = scmp.eq.s32.totalorder %s34, 1
    %p328 = por %p326, %p327
    %p330 = scmp.ne.s32.totalorder %s313, %s329
    %p331 = scmp.eq.s32.totalorder %s34, 0
    %p332 = por %p330, %p331
    %s333 = ssub.s32 %s28, %s35
    %p334 = scmp.eq.s32.totalorder %s333, 0
    %s336 = sadd.s32 %s335, 1
    %s337 = scalar_select %p334, %s335, %s336
    %p340 = pneg %p334
    %p341 = scmp.eq.s32.totalorder %s28, 1
    %p342 = por %p340, %p341
    %p343 = scmp.ne.s32.totalorder %s335, %s338
    %p344 = scmp.eq.s32.totalorder %s28, 0
    %p345 = por %p343, %p344
    %p346 = scmp.ne.s32.totalorder %s335, %s338
    %p347 = scmp.eq.s32.totalorder %s33, 1
    %p348 = por %p346, %p347
    %p349 = scmp.ne.s32.totalorder %s338, %s339
    %p350 = scmp.eq.s32.totalorder %s33, 0
    %p351 = por %p349, %p350
    %p352 = scmp.ne.s32.totalorder %s338, %s339
    %p353 = scmp.eq.s32.totalorder %s34, 1
    %p354 = por %p352, %p353
    %p356 = scmp.ne.s32.totalorder %s339, %s355
    %p357 = scmp.eq.s32.totalorder %s34, 0
    %p358 = por %p356, %p357
    %s359 = ssub.s32 %s28, %s35
    %p360 = scmp.eq.s32.totalorder %s359, 0
    %s362 = sadd.s32 %s361, 1
    %s363 = scalar_select %p360, %s361, %s362
    %p366 = pneg %p360
    %p367 = scmp.eq.s32.totalorder %s28, 1
    %p368 = por %p366, %p367
    %p369 = scmp.ne.s32.totalorder %s361, %s364
    %p370 = scmp.eq.s32.totalorder %s28, 0
    %p371 = por %p369, %p370
    %p372 = scmp.ne.s32.totalorder %s361, %s364
    %p373 = scmp.eq.s32.totalorder %s33, 1
    %p374 = por %p372, %p373
    %p375 = scmp.ne.s32.totalorder %s364, %s365
    %p376 = scmp.eq.s32.totalorder %s33, 0
    %p377 = por %p375, %p376
    %p378 = scmp.ne.s32.totalorder %s364, %s365
    %p379 = scmp.eq.s32.totalorder %s34, 1
    %p380 = por %p378, %p379
    %p382 = scmp.ne.s32.totalorder %s365, %s381
    %p383 = scmp.eq.s32.totalorder %s34, 0
    %p384 = por %p382, %p383
    %s385 = ssub.s32 %s28, %s35
    %p386 = scmp.eq.s32.totalorder %s385, 0
    %s388 = sadd.s32 %s387, 1
    %s389 = scalar_select %p386, %s387, %s388
    %p392 = pneg %p386
    %p393 = scmp.eq.s32.totalorder %s28, 1
    %p394 = por %p392, %p393
    %p395 = scmp.ne.s32.totalorder %s387, %s390
    %p396 = scmp.eq.s32.totalorder %s28, 0
    %p397 = por %p395, %p396
    %p398 = scmp.ne.s32.totalorder %s387, %s390
    %p399 = scmp.eq.s32.totalorder %s33, 1
    %p400 = por %p398, %p399
    %p401 = scmp.ne.s32.totalorder %s390, %s391
    %p402 = scmp.eq.s32.totalorder %s33, 0
    %p403 = por %p401, %p402
    %p404 = scmp.ne.s32.totalorder %s390, %s391
    %p405 = scmp.eq.s32.totalorder %s34, 1
    %p406 = por %p404, %p405
    %p408 = scmp.ne.s32.totalorder %s391, %s407
    %p409 = scmp.eq.s32.totalorder %s34, 0
    %p410 = por %p408, %p409
    %s411 = ssub.s32 %s28, %s35
    %p412 = scmp.eq.s32.totalorder %s411, 0
    %s414 = sadd.s32 %s413, 1
    %s415 = scalar_select %p412, %s413, %s414
    %p418 = pneg %p412
    %p419 = scmp.eq.s32.totalorder %s28, 1
    %p420 = por %p418, %p419
    %p421 = scmp.ne.s32.totalorder %s413, %s416
    %p422 = scmp.eq.s32.totalorder %s28, 0
    %p423 = por %p421, %p422
    %p424 = scmp.ne.s32.totalorder %s413, %s416
    %p425 = scmp.eq.s32.totalorder %s33, 1
    %p426 = por %p424, %p425
    %p427 = scmp.ne.s32.totalorder %s416, %s417
    %p428 = scmp.eq.s32.totalorder %s33, 0
    %p429 = por %p427, %p428
    %p430 = scmp.ne.s32.totalorder %s416, %s417
    %p431 = scmp.eq.s32.totalorder %s34, 1
    %p432 = por %p430, %p431
    %p434 = scmp.ne.s32.totalorder %s417, %s433
    %p435 = scmp.eq.s32.totalorder %s34, 0
    %p436 = por %p434, %p435
    %s437 = ssub.s32 %s28, %s35
    %p438 = scmp.eq.s32.totalorder %s437, 0
    %s440 = sadd.s32 %s439, 1
    %s441 = scalar_select %p438, %s439, %s440
    %p444 = pneg %p438
    %p445 = scmp.eq.s32.totalorder %s28, 1
    %p446 = por %p444, %p445
    %p447 = scmp.ne.s32.totalorder %s439, %s442
    %p448 = scmp.eq.s32.totalorder %s28, 0
    %p449 = por %p447, %p448
    %p450 = scmp.ne.s32.totalorder %s439, %s442
    %p451 = scmp.eq.s32.totalorder %s33, 1
    %p452 = por %p450, %p451
    %p453 = scmp.ne.s32.totalorder %s442, %s443
    %p454 = scmp.eq.s32.totalorder %s33, 0
    %p455 = por %p453, %p454
    %p456 = scmp.ne.s32.totalorder %s442, %s443
    %p457 = scmp.eq.s32.totalorder %s34, 1
    %p458 = por %p456, %p457
    %p460 = scmp.ne.s32.totalorder %s443, %s459
    %p461 = scmp.eq.s32.totalorder %s34, 0
    %p462 = por %p460, %p461
    %s463 = ssub.s32 %s28, %s35
    %p464 = scmp.eq.s32.totalorder %s463, 0
    %s466 = sadd.s32 %s465, 1
    %s467 = scalar_select %p464, %s465, %s466
    %p470 = pneg %p464
    %p471 = scmp.eq.s32.totalorder %s28, 1
    %p472 = por %p470, %p471
    %p473 = scmp.ne.s32.totalorder %s465, %s468
    %p474 = scmp.eq.s32.totalorder %s28, 0
    %p475 = por %p473, %p474
    %p476 = scmp.ne.s32.totalorder %s465, %s468
    %p477 = scmp.eq.s32.totalorder %s33, 1
    %p478 = por %p476, %p477
    %p479 = scmp.ne.s32.totalorder %s468, %s469
    %p480 = scmp.eq.s32.totalorder %s33, 0
    %p481 = por %p479, %p480
    %p482 = scmp.ne.s32.totalorder %s468, %s469
    %p483 = scmp.eq.s32.totalorder %s34, 1
    %p484 = por %p482, %p483
    %p486 = scmp.ne.s32.totalorder %s469, %s485
    %p487 = scmp.eq.s32.totalorder %s34, 0
    %p488 = por %p486, %p487
    %s489 = ssub.s32 %s28, %s35
    %p490 = scmp.eq.s32.totalorder %s489, 0
    %s492 = sadd.s32 %s491, 1
    %s493 = scalar_select %p490, %s491, %s492
    %p496 = pneg %p490
    %p497 = scmp.eq.s32.totalorder %s28, 1
    %p498 = por %p496, %p497
    %p499 = scmp.ne.s32.totalorder %s491, %s494
    %p500 = scmp.eq.s32.totalorder %s28, 0
    %p501 = por %p499, %p500
    %p502 = scmp.ne.s32.totalorder %s491, %s494
    %p503 = scmp.eq.s32.totalorder %s33, 1
    %p504 = por %p502, %p503
    %p505 = scmp.ne.s32.totalorder %s494, %s495
    %p506 = scmp.eq.s32.totalorder %s33, 0
    %p507 = por %p505, %p506
    %p508 = scmp.ne.s32.totalorder %s494, %s495
    %p509 = scmp.eq.s32.totalorder %s34, 1
    %p510 = por %p508, %p509
    %p512 = scmp.ne.s32.totalorder %s495, %s511
    %p513 = scmp.eq.s32.totalorder %s34, 0
    %p514 = por %p512, %p513
    %s515 = ssub.s32 %s28, %s35
    %p516 = scmp.eq.s32.totalorder %s515, 0
    %s518 = sadd.s32 %s517, 1
    %s519 = scalar_select %p516, %s517, %s518
    %p522 = pneg %p516
    %p523 = scmp.eq.s32.totalorder %s28, 1
    %p524 = por %p522, %p523
    %p525 = scmp.ne.s32.totalorder %s517, %s520
    %p526 = scmp.eq.s32.totalorder %s28, 0
    %p527 = por %p525, %p526
    %p528 = scmp.ne.s32.totalorder %s517, %s520
    %p529 = scmp.eq.s32.totalorder %s33, 1
    %p530 = por %p528, %p529
    %p531 = scmp.ne.s32.totalorder %s520, %s521
    %p532 = scmp.eq.s32.totalorder %s33, 0
    %p533 = por %p531, %p532
    %p534 = scmp.ne.s32.totalorder %s520, %s521
    %p535 = scmp.eq.s32.totalorder %s34, 1
    %p536 = por %p534, %p535
    %p538 = scmp.ne.s32.totalorder %s521, %s537
    %p539 = scmp.eq.s32.totalorder %s34, 0
    %p540 = por %p538, %p539
    %s542 = sadd.s32 %s541, 1
    %p545 = scmp.eq.s32.totalorder %s28, 1
    %p546 = scmp.ne.s32.totalorder %s541, %s543
    %p547 = scmp.eq.s32.totalorder %s28, 0
    %p548 = por %p546, %p547
    %p549 = scmp.ne.s32.totalorder %s541, %s543
    %p550 = scmp.eq.s32.totalorder %s33, 1
    %p551 = por %p549, %p550
    %p552 = scmp.ne.s32.totalorder %s543, %s544
    %p553 = scmp.eq.s32.totalorder %s33, 0
    %p554 = por %p552, %p553
    %p555 = scmp.ne.s32.totalorder %s543, %s544
    %p556 = scmp.eq.s32.totalorder %s34, 1
    %p557 = por %p555, %p556
    %p559 = scmp.ne.s32.totalorder %s544, %s558
    %p560 = scmp.eq.s32.totalorder %s34, 0
    %p561 = por %p559, %p560
    %s563 = sadd.s32 %s562, 1
    %p566 = scmp.eq.s32.totalorder %s28, 1
    %p567 = scmp.ne.s32.totalorder %s562, %s564
    %p568 = scmp.eq.s32.totalorder %s28, 0
    %p569 = por %p567, %p568
    %p570 = scmp.ne.s32.totalorder %s562, %s564
    %p571 = scmp.eq.s32.totalorder %s33, 1
    %p572 = por %p570, %p571
    %p573 = scmp.ne.s32.totalorder %s564, %s565
    %p574 = scmp.eq.s32.totalorder %s33, 0
    %p575 = por %p573, %p574
    %p576 = scmp.ne.s32.totalorder %s564, %s565
    %p577 = scmp.eq.s32.totalorder %s34, 1
    %p578 = por %p576, %p577
    %p580 = scmp.ne.s32.totalorder %s565, %s579
    %p581 = scmp.eq.s32.totalorder %s34, 0
    %p582 = por %p580, %p581
    %s584 = sadd.s32 %s583, 1
    %p587 = scmp.eq.s32.totalorder %s28, 1
    %p588 = scmp.ne.s32.totalorder %s583, %s585
    %p589 = scmp.eq.s32.totalorder %s28, 0
    %p590 = por %p588, %p589
    %p591 = scmp.ne.s32.totalorder %s583, %s585
    %p592 = scmp.eq.s32.totalorder %s33, 1
    %p593 = por %p591, %p592
    %p594 = scmp.ne.s32.totalorder %s585, %s586
    %p595 = scmp.eq.s32.totalorder %s33, 0
    %p596 = por %p594, %p595
    %p597 = scmp.ne.s32.totalorder %s585, %s586
    %p598 = scmp.eq.s32.totalorder %s34, 1
    %p599 = por %p597, %p598
    %p601 = scmp.ne.s32.totalorder %s586, %s600
    %p602 = scmp.eq.s32.totalorder %s34, 0
    %p603 = por %p601, %p602
    %p604 = scmp.le.s32.totalorder 1, %s28
    %p605 = scmp.lt.s32.totalorder %s28, 3
    %p606 = pnand %p604, %p605
    %p607 = pneg %p606
    // Predicated region
    $region9: #{tpu_custom_call.1} parent=5 // pred_check
      _
    $region10: #{tpu_custom_call.1} parent=5 // pred_check_branch
      %609 = sbr.rel (%p606) target = $region12
    $region11: #{tpu_custom_call.1} parent=5 // pred_region
      %s610 = ssub.s32 %s28, 1
      // Predicated region
      $region13: #{tpu_custom_call.1} parent=11 // pred_check
        %p611 = pneg %p49
      $region14: #{tpu_custom_call.1} parent=11 // pred_check_branch
        %613 = sbr.rel (%p611) target = $region16
      $region15: #{tpu_custom_call.1} parent=11 // pred_region
        _
      $region16: #{tpu_custom_call.1} parent=11 // pred_fallthru
        _
      // Predicated region
      $region17: #{tpu_custom_call.1} parent=11 // pred_check
        %p614 = pneg %p70
      $region18: #{tpu_custom_call.1} parent=11 // pred_check_branch
        %616 = sbr.rel (%p614) target = $region20
      $region19: #{tpu_custom_call.1} parent=11 // pred_region
        _
      $region20: #{tpu_custom_call.1} parent=11 // pred_fallthru
        _
      // Predicated region
      $region21: #{tpu_custom_call.1} parent=11 // pred_check
        %p617 = pneg %p91
      $region22: #{tpu_custom_call.1} parent=11 // pred_check_branch
        %619 = sbr.rel (%p617) target = $region24
      $region23: #{tpu_custom_call.1} parent=11 // pred_region
        _
      $region24: #{tpu_custom_call.1} parent=11 // pred_fallthru
        _
      // Predicated region
      $region25: #{tpu_custom_call.1} parent=11 // pred_check
        %p620 = pneg %p554
      $region26: #{tpu_custom_call.1} parent=11 // pred_check_branch
        %622 = sbr.rel (%p620) target = $region28
      $region27: #{tpu_custom_call.1} parent=11 // pred_region
        _
      $region28: #{tpu_custom_call.1} parent=11 // pred_fallthru
        _
      // Predicated region
      $region29: #{tpu_custom_call.1} parent=11 // pred_check
        %p623 = pneg %p575
      $region30: #{tpu_custom_call.1} parent=11 // pred_check_branch
        %625 = sbr.rel (%p623) target = $region32
      $region31: #{tpu_custom_call.1} parent=11 // pred_region
        _
      $region32: #{tpu_custom_call.1} parent=11 // pred_fallthru
        _
    $region12: #{tpu_custom_call.1} parent=5 // pred_fallthru
      _
    %p626 = scmp.lt.s32.totalorder %s28, 2
    // Predicated region
    $region33: #{tpu_custom_call.1} parent=5 // pred_check
      %p627 = pneg %p626
    $region34: #{tpu_custom_call.1} parent=5 // pred_check_branch
      %629 = sbr.rel (%p627) target = $region36
    $region35: #{tpu_custom_call.1} parent=5 // pred_region
      // Predicated region
      $region37: #{tpu_custom_call.1} parent=35 // pred_check
        %p630 = pneg %p111
      $region38: #{tpu_custom_call.1} parent=35 // pred_check_branch
        %632 = sbr.rel (%p630) target = $region40
      $region39: #{tpu_custom_call.1} parent=35 // pred_region
        %p633 = scmp.lt.s32.totalorder %s28, 1
        %s634 = scalar_select %p633, %s28, 1
        %s635 = smul.addr %s634, 2
        %s636 = scalar_lea.vmem %s3, %s635
      $region40: #{tpu_custom_call.1} parent=35 // pred_fallthru
        _
      // Predicated region
      $region41: #{tpu_custom_call.1} parent=35 // pred_check
        %p637 = pneg %p137
      $region42: #{tpu_custom_call.1} parent=35 // pred_check_branch
        %639 = sbr.rel (%p637) target = $region44
      $region43: #{tpu_custom_call.1} parent=35 // pred_region
        %p640 = scmp.lt.s32.totalorder %s28, 1
        %s641 = scalar_select %p640, %s28, 1
        %s642 = smul.addr %s641, 64
        %s643 = smul.addr %s642, 8
        %s644 = scalar_lea.vmem %s4, %s643
      $region44: #{tpu_custom_call.1} parent=35 // pred_fallthru
        _
      // Predicated region
      $region45: #{tpu_custom_call.1} parent=35 // pred_check
        %p645 = pneg %p163
      $region46: #{tpu_custom_call.1} parent=35 // pred_check_branch
        %647 = sbr.rel (%p645) target = $region48
      $region47: #{tpu_custom_call.1} parent=35 // pred_region
        %p648 = scmp.lt.s32.totalorder %s28, 1
        %s649 = scalar_select %p648, %s28, 1
        %s650 = smul.addr %s649, 4
        %s651 = scalar_lea.vmem %s5, %s650
      $region48: #{tpu_custom_call.1} parent=35 // pred_fallthru
        _
      // Predicated region
      $region49: #{tpu_custom_call.1} parent=35 // pred_check
        %p652 = pneg %p189
      $region50: #{tpu_custom_call.1} parent=35 // pred_check_branch
        %654 = sbr.rel (%p652) target = $region52
      $region51: #{tpu_custom_call.1} parent=35 // pred_region
        %p655 = scmp.lt.s32.totalorder %s28, 1
        %s656 = scalar_select %p655, %s28, 1
        %s657 = smul.addr %s656, 64
        %s658 = smul.addr %s657, 8
        %s659 = scalar_lea.vmem %s6, %s658
      $region52: #{tpu_custom_call.1} parent=35 // pred_fallthru
        _
      // Predicated region
      $region53: #{tpu_custom_call.1} parent=35 // pred_check
        %p660 = pneg %p215
      $region54: #{tpu_custom_call.1} parent=35 // pred_check_branch
        %662 = sbr.rel (%p660) target = $region56
      $region55: #{tpu_custom_call.1} parent=35 // pred_region
        %p663 = scmp.lt.s32.totalorder %s28, 1
        %s664 = scalar_select %p663, %s28, 1
        %s665 = smul.addr %s664, 4
        %s666 = scalar_lea.vmem %s7, %s665
      $region56: #{tpu_custom_call.1} parent=35 // pred_fallthru
        _
      // Predicated region
      $region57: #{tpu_custom_call.1} parent=35 // pred_check
        %p667 = pneg %p241
      $region58: #{tpu_custom_call.1} parent=35 // pred_check_branch
        %669 = sbr.rel (%p667) target = $region60
      $region59: #{tpu_custom_call.1} parent=35 // pred_region
        %p670 = scmp.lt.s32.totalorder %s28, 1
        %s671 = scalar_select %p670, %s28, 1
        %s672 = smul.addr %s671, 64
        %s673 = smul.addr %s672, 8
        %s674 = scalar_lea.vmem %s8, %s673
      $region60: #{tpu_custom_call.1} parent=35 // pred_fallthru
        _
      // Predicated region
      $region61: #{tpu_custom_call.1} parent=35 // pred_check
        %p675 = pneg %p267
      $region62: #{tpu_custom_call.1} parent=35 // pred_check_branch
        %677 = sbr.rel (%p675) target = $region64
      $region63: #{tpu_custom_call.1} parent=35 // pred_region
        %p678 = scmp.lt.s32.totalorder %s28, 1
        %s679 = scalar_select %p678, %s28, 1
        %s680 = smul.addr %s679, 4
        %s681 = scalar_lea.vmem %s9, %s680
      $region64: #{tpu_custom_call.1} parent=35 // pred_fallthru
        _
      // Predicated region
      $region65: #{tpu_custom_call.1} parent=35 // pred_check
        %p682 = pneg %p293
      $region66: #{tpu_custom_call.1} parent=35 // pred_check_branch
        %684 = sbr.rel (%p682) target = $region68
      $region67: #{tpu_custom_call.1} parent=35 // pred_region
        %p685 = scmp.lt.s32.totalorder %s28, 1
        %s686 = scalar_select %p685, %s28, 1
        %s687 = smul.addr %s686, 16
        %s688 = smul.addr %s687, 8
        %s689 = scalar_lea.vmem %s10, %s688
      $region68: #{tpu_custom_call.1} parent=35 // pred_fallthru
        _
      // Predicated region
      $region69: #{tpu_custom_call.1} parent=35 // pred_check
        %p690 = pneg %p319
      $region70: #{tpu_custom_call.1} parent=35 // pred_check_branch
        %692 = sbr.rel (%p690) target = $region72
      $region71: #{tpu_custom_call.1} parent=35 // pred_region
        %p693 = scmp.lt.s32.totalorder %s28, 1
        %s694 = scalar_select %p693, %s28, 1
        %s695 = scalar_lea.vmem %s11, %s694
      $region72: #{tpu_custom_call.1} parent=35 // pred_fallthru
        _
      // Predicated region
      $region73: #{tpu_custom_call.1} parent=35 // pred_check
        %p696 = pneg %p345
      $region74: #{tpu_custom_call.1} parent=35 // pred_check_branch
        %698 = sbr.rel (%p696) target = $region76
      $region75: #{tpu_custom_call.1} parent=35 // pred_region
        %p699 = scmp.lt.s32.totalorder %s28, 1
        %s700 = scalar_select %p699, %s28, 1
        %s701 = scalar_lea.vmem %s12, %s700
      $region76: #{tpu_custom_call.1} parent=35 // pred_fallthru
        _
      // Predicated region
      $region77: #{tpu_custom_call.1} parent=35 // pred_check
        %p702 = pneg %p371
      $region78: #{tpu_custom_call.1} parent=35 // pred_check_branch
        %704 = sbr.rel (%p702) target = $region80
      $region79: #{tpu_custom_call.1} parent=35 // pred_region
        %p705 = scmp.lt.s32.totalorder %s28, 1
        %s706 = scalar_select %p705, %s28, 1
        %s707 = scalar_lea.vmem %s13, %s706
      $region80: #{tpu_custom_call.1} parent=35 // pred_fallthru
        _
      // Predicated region
      $region81: #{tpu_custom_call.1} parent=35 // pred_check
        %p708 = pneg %p397
      $region82: #{tpu_custom_call.1} parent=35 // pred_check_branch
        %710 = sbr.rel (%p708) target = $region84
      $region83: #{tpu_custom_call.1} parent=35 // pred_region
        %p711 = scmp.lt.s32.totalorder %s28, 1
        %s712 = scalar_select %p711, %s28, 1
        %s713 = smul.addr %s712, 32
        %s714 = smul.addr %s713, 8
        %s715 = scalar_lea.vmem %s14, %s714
      $region84: #{tpu_custom_call.1} parent=35 // pred_fallthru
        _
      // Predicated region
      $region85: #{tpu_custom_call.1} parent=35 // pred_check
        %p716 = pneg %p423
      $region86: #{tpu_custom_call.1} parent=35 // pred_check_branch
        %718 = sbr.rel (%p716) target = $region88
      $region87: #{tpu_custom_call.1} parent=35 // pred_region
        %p719 = scmp.lt.s32.totalorder %s28, 1
        %s720 = scalar_select %p719, %s28, 1
        %s721 = smul.addr %s720, 2
        %s722 = scalar_lea.vmem %s15, %s721
      $region88: #{tpu_custom_call.1} parent=35 // pred_fallthru
        _
      // Predicated region
      $region89: #{tpu_custom_call.1} parent=35 // pred_check
        %p723 = pneg %p449
      $region90: #{tpu_custom_call.1} parent=35 // pred_check_branch
        %725 = sbr.rel (%p723) target = $region92
      $region91: #{tpu_custom_call.1} parent=35 // pred_region
        %p726 = scmp.lt.s32.totalorder %s28, 1
        %s727 = scalar_select %p726, %s28, 1
        %s728 = smul.addr %s727, 32
        %s729 = smul.addr %s728, 8
        %s730 = scalar_lea.vmem %s16, %s729
      $region92: #{tpu_custom_call.1} parent=35 // pred_fallthru
        _
      // Predicated region
      $region93: #{tpu_custom_call.1} parent=35 // pred_check
        %p731 = pneg %p475
      $region94: #{tpu_custom_call.1} parent=35 // pred_check_branch
        %733 = sbr.rel (%p731) target = $region96
      $region95: #{tpu_custom_call.1} parent=35 // pred_region
        %p734 = scmp.lt.s32.totalorder %s28, 1
        %s735 = scalar_select %p734, %s28, 1
        %s736 = scalar_lea.vmem %s17, %s735
      $region96: #{tpu_custom_call.1} parent=35 // pred_fallthru
        _
      // Predicated region
      $region97: #{tpu_custom_call.1} parent=35 // pred_check
        %p737 = pneg %p501
      $region98: #{tpu_custom_call.1} parent=35 // pred_check_branch
        %739 = sbr.rel (%p737) target = $region100
      $region99: #{tpu_custom_call.1} parent=35 // pred_region
        %p740 = scmp.lt.s32.totalorder %s28, 1
        %s741 = scalar_select %p740, %s28, 1
        %s742 = scalar_lea.vmem %s18, %s741
      $region100: #{tpu_custom_call.1} parent=35 // pred_fallthru
        _
      // Predicated region
      $region101: #{tpu_custom_call.1} parent=35 // pred_check
        %p743 = pneg %p527
      $region102: #{tpu_custom_call.1} parent=35 // pred_check_branch
        %745 = sbr.rel (%p743) target = $region104
      $region103: #{tpu_custom_call.1} parent=35 // pred_region
        %p746 = scmp.lt.s32.totalorder %s28, 1
        %s747 = scalar_select %p746, %s28, 1
        %s748 = scalar_lea.vmem %s19, %s747
      $region104: #{tpu_custom_call.1} parent=35 // pred_fallthru
        _
    $region36: #{tpu_custom_call.1} parent=5 // pred_fallthru
      _
    %p749 = scmp.le.s32.totalorder 1, %s28
    %p750 = scmp.lt.s32.totalorder %s28, 3
    %p751 = pnand %p749, %p750
    %p752 = pneg %p751
    // Predicated region
    $region105: #{tpu_custom_call.1} parent=5 // pred_check
      _
    $region106: #{tpu_custom_call.1} parent=5 // pred_check_branch
      %754 = sbr.rel (%p751) target = $region108
    $region107: #{tpu_custom_call.1} parent=5 // pred_region
      %s755 = ssub.s32 %s28, 1
      %p756 = pneg %p49
      %p757 = pneg %p46
      %p758 = pneg %p70
      %p759 = pneg %p67
      %p760 = pneg %p91
      %p761 = pneg %p88
      %p762 = scmp.lt.s32.totalorder %s33, 1
      %s763 = scalar_select %p762, %s33, 1
      %s764 = smul.addr %s763, 2
      %s765 = scalar_lea.vmem %s3, %s764
      %p766 = pneg %p117
      %p767 = pneg %p114
      %p768 = scmp.lt.s32.totalorder %s33, 1
      %s769 = scalar_select %p768, %s33, 1
      %s770 = smul.addr %s769, 64
      %s771 = smul.addr %s770, 8
      %s772 = scalar_lea.vmem %s4, %s771
      %p773 = pneg %p143
      %p774 = pneg %p140
      %p775 = scmp.lt.s32.totalorder %s33, 1
      %s776 = scalar_select %p775, %s33, 1
      %s777 = smul.addr %s776, 4
      %s778 = scalar_lea.vmem %s5, %s777
      %p779 = pneg %p169
      %p780 = pneg %p166
      %p781 = scmp.lt.s32.totalorder %s33, 1
      %s782 = scalar_select %p781, %s33, 1
      %s783 = smul.addr %s782, 64
      %s784 = smul.addr %s783, 8
      %s785 = scalar_lea.vmem %s6, %s784
      %p786 = pneg %p195
      %p787 = pneg %p192
      %p788 = scmp.lt.s32.totalorder %s33, 1
      %s789 = scalar_select %p788, %s33, 1
      %s790 = smul.addr %s789, 4
      %s791 = scalar_lea.vmem %s7, %s790
      %p792 = pneg %p221
      %p793 = pneg %p218
      %p794 = scmp.lt.s32.totalorder %s33, 1
      %s795 = scalar_select %p794, %s33, 1
      %s796 = smul.addr %s795, 64
      %s797 = smul.addr %s796, 8
      %s798 = scalar_lea.vmem %s8, %s797
      %p799 = pneg %p247
      %p800 = pneg %p244
      %p801 = scmp.lt.s32.totalorder %s33, 1
      %s802 = scalar_select %p801, %s33, 1
      %s803 = smul.addr %s802, 4
      %s804 = scalar_lea.vmem %s9, %s803
      %p805 = pneg %p273
      %p806 = pneg %p270
      %p807 = scmp.lt.s32.totalorder %s33, 1
      %s808 = scalar_select %p807, %s33, 1
      %s809 = smul.addr %s808, 16
      %s810 = smul.addr %s809, 8
      %s811 = scalar_lea.vmem %s10, %s810
      %p812 = pneg %p299
      %p813 = pneg %p296
      %p814 = scmp.lt.s32.totalorder %s33, 1
      %s815 = scalar_select %p814, %s33, 1
      %s816 = scalar_lea.vmem %s11, %s815
      %p817 = pneg %p325
      %p818 = pneg %p322
      %p819 = scmp.lt.s32.totalorder %s33, 1
      %s820 = scalar_select %p819, %s33, 1
      %s821 = scalar_lea.vmem %s12, %s820
      %p822 = pneg %p351
      %p823 = pneg %p348
      %p824 = scmp.lt.s32.totalorder %s33, 1
      %s825 = scalar_select %p824, %s33, 1
      %s826 = scalar_lea.vmem %s13, %s825
      %p827 = pneg %p377
      %p828 = pneg %p374
      %p829 = scmp.lt.s32.totalorder %s33, 1
      %s830 = scalar_select %p829, %s33, 1
      %s831 = smul.addr %s830, 32
      %s832 = smul.addr %s831, 8
      %s833 = scalar_lea.vmem %s14, %s832
      %p834 = pneg %p403
      %p835 = pneg %p400
      %p836 = scmp.lt.s32.totalorder %s33, 1
      %s837 = scalar_select %p836, %s33, 1
      %s838 = smul.addr %s837, 2
      %s839 = scalar_lea.vmem %s15, %s838
      %p840 = pneg %p429
      %p841 = pneg %p426
      %p842 = scmp.lt.s32.totalorder %s33, 1
      %s843 = scalar_select %p842, %s33, 1
      %s844 = smul.addr %s843, 32
      %s845 = smul.addr %s844, 8
      %s846 = scalar_lea.vmem %s16, %s845
      %p847 = pneg %p455
      %p848 = pneg %p452
      %p849 = scmp.lt.s32.totalorder %s33, 1
      %s850 = scalar_select %p849, %s33, 1
      %s851 = scalar_lea.vmem %s17, %s850
      %p852 = pneg %p481
      %p853 = pneg %p478
      %p854 = scmp.lt.s32.totalorder %s33, 1
      %s855 = scalar_select %p854, %s33, 1
      %s856 = scalar_lea.vmem %s18, %s855
      %p857 = pneg %p507
      %p858 = pneg %p504
      %p859 = scmp.lt.s32.totalorder %s33, 1
      %s860 = scalar_select %p859, %s33, 1
      %s861 = scalar_lea.vmem %s19, %s860
      %p862 = pneg %p533
      %p863 = pneg %p530
      %p864 = pneg %p554
      %p865 = pneg %p551
      %p866 = pneg %p575
      %p867 = pneg %p572
      %p868 = pneg %p596
      %p869 = pneg %p593
      %p870 = scmp.lt.s32.totalorder %s33, 1
      %s871 = scalar_select %p870, %s33, 1
      %s872 = smul.addr %s871, 2
      %s873 = scalar_lea.vmem %s3, %s872
      %p874 = scmp.lt.s32.totalorder %s33, 1
      %s875 = scalar_select %p874, %s33, 1
      %s876 = smul.addr %s875, 64
      %s877 = smul.addr %s876, 8
      %s878 = scalar_lea.vmem %s4, %s877
      %p879 = scmp.lt.s32.totalorder %s33, 1
      %s880 = scalar_select %p879, %s33, 1
      %s881 = smul.addr %s880, 4
      %s882 = scalar_lea.vmem %s5, %s881
      %p883 = scmp.lt.s32.totalorder %s33, 1
      %s884 = scalar_select %p883, %s33, 1
      %s885 = smul.addr %s884, 64
      %s886 = smul.addr %s885, 8
      %s887 = scalar_lea.vmem %s6, %s886
      %p888 = scmp.lt.s32.totalorder %s33, 1
      %s889 = scalar_select %p888, %s33, 1
      %s890 = smul.addr %s889, 4
      %s891 = scalar_lea.vmem %s7, %s890
      %p892 = scmp.lt.s32.totalorder %s33, 1
      %s893 = scalar_select %p892, %s33, 1
      %s894 = smul.addr %s893, 64
      %s895 = smul.addr %s894, 8
      %s896 = scalar_lea.vmem %s8, %s895
      %p897 = scmp.lt.s32.totalorder %s33, 1
      %s898 = scalar_select %p897, %s33, 1
      %s899 = smul.addr %s898, 4
      %s900 = scalar_lea.vmem %s9, %s899
      %p901 = scmp.lt.s32.totalorder %s33, 1
      %s902 = scalar_select %p901, %s33, 1
      %s903 = smul.addr %s902, 16
      %s904 = smul.addr %s903, 8
      %s905 = scalar_lea.vmem %s10, %s904
      %p906 = scmp.lt.s32.totalorder %s33, 1
      %s907 = scalar_select %p906, %s33, 1
      %s908 = scalar_lea.vmem %s11, %s907
      %p909 = scmp.lt.s32.totalorder %s33, 1
      %s910 = scalar_select %p909, %s33, 1
      %s911 = scalar_lea.vmem %s12, %s910
      %p912 = scmp.lt.s32.totalorder %s33, 1
      %s913 = scalar_select %p912, %s33, 1
      %s914 = scalar_lea.vmem %s13, %s913
      %p915 = scmp.lt.s32.totalorder %s33, 1
      %s916 = scalar_select %p915, %s33, 1
      %s917 = smul.addr %s916, 32
      %s918 = smul.addr %s917, 8
      %s919 = scalar_lea.vmem %s14, %s918
      %p920 = scmp.lt.s32.totalorder %s33, 1
      %s921 = scalar_select %p920, %s33, 1
      %s922 = smul.addr %s921, 2
      %s923 = scalar_lea.vmem %s15, %s922
      %p924 = scmp.lt.s32.totalorder %s33, 1
      %s925 = scalar_select %p924, %s33, 1
      %s926 = smul.addr %s925, 32
      %s927 = smul.addr %s926, 8
      %s928 = scalar_lea.vmem %s16, %s927
      %p929 = scmp.lt.s32.totalorder %s33, 1
      %s930 = scalar_select %p929, %s33, 1
      %s931 = scalar_lea.vmem %s17, %s930
      %p932 = scmp.lt.s32.totalorder %s33, 1
      %s933 = scalar_select %p932, %s33, 1
      %s934 = scalar_lea.vmem %s18, %s933
      %p935 = scmp.lt.s32.totalorder %s33, 1
      %s936 = scalar_select %p935, %s33, 1
      %s937 = scalar_lea.vmem %s19, %s936
      %p938 = scmp.eq.s32.totalorder %s33, 0
      // Predicated region
      $region109: #{tpu_custom_call.1} parent=107 // pred_check
        %p939 = pneg %p938
      $region110: #{tpu_custom_call.1} parent=107 // pred_check_branch
        %941 = sbr.rel (%p939) target = $region112
      $region111: #{tpu_custom_call.1} parent=107 // pred_region
        %v942 = vld [vmem:[%s0] sm:$0xff]
        %v943 = vld [vmem:[%s0 + $0x8] sm:$0xff]
        %v944 = vld [vmem:[%s1] sm:$0xff]
        %v945 = vld [vmem:[%s1 + $0x8] sm:$0xf]
        %v946 = vld [vmem:[%s2] sm:$0x1]
        %v948 = vlaneseq
        %v949 = vshrl.u32 %v948, 7
        %v950 = vsub.s32 0, %v949
        %v951 = vrot.slane %v946, %v950
        %vm953 = vcmask 97280
        %v955 = vsel %vm953, %v942, 0
        %v958 = vsel %vm953, %v943, 0
        %vm960 = vcmask 1043456
        %v962 = vsel %vm960, %v945, 0
        %964 = vmatprep.subr.mxu0 0.0
        %965 = vmatpush1.msra.mxu0 0.0
        %966 = vmatprep.subr.mxu0 0.0
        %967 = vmatpush1.msra.mxu0 0.0
        %968 = vmatprep.subr.mxu0 0.0
        %969 = vmatpush1.msra.mxu0 0.0
        %970 = vmatprep.subr.mxu0 0.0
        %971 = vmatpush1.msra.mxu0 0.0
        %972 = vmatprep.subr.mxu0 0.0
        %973 = vmatpush1.msra.mxu0 0.0
        %974 = vmatprep.subr.mxu0 0.0
        %975 = vmatpush1.msra.mxu0 0.0
        %976 = vmatprep.subr.mxu0 0.0
        %977 = vmatpush1.msra.mxu0 0.0
        %978 = vmatprep.subr.mxu0 0.0
        %979 = vmatpush1.msra.mxu0 0.0
        %980 = vmatprep.subr.mxu0 0.0
        %981 = vmatpush1.msra.mxu0 0.0
        %982 = vmatprep.subr.mxu0 0.0
        %983 = vmatpush1.msra.mxu0 0.0
        %984 = vmatprep.subr.mxu0 0.0
        %985 = vmatpush1.msra.mxu0 0.0
        %986 = vmatprep.subr.mxu0 0.0
        %987 = vmatpush1.msra.mxu0 0.0
        %988 = vmatprep.subr.mxu0 0.0
        %989 = vmatpush1.msra.mxu0 0.0
        %990 = vmatprep.subr.mxu0 0.0
        %991 = vmatpush1.msra.mxu0 0.0
        %992 = vmatprep.subr.mxu0 0.0
        %993 = vmatpush1.msra.mxu0 %v962
        %994 = vmatprep.subr.mxu0 0.0
        %995 = vmatpush1.msra.mxu0 %v944
        %996 = vmatprep.subr.mxu0 0.0
        %997 = vmatpush2.msra.mxu0 0.0
        %998 = vmatprep.subr.mxu0 0.0
        %999 = vmatpush2.msra.mxu0 0.0
        %1000 = vmatprep.subr.mxu0 0.0
        %1001 = vmatpush2.msra.mxu0 0.0
        %1002 = vmatprep.subr.mxu0 0.0
        %1003 = vmatpush2.msra.mxu0 0.0
        %1004 = vmatprep.subr.mxu0 0.0
        %1005 = vmatpush2.msra.mxu0 0.0
        %1006 = vmatprep.subr.mxu0 0.0
        %1007 = vmatpush2.msra.mxu0 0.0
        %1008 = vmatprep.subr.mxu0 0.0
        %1009 = vmatpush2.msra.mxu0 0.0
        %1010 = vmatprep.subr.mxu0 0.0
        %1011 = vmatpush2.msra.mxu0 0.0
        %1012 = vmatprep.subr.mxu0 0.0
        %1013 = vmatpush2.msra.mxu0 0.0
        %1014 = vmatprep.subr.mxu0 0.0
        %1015 = vmatpush2.msra.mxu0 0.0
        %1016 = vmatprep.subr.mxu0 0.0
        %1017 = vmatpush2.msra.mxu0 0.0
        %1018 = vmatprep.subr.mxu0 0.0
        %1019 = vmatpush2.msra.mxu0 0.0
        %1020 = vmatprep.subr.mxu0 0.0
        %1021 = vmatpush2.msra.mxu0 0.0
        %1022 = vmatprep.subr.mxu0 0.0
        %1023 = vmatpush2.msra.mxu0 0.0
        %1024 = vmatprep.subr.mxu0 0.0
        %1025 = vmatpush2.msra.mxu0 0.0
        %1026 = vmatprep.subr.mxu0 0.0
        %1027 = vmatpush2.msra.mxu0 0.0
        %1028 = vmatprep.mubr.f32.mxu0 0.0
        %1029 = vmatmul.mubr.f32.gmra.mxu0 %v955
        %v1030 = vpop.f32.mrf.mxu0
        %v1031 = vadd.f32 %v951, %v1030
        %v1032 = vpop.f32.mrf.mxu0
        %1033 = vmatprep.mubr.f32.mxu0 0.0
        %1034 = vmatmul.mubr.f32.gmra.mxu0 %v958
        %v1035 = vpop.f32.mrf.mxu0
        %v1036 = vadd.f32 %v951, %v1035
        %v1037 = vpop.f32.mrf.mxu0
        %1038 = vdwg.mxu0
        %v1039 = vmax.f32 %v1031, 0.0
        %v1040 = vmax.f32 %v1036, 0.0
        %1041 = vst [vmem:[#allocation2] sm:$0xff] %v1039
        %1042 = vst [vmem:[#allocation2 + $0x8] sm:$0xff] %v1040
      $region112: #{tpu_custom_call.1} parent=107 // pred_fallthru
        _
      %v1043 = vld [vmem:[#allocation2] sm:$0xff]
      %v1044 = vld [vmem:[#allocation2 + $0x8] sm:$0xff]
      %v1045 = vld [vmem:[%s873] sm:$0x1]
      %v1046 = vld [vmem:[%s873 + $0x1] sm:$0x1]
      %v1049 = vlaneseq
      %v1050 = vshrl.u32 %v1049, 7
      %v1051 = vsub.s32 0, %v1050
      %v1052 = vrot.slane %v1045, %v1051
      %v1053 = vlaneseq
      %v1054 = vshrl.u32 %v1053, 7
      %v1055 = vsub.s32 0, %v1054
      %v1056 = vrot.slane %v1046, %v1055
      %v1059 = vadd.f32 %v1043, %v1052
      %v1060 = vadd.f32 %v1044, %v1056
      %v1061 = vld [vmem:[%s878] sm:$0xff]
      %v1062 = vld [vmem:[%s878 + $0x8] sm:$0xff]
      %v1063 = vld [vmem:[%s878 + $0x10] sm:$0xff]
      %v1064 = vld [vmem:[%s878 + $0x18] sm:$0xff]
      %v1065 = vld [vmem:[%s878 + $0x20] sm:$0xff]
      %v1066 = vld [vmem:[%s878 + $0x28] sm:$0xff]
      %v1067 = vld [vmem:[%s878 + $0x30] sm:$0xff]
      %v1068 = vld [vmem:[%s878 + $0x38] sm:$0xff]
      %v1069 = vld [vmem:[%s878 + $0x40] sm:$0xff]
      %v1070 = vld [vmem:[%s878 + $0x48] sm:$0xff]
      %v1071 = vld [vmem:[%s878 + $0x50] sm:$0xff]
      %v1072 = vld [vmem:[%s878 + $0x58] sm:$0xff]
      %v1073 = vld [vmem:[%s878 + $0x60] sm:$0xff]
      %v1074 = vld [vmem:[%s878 + $0x68] sm:$0xff]
      %v1075 = vld [vmem:[%s878 + $0x70] sm:$0xff]
      %v1076 = vld [vmem:[%s878 + $0x78] sm:$0xff]
      %v1077 = vld [vmem:[%s878 + $0x80] sm:$0xff]
      %v1078 = vld [vmem:[%s878 + $0x88] sm:$0xff]
      %v1079 = vld [vmem:[%s878 + $0x90] sm:$0xff]
      %v1080 = vld [vmem:[%s878 + $0x98] sm:$0xff]
      %v1081 = vld [vmem:[%s878 + $0xa0] sm:$0xff]
      %v1082 = vld [vmem:[%s878 + $0xa8] sm:$0xff]
      %v1083 = vld [vmem:[%s878 + $0xb0] sm:$0xff]
      %v1084 = vld [vmem:[%s878 + $0xb8] sm:$0xff]
      %v1085 = vld [vmem:[%s878 + $0xc0] sm:$0xff]
      %v1086 = vld [vmem:[%s878 + $0xc8] sm:$0xff]
      %v1087 = vld [vmem:[%s878 + $0xd0] sm:$0xff]
      %v1088 = vld [vmem:[%s878 + $0xd8] sm:$0xff]
      %v1089 = vld [vmem:[%s878 + $0xe0] sm:$0xff]
      %v1090 = vld [vmem:[%s878 + $0xe8] sm:$0xff]
      %v1091 = vld [vmem:[%s878 + $0xf0] sm:$0xff]
      %v1092 = vld [vmem:[%s878 + $0xf8] sm:$0xff]
      %v1093 = vld [vmem:[%s878 + $0x100] sm:$0xff]
      %v1094 = vld [vmem:[%s878 + $0x108] sm:$0xff]
      %v1095 = vld [vmem:[%s878 + $0x110] sm:$0xff]
      %v1096 = vld [vmem:[%s878 + $0x118] sm:$0xff]
      %v1097 = vld [vmem:[%s878 + $0x120] sm:$0xff]
      %v1098 = vld [vmem:[%s878 + $0x128] sm:$0xff]
      %v1099 = vld [vmem:[%s878 + $0x130] sm:$0xff]
      %v1100 = vld [vmem:[%s878 + $0x138] sm:$0xff]
      %v1101 = vld [vmem:[%s878 + $0x140] sm:$0xff]
      %v1102 = vld [vmem:[%s878 + $0x148] sm:$0xff]
      %v1103 = vld [vmem:[%s878 + $0x150] sm:$0xff]
      %v1104 = vld [vmem:[%s878 + $0x158] sm:$0xff]
      %v1105 = vld [vmem:[%s878 + $0x160] sm:$0xff]
      %v1106 = vld [vmem:[%s878 + $0x168] sm:$0xff]
      %v1107 = vld [vmem:[%s878 + $0x170] sm:$0xff]
      %v1108 = vld [vmem:[%s878 + $0x178] sm:$0xff]
      %v1109 = vld [vmem:[%s878 + $0x180] sm:$0xff]
      %v1110 = vld [vmem:[%s878 + $0x188] sm:$0xff]
      %v1111 = vld [vmem:[%s878 + $0x190] sm:$0xff]
      %v1112 = vld [vmem:[%s878 + $0x198] sm:$0xff]
      %v1113 = vld [vmem:[%s878 + $0x1a0] sm:$0xff]
      %v1114 = vld [vmem:[%s878 + $0x1a8] sm:$0xff]
      %v1115 = vld [vmem:[%s878 + $0x1b0] sm:$0xff]
      %v1116 = vld [vmem:[%s878 + $0x1b8] sm:$0xff]
      %v1117 = vld [vmem:[%s878 + $0x1c0] sm:$0xff]
      %v1118 = vld [vmem:[%s878 + $0x1c8] sm:$0xff]
      %v1119 = vld [vmem:[%s878 + $0x1d0] sm:$0xff]
      %v1120 = vld [vmem:[%s878 + $0x1d8] sm:$0xff]
      %v1121 = vld [vmem:[%s878 + $0x1e0] sm:$0xff]
      %v1122 = vld [vmem:[%s878 + $0x1e8] sm:$0xff]
      %v1123 = vld [vmem:[%s878 + $0x1f0] sm:$0xff]
      %v1124 = vld [vmem:[%s878 + $0x1f8] sm:$0xff]
      %v1125 = vld [vmem:[%s882] sm:$0x1]
      %v1126 = vld [vmem:[%s882 + $0x1] sm:$0x1]
      %v1127 = vld [vmem:[%s882 + $0x2] sm:$0x1]
      %v1128 = vld [vmem:[%s882 + $0x3] sm:$0x1]
      %v1129 = vld [vmem:[%s887] sm:$0xff]
      %v1130 = vld [vmem:[%s887 + $0x8] sm:$0xff]
      %v1131 = vld [vmem:[%s887 + $0x10] sm:$0xff]
      %v1132 = vld [vmem:[%s887 + $0x18] sm:$0xff]
      %v1133 = vld [vmem:[%s887 + $0x20] sm:$0xff]
      %v1134 = vld [vmem:[%s887 + $0x28] sm:$0xff]
      %v1135 = vld [vmem:[%s887 + $0x30] sm:$0xff]
      %v1136 = vld [vmem:[%s887 + $0x38] sm:$0xff]
      %v1137 = vld [vmem:[%s887 + $0x40] sm:$0xff]
      %v1138 = vld [vmem:[%s887 + $0x48] sm:$0xff]
      %v1139 = vld [vmem:[%s887 + $0x50] sm:$0xff]
      %v1140 = vld [vmem:[%s887 + $0x58] sm:$0xff]
      %v1141 = vld [vmem:[%s887 + $0x60] sm:$0xff]
      %v1142 = vld [vmem:[%s887 + $0x68] sm:$0xff]
      %v1143 = vld [vmem:[%s887 + $0x70] sm:$0xff]
      %v1144 = vld [vmem:[%s887 + $0x78] sm:$0xff]
      %v1145 = vld [vmem:[%s887 + $0x80] sm:$0xff]
      %v1146 = vld [vmem:[%s887 + $0x88] sm:$0xff]
      %v1147 = vld [vmem:[%s887 + $0x90] sm:$0xff]
      %v1148 = vld [vmem:[%s887 + $0x98] sm:$0xff]
      %v1149 = vld [vmem:[%s887 + $0xa0] sm:$0xff]
      %v1150 = vld [vmem:[%s887 + $0xa8] sm:$0xff]
      %v1151 = vld [vmem:[%s887 + $0xb0] sm:$0xff]
      %v1152 = vld [vmem:[%s887 + $0xb8] sm:$0xff]
      %v1153 = vld [vmem:[%s887 + $0xc0] sm:$0xff]
      %v1154 = vld [vmem:[%s887 + $0xc8] sm:$0xff]
      %v1155 = vld [vmem:[%s887 + $0xd0] sm:$0xff]
      %v1156 = vld [vmem:[%s887 + $0xd8] sm:$0xff]
      %v1157 = vld [vmem:[%s887 + $0xe0] sm:$0xff]
      %v1158 = vld [vmem:[%s887 + $0xe8] sm:$0xff]
      %v1159 = vld [vmem:[%s887 + $0xf0] sm:$0xff]
      %v1160 = vld [vmem:[%s887 + $0xf8] sm:$0xff]
      %v1161 = vld [vmem:[%s887 + $0x100] sm:$0xff]
      %v1162 = vld [vmem:[%s887 + $0x108] sm:$0xff]
      %v1163 = vld [vmem:[%s887 + $0x110] sm:$0xff]
      %v1164 = vld [vmem:[%s887 + $0x118] sm:$0xff]
      %v1165 = vld [vmem:[%s887 + $0x120] sm:$0xff]
      %v1166 = vld [vmem:[%s887 + $0x128] sm:$0xff]
      %v1167 = vld [vmem:[%s887 + $0x130] sm:$0xff]
      %v1168 = vld [vmem:[%s887 + $0x138] sm:$0xff]
      %v1169 = vld [vmem:[%s887 + $0x140] sm:$0xff]
      %v1170 = vld [vmem:[%s887 + $0x148] sm:$0xff]
      %v1171 = vld [vmem:[%s887 + $0x150] sm:$0xff]
      %v1172 = vld [vmem:[%s887 + $0x158] sm:$0xff]
      %v1173 = vld [vmem:[%s887 + $0x160] sm:$0xff]
      %v1174 = vld [vmem:[%s887 + $0x168] sm:$0xff]
      %v1175 = vld [vmem:[%s887 + $0x170] sm:$0xff]
      %v1176 = vld [vmem:[%s887 + $0x178] sm:$0xff]
      %v1177 = vld [vmem:[%s887 + $0x180] sm:$0xff]
      %v1178 = vld [vmem:[%s887 + $0x188] sm:$0xff]
      %v1179 = vld [vmem:[%s887 + $0x190] sm:$0xff]
      %v1180 = vld [vmem:[%s887 + $0x198] sm:$0xff]
      %v1181 = vld [vmem:[%s887 + $0x1a0] sm:$0xff]
      %v1182 = vld [vmem:[%s887 + $0x1a8] sm:$0xff]
      %v1183 = vld [vmem:[%s887 + $0x1b0] sm:$0xff]
      %v1184 = vld [vmem:[%s887 + $0x1b8] sm:$0xff]
      %v1185 = vld [vmem:[%s887 + $0x1c0] sm:$0xff]
      %v1186 = vld [vmem:[%s887 + $0x1c8] sm:$0xff]
      %v1187 = vld [vmem:[%s887 + $0x1d0] sm:$0xff]
      %v1188 = vld [vmem:[%s887 + $0x1d8] sm:$0xff]
      %v1189 = vld [vmem:[%s887 + $0x1e0] sm:$0xff]
      %v1190 = vld [vmem:[%s887 + $0x1e8] sm:$0xff]
      %v1191 = vld [vmem:[%s887 + $0x1f0] sm:$0xff]
      %v1192 = vld [vmem:[%s887 + $0x1f8] sm:$0xff]
      %v1193 = vld [vmem:[%s891] sm:$0x1]
      %v1194 = vld [vmem:[%s891 + $0x1] sm:$0x1]
      %v1195 = vld [vmem:[%s891 + $0x2] sm:$0x1]
      %v1196 = vld [vmem:[%s891 + $0x3] sm:$0x1]
      %v1197 = vld [vmem:[%s896] sm:$0xff]
      %v1198 = vld [vmem:[%s896 + $0x8] sm:$0xff]
      %v1199 = vld [vmem:[%s896 + $0x10] sm:$0xff]
      %v1200 = vld [vmem:[%s896 + $0x18] sm:$0xff]
      %v1201 = vld [vmem:[%s896 + $0x20] sm:$0xff]
      %v1202 = vld [vmem:[%s896 + $0x28] sm:$0xff]
      %v1203 = vld [vmem:[%s896 + $0x30] sm:$0xff]
      %v1204 = vld [vmem:[%s896 + $0x38] sm:$0xff]
      %v1205 = vld [vmem:[%s896 + $0x40] sm:$0xff]
      %v1206 = vld [vmem:[%s896 + $0x48] sm:$0xff]
      %v1207 = vld [vmem:[%s896 + $0x50] sm:$0xff]
      %v1208 = vld [vmem:[%s896 + $0x58] sm:$0xff]
      %v1209 = vld [vmem:[%s896 + $0x60] sm:$0xff]
      %v1210 = vld [vmem:[%s896 + $0x68] sm:$0xff]
      %v1211 = vld [vmem:[%s896 + $0x70] sm:$0xff]
      %v1212 = vld [vmem:[%s896 + $0x78] sm:$0xff]
      %v1213 = vld [vmem:[%s896 + $0x80] sm:$0xff]
      %v1214 = vld [vmem:[%s896 + $0x88] sm:$0xff]
      %v1215 = vld [vmem:[%s896 + $0x90] sm:$0xff]
      %v1216 = vld [vmem:[%s896 + $0x98] sm:$0xff]
      %v1217 = vld [vmem:[%s896 + $0xa0] sm:$0xff]
      %v1218 = vld [vmem:[%s896 + $0xa8] sm:$0xff]
      %v1219 = vld [vmem:[%s896 + $0xb0] sm:$0xff]
      %v1220 = vld [vmem:[%s896 + $0xb8] sm:$0xff]
      %v1221 = vld [vmem:[%s896 + $0xc0] sm:$0xff]
      %v1222 = vld [vmem:[%s896 + $0xc8] sm:$0xff]
      %v1223 = vld [vmem:[%s896 + $0xd0] sm:$0xff]
      %v1224 = vld [vmem:[%s896 + $0xd8] sm:$0xff]
      %v1225 = vld [vmem:[%s896 + $0xe0] sm:$0xff]
      %v1226 = vld [vmem:[%s896 + $0xe8] sm:$0xff]
      %v1227 = vld [vmem:[%s896 + $0xf0] sm:$0xff]
      %v1228 = vld [vmem:[%s896 + $0xf8] sm:$0xff]
      %v1229 = vld [vmem:[%s896 + $0x100] sm:$0xff]
      %v1230 = vld [vmem:[%s896 + $0x108] sm:$0xff]
      %v1231 = vld [vmem:[%s896 + $0x110] sm:$0xff]
      %v1232 = vld [vmem:[%s896 + $0x118] sm:$0xff]
      %v1233 = vld [vmem:[%s896 + $0x120] sm:$0xff]
      %v1234 = vld [vmem:[%s896 + $0x128] sm:$0xff]
      %v1235 = vld [vmem:[%s896 + $0x130] sm:$0xff]
      %v1236 = vld [vmem:[%s896 + $0x138] sm:$0xff]
      %v1237 = vld [vmem:[%s896 + $0x140] sm:$0xff]
      %v1238 = vld [vmem:[%s896 + $0x148] sm:$0xff]
      %v1239 = vld [vmem:[%s896 + $0x150] sm:$0xff]
      %v1240 = vld [vmem:[%s896 + $0x158] sm:$0xff]
      %v1241 = vld [vmem:[%s896 + $0x160] sm:$0xff]
      %v1242 = vld [vmem:[%s896 + $0x168] sm:$0xff]
      %v1243 = vld [vmem:[%s896 + $0x170] sm:$0xff]
      %v1244 = vld [vmem:[%s896 + $0x178] sm:$0xff]
      %v1245 = vld [vmem:[%s896 + $0x180] sm:$0xff]
      %v1246 = vld [vmem:[%s896 + $0x188] sm:$0xff]
      %v1247 = vld [vmem:[%s896 + $0x190] sm:$0xff]
      %v1248 = vld [vmem:[%s896 + $0x198] sm:$0xff]
      %v1249 = vld [vmem:[%s896 + $0x1a0] sm:$0xff]
      %v1250 = vld [vmem:[%s896 + $0x1a8] sm:$0xff]
      %v1251 = vld [vmem:[%s896 + $0x1b0] sm:$0xff]
      %v1252 = vld [vmem:[%s896 + $0x1b8] sm:$0xff]
      %v1253 = vld [vmem:[%s896 + $0x1c0] sm:$0xff]
      %v1254 = vld [vmem:[%s896 + $0x1c8] sm:$0xff]
      %v1255 = vld [vmem:[%s896 + $0x1d0] sm:$0xff]
      %v1256 = vld [vmem:[%s896 + $0x1d8] sm:$0xff]
      %v1257 = vld [vmem:[%s896 + $0x1e0] sm:$0xff]
      %v1258 = vld [vmem:[%s896 + $0x1e8] sm:$0xff]
      %v1259 = vld [vmem:[%s896 + $0x1f0] sm:$0xff]
      %v1260 = vld [vmem:[%s896 + $0x1f8] sm:$0xff]
      %v1261 = vld [vmem:[%s900] sm:$0x1]
      %v1262 = vld [vmem:[%s900 + $0x1] sm:$0x1]
      %v1263 = vld [vmem:[%s900 + $0x2] sm:$0x1]
      %v1264 = vld [vmem:[%s900 + $0x3] sm:$0x1]
      %v1265 = vld [vmem:[%s905] sm:$0xff]
      %v1266 = vld [vmem:[%s905 + $0x8] sm:$0xff]
      %v1267 = vld [vmem:[%s905 + $0x10] sm:$0xff]
      %v1268 = vld [vmem:[%s905 + $0x18] sm:$0xff]
      %v1269 = vld [vmem:[%s905 + $0x20] sm:$0xff]
      %v1270 = vld [vmem:[%s905 + $0x28] sm:$0xff]
      %v1271 = vld [vmem:[%s905 + $0x30] sm:$0xff]
      %v1272 = vld [vmem:[%s905 + $0x38] sm:$0xff]
      %v1273 = vld [vmem:[%s905 + $0x40] sm:$0xff]
      %v1274 = vld [vmem:[%s905 + $0x48] sm:$0xff]
      %v1275 = vld [vmem:[%s905 + $0x50] sm:$0xff]
      %v1276 = vld [vmem:[%s905 + $0x58] sm:$0xff]
      %v1277 = vld [vmem:[%s905 + $0x60] sm:$0xff]
      %v1278 = vld [vmem:[%s905 + $0x68] sm:$0xff]
      %v1279 = vld [vmem:[%s905 + $0x70] sm:$0xff]
      %v1280 = vld [vmem:[%s905 + $0x78] sm:$0xff]
      %v1282 = vlaneseq
      %v1283 = vshrl.u32 %v1282, 7
      %v1284 = vsub.s32 0, %v1283
      %v1285 = vrot.slane %v1125, %v1284
      %1287 = vmatprep.subr.mxu0 0.0
      %1288 = vmatpush1.msra.mxu0 %v1076
      %1289 = vmatprep.subr.mxu0 0.0
      %1290 = vmatpush1.msra.mxu0 %v1075
      %1291 = vmatprep.subr.mxu0 0.0
      %1292 = vmatpush1.msra.mxu0 %v1074
      %1293 = vmatprep.subr.mxu0 0.0
      %1294 = vmatpush1.msra.mxu0 %v1073
      %1295 = vmatprep.subr.mxu0 0.0
      %1296 = vmatpush1.msra.mxu0 %v1072
      %1297 = vmatprep.subr.mxu0 0.0
      %1298 = vmatpush1.msra.mxu0 %v1071
      %1299 = vmatprep.subr.mxu0 0.0
      %1300 = vmatpush1.msra.mxu0 %v1070
      %1301 = vmatprep.subr.mxu0 0.0
      %1302 = vmatpush1.msra.mxu0 %v1069
      %1303 = vmatprep.subr.mxu0 0.0
      %1304 = vmatpush1.msra.mxu0 %v1068
      %1305 = vmatprep.subr.mxu0 0.0
      %1306 = vmatpush1.msra.mxu0 %v1067
      %1307 = vmatprep.subr.mxu0 0.0
      %1308 = vmatpush1.msra.mxu0 %v1066
      %1309 = vmatprep.subr.mxu0 0.0
      %1310 = vmatpush1.msra.mxu0 %v1065
      %1311 = vmatprep.subr.mxu0 0.0
      %1312 = vmatpush1.msra.mxu0 %v1064
      %1313 = vmatprep.subr.mxu0 0.0
      %1314 = vmatpush1.msra.mxu0 %v1063
      %1315 = vmatprep.subr.mxu0 0.0
      %1316 = vmatpush1.msra.mxu0 %v1062
      %1317 = vmatprep.subr.mxu0 0.0
      %1318 = vmatpush1.msra.mxu0 %v1061
      %1319 = vmatprep.subr.mxu0 0.0
      %1320 = vmatpush2.msra.mxu0 0.0
      %1321 = vmatprep.subr.mxu0 0.0
      %1322 = vmatpush2.msra.mxu0 0.0
      %1323 = vmatprep.subr.mxu0 0.0
      %1324 = vmatpush2.msra.mxu0 0.0
      %1325 = vmatprep.subr.mxu0 0.0
      %1326 = vmatpush2.msra.mxu0 0.0
      %1327 = vmatprep.subr.mxu0 0.0
      %1328 = vmatpush2.msra.mxu0 0.0
      %1329 = vmatprep.subr.mxu0 0.0
      %1330 = vmatpush2.msra.mxu0 0.0
      %1331 = vmatprep.subr.mxu0 0.0
      %1332 = vmatpush2.msra.mxu0 0.0
      %1333 = vmatprep.subr.mxu0 0.0
      %1334 = vmatpush2.msra.mxu0 0.0
      %1335 = vmatprep.subr.mxu0 0.0
      %1336 = vmatpush2.msra.mxu0 0.0
      %1337 = vmatprep.subr.mxu0 0.0
      %1338 = vmatpush2.msra.mxu0 0.0
      %1339 = vmatprep.subr.mxu0 0.0
      %1340 = vmatpush2.msra.mxu0 0.0
      %1341 = vmatprep.subr.mxu0 0.0
      %1342 = vmatpush2.msra.mxu0 0.0
      %1343 = vmatprep.subr.mxu0 0.0
      %1344 = vmatpush2.msra.mxu0 0.0
      %1345 = vmatprep.subr.mxu0 0.0
      %1346 = vmatpush2.msra.mxu0 0.0
      %1347 = vmatprep.subr.mxu0 0.0
      %1348 = vmatpush2.msra.mxu0 0.0
      %1349 = vmatprep.subr.mxu0 0.0
      %1350 = vmatpush2.msra.mxu0 0.0
      %1351 = vmatprep.mubr.f32.mxu0 0.0
      %1352 = vmatmul.mubr.f32.gmra.mxu0 %v1059
      %v1353 = vpop.f32.mrf.mxu0
      %v1354 = vadd.f32 %v1285, %v1353
      %v1355 = vpop.f32.mrf.mxu0
      %1356 = vmatprep.mubr.f32.mxu0 0.0
      %1357 = vmatmul.mubr.f32.gmra.mxu0 %v1060
      %v1358 = vpop.f32.mrf.mxu0
      %v1359 = vadd.f32 %v1285, %v1358
      %v1360 = vpop.f32.mrf.mxu0
      %1361 = vdwg.mxu0
      %v1363 = vlaneseq
      %v1364 = vshrl.u32 %v1363, 7
      %v1365 = vsub.s32 0, %v1364
      %v1366 = vrot.slane %v1193, %v1365
      %1368 = vmatprep.subr.mxu0 0.0
      %1369 = vmatpush1.msra.mxu0 %v1144
      %1370 = vmatprep.subr.mxu0 0.0
      %1371 = vmatpush1.msra.mxu0 %v1143
      %1372 = vmatprep.subr.mxu0 0.0
      %1373 = vmatpush1.msra.mxu0 %v1142
      %1374 = vmatprep.subr.mxu0 0.0
      %1375 = vmatpush1.msra.mxu0 %v1141
      %1376 = vmatprep.subr.mxu0 0.0
      %1377 = vmatpush1.msra.mxu0 %v1140
      %1378 = vmatprep.subr.mxu0 0.0
      %1379 = vmatpush1.msra.mxu0 %v1139
      %1380 = vmatprep.subr.mxu0 0.0
      %1381 = vmatpush1.msra.mxu0 %v1138
      %1382 = vmatprep.subr.mxu0 0.0
      %1383 = vmatpush1.msra.mxu0 %v1137
      %1384 = vmatprep.subr.mxu0 0.0
      %1385 = vmatpush1.msra.mxu0 %v1136
      %1386 = vmatprep.subr.mxu0 0.0
      %1387 = vmatpush1.msra.mxu0 %v1135
      %1388 = vmatprep.subr.mxu0 0.0
      %1389 = vmatpush1.msra.mxu0 %v1134
      %1390 = vmatprep.subr.mxu0 0.0
      %1391 = vmatpush1.msra.mxu0 %v1133
      %1392 = vmatprep.subr.mxu0 0.0
      %1393 = vmatpush1.msra.mxu0 %v1132
      %1394 = vmatprep.subr.mxu0 0.0
      %1395 = vmatpush1.msra.mxu0 %v1131
      %1396 = vmatprep.subr.mxu0 0.0
      %1397 = vmatpush1.msra.mxu0 %v1130
      %1398 = vmatprep.subr.mxu0 0.0
      %1399 = vmatpush1.msra.mxu0 %v1129
      %1400 = vmatprep.subr.mxu0 0.0
      %1401 = vmatpush2.msra.mxu0 0.0
      %1402 = vmatprep.subr.mxu0 0.0
      %1403 = vmatpush2.msra.mxu0 0.0
      %1404 = vmatprep.subr.mxu0 0.0
      %1405 = vmatpush2.msra.mxu0 0.0
      %1406 = vmatprep.subr.mxu0 0.0
      %1407 = vmatpush2.msra.mxu0 0.0
      %1408 = vmatprep.subr.mxu0 0.0
      %1409 = vmatpush2.msra.mxu0 0.0
      %1410 = vmatprep.subr.mxu0 0.0
      %1411 = vmatpush2.msra.mxu0 0.0
      %1412 = vmatprep.subr.mxu0 0.0
      %1413 = vmatpush2.msra.mxu0 0.0
      %1414 = vmatprep.subr.mxu0 0.0
      %1415 = vmatpush2.msra.mxu0 0.0
      %1416 = vmatprep.subr.mxu0 0.0
      %1417 = vmatpush2.msra.mxu0 0.0
      %1418 = vmatprep.subr.mxu0 0.0
      %1419 = vmatpush2.msra.mxu0 0.0
      %1420 = vmatprep.subr.mxu0 0.0
      %1421 = vmatpush2.msra.mxu0 0.0
      %1422 = vmatprep.subr.mxu0 0.0
      %1423 = vmatpush2.msra.mxu0 0.0
      %1424 = vmatprep.subr.mxu0 0.0
      %1425 = vmatpush2.msra.mxu0 0.0
      %1426 = vmatprep.subr.mxu0 0.0
      %1427 = vmatpush2.msra.mxu0 0.0
      %1428 = vmatprep.subr.mxu0 0.0
      %1429 = vmatpush2.msra.mxu0 0.0
      %1430 = vmatprep.subr.mxu0 0.0
      %1431 = vmatpush2.msra.mxu0 0.0
      %1432 = vmatprep.mubr.f32.mxu0 0.0
      %1433 = vmatmul.mubr.f32.gmra.mxu0 %v1059
      %v1434 = vpop.f32.mrf.mxu0
      %v1435 = vadd.f32 %v1366, %v1434
      %v1436 = vpop.f32.mrf.mxu0
      %1437 = vmatprep.mubr.f32.mxu0 0.0
      %1438 = vmatmul.mubr.f32.gmra.mxu0 %v1060
      %v1439 = vpop.f32.mrf.mxu0
      %v1440 = vadd.f32 %v1366, %v1439
      %v1441 = vpop.f32.mrf.mxu0
      %1442 = vdwg.mxu0
      %v1444 = vlaneseq
      %v1445 = vshrl.u32 %v1444, 7
      %v1446 = vsub.s32 0, %v1445
      %v1447 = vrot.slane %v1261, %v1446
      %1449 = vmatprep.subr.mxu0 0.0
      %1450 = vmatpush1.msra.mxu0 %v1212
      %1451 = vmatprep.subr.mxu0 0.0
      %1452 = vmatpush1.msra.mxu0 %v1211
      %1453 = vmatprep.subr.mxu0 0.0
      %1454 = vmatpush1.msra.mxu0 %v1210
      %1455 = vmatprep.subr.mxu0 0.0
      %1456 = vmatpush1.msra.mxu0 %v1209
      %1457 = vmatprep.subr.mxu0 0.0
      %1458 = vmatpush1.msra.mxu0 %v1208
      %1459 = vmatprep.subr.mxu0 0.0
      %1460 = vmatpush1.msra.mxu0 %v1207
      %1461 = vmatprep.subr.mxu0 0.0
      %1462 = vmatpush1.msra.mxu0 %v1206
      %1463 = vmatprep.subr.mxu0 0.0
      %1464 = vmatpush1.msra.mxu0 %v1205
      %1465 = vmatprep.subr.mxu0 0.0
      %1466 = vmatpush1.msra.mxu0 %v1204
      %1467 = vmatprep.subr.mxu0 0.0
      %1468 = vmatpush1.msra.mxu0 %v1203
      %1469 = vmatprep.subr.mxu0 0.0
      %1470 = vmatpush1.msra.mxu0 %v1202
      %1471 = vmatprep.subr.mxu0 0.0
      %1472 = vmatpush1.msra.mxu0 %v1201
      %1473 = vmatprep.subr.mxu0 0.0
      %1474 = vmatpush1.msra.mxu0 %v1200
      %1475 = vmatprep.subr.mxu0 0.0
      %1476 = vmatpush1.msra.mxu0 %v1199
      %1477 = vmatprep.subr.mxu0 0.0
      %1478 = vmatpush1.msra.mxu0 %v1198
      %1479 = vmatprep.subr.mxu0 0.0
      %1480 = vmatpush1.msra.mxu0 %v1197
      %1481 = vmatprep.subr.mxu0 0.0
      %1482 = vmatpush2.msra.mxu0 0.0
      %1483 = vmatprep.subr.mxu0 0.0
      %1484 = vmatpush2.msra.mxu0 0.0
      %1485 = vmatprep.subr.mxu0 0.0
      %1486 = vmatpush2.msra.mxu0 0.0
      %1487 = vmatprep.subr.mxu0 0.0
      %1488 = vmatpush2.msra.mxu0 0.0
      %1489 = vmatprep.subr.mxu0 0.0
      %1490 = vmatpush2.msra.mxu0 0.0
      %1491 = vmatprep.subr.mxu0 0.0
      %1492 = vmatpush2.msra.mxu0 0.0
      %1493 = vmatprep.subr.mxu0 0.0
      %1494 = vmatpush2.msra.mxu0 0.0
      %1495 = vmatprep.subr.mxu0 0.0
      %1496 = vmatpush2.msra.mxu0 0.0
      %1497 = vmatprep.subr.mxu0 0.0
      %1498 = vmatpush2.msra.mxu0 0.0
      %1499 = vmatprep.subr.mxu0 0.0
      %1500 = vmatpush2.msra.mxu0 0.0
      %1501 = vmatprep.subr.mxu0 0.0
      %1502 = vmatpush2.msra.mxu0 0.0
      %1503 = vmatprep.subr.mxu0 0.0
      %1504 = vmatpush2.msra.mxu0 0.0
      %1505 = vmatprep.subr.mxu0 0.0
      %1506 = vmatpush2.msra.mxu0 0.0
      %1507 = vmatprep.subr.mxu0 0.0
      %1508 = vmatpush2.msra.mxu0 0.0
      %1509 = vmatprep.subr.mxu0 0.0
      %1510 = vmatpush2.msra.mxu0 0.0
      %1511 = vmatprep.subr.mxu0 0.0
      %1512 = vmatpush2.msra.mxu0 0.0
      %1513 = vmatprep.mubr.f32.mxu0 0.0
      %1514 = vmatmul.mubr.f32.gmra.mxu0 %v1059
      %v1515 = vpop.f32.mrf.mxu0
      %v1516 = vadd.f32 %v1447, %v1515
      %v1517 = vpop.f32.mrf.mxu0
      %1518 = vmatprep.mubr.f32.mxu0 0.0
      %1519 = vmatmul.mubr.f32.gmra.mxu0 %v1060
      %v1520 = vpop.f32.mrf.mxu0
      %v1521 = vadd.f32 %v1447, %v1520
      %v1522 = vpop.f32.mrf.mxu0
      %1523 = vdwg.mxu0
      %vm1524 = vcmask 261120
      %v1526 = vsel %vm1524, %v1354, 0
      %v1529 = vsel %vm1524, %v1435, 0
      %1531 = vmatprep.subr.mxu0 0.0
      %1532 = vmatpush1.xpose.msra.mxu0 0.0
      %1533 = vmatprep.subr.mxu0 0.0
      %1534 = vmatpush1.xpose.msra.mxu0 0.0
      %1535 = vmatprep.subr.mxu0 0.0
      %1536 = vmatpush1.xpose.msra.mxu0 0.0
      %1537 = vmatprep.subr.mxu0 0.0
      %1538 = vmatpush1.xpose.msra.mxu0 0.0
      %1539 = vmatprep.subr.mxu0 0.0
      %1540 = vmatpush1.xpose.msra.mxu0 0.0
      %1541 = vmatprep.subr.mxu0 0.0
      %1542 = vmatpush1.xpose.msra.mxu0 0.0
      %1543 = vmatprep.subr.mxu0 0.0
      %1544 = vmatpush1.xpose.msra.mxu0 0.0
      %1545 = vmatprep.subr.mxu0 0.0
      %1546 = vmatpush1.xpose.msra.mxu0 0.0
      %1547 = vmatprep.subr.mxu0 0.0
      %1548 = vmatpush1.xpose.msra.mxu0 0.0
      %1549 = vmatprep.subr.mxu0 0.0
      %1550 = vmatpush1.xpose.msra.mxu0 0.0
      %1551 = vmatprep.subr.mxu0 0.0
      %1552 = vmatpush1.xpose.msra.mxu0 0.0
      %1553 = vmatprep.subr.mxu0 0.0
      %1554 = vmatpush1.xpose.msra.mxu0 0.0
      %1555 = vmatprep.subr.mxu0 0.0
      %1556 = vmatpush1.xpose.msra.mxu0 0.0
      %1557 = vmatprep.subr.mxu0 0.0
      %1558 = vmatpush1.xpose.msra.mxu0 0.0
      %1559 = vmatprep.subr.mxu0 0.0
      %1560 = vmatpush1.xpose.msra.mxu0 0.0
      %1561 = vmatprep.subr.mxu0 0.0
      %1562 = vmatpush1.xpose.msra.mxu0 %v1529
      %1563 = vmatprep.subr.mxu0 0.0
      %1564 = vmatpush2.xpose.msra.mxu0 0.0
      %1565 = vmatprep.subr.mxu0 0.0
      %1566 = vmatpush2.xpose.msra.mxu0 0.0
      %1567 = vmatprep.subr.mxu0 0.0
      %1568 = vmatpush2.xpose.msra.mxu0 0.0
      %1569 = vmatprep.subr.mxu0 0.0
      %1570 = vmatpush2.xpose.msra.mxu0 0.0
      %1571 = vmatprep.subr.mxu0 0.0
      %1572 = vmatpush2.xpose.msra.mxu0 0.0
      %1573 = vmatprep.subr.mxu0 0.0
      %1574 = vmatpush2.xpose.msra.mxu0 0.0
      %1575 = vmatprep.subr.mxu0 0.0
      %1576 = vmatpush2.xpose.msra.mxu0 0.0
      %1577 = vmatprep.subr.mxu0 0.0
      %1578 = vmatpush2.xpose.msra.mxu0 0.0
      %1579 = vmatprep.subr.mxu0 0.0
      %1580 = vmatpush2.xpose.msra.mxu0 0.0
      %1581 = vmatprep.subr.mxu0 0.0
      %1582 = vmatpush2.xpose.msra.mxu0 0.0
      %1583 = vmatprep.subr.mxu0 0.0
      %1584 = vmatpush2.xpose.msra.mxu0 0.0
      %1585 = vmatprep.subr.mxu0 0.0
      %1586 = vmatpush2.xpose.msra.mxu0 0.0
      %1587 = vmatprep.subr.mxu0 0.0
      %1588 = vmatpush2.xpose.msra.mxu0 0.0
      %1589 = vmatprep.subr.mxu0 0.0
      %1590 = vmatpush2.xpose.msra.mxu0 0.0
      %1591 = vmatprep.subr.mxu0 0.0
      %1592 = vmatpush2.xpose.msra.mxu0 0.0
      %1593 = vmatprep.subr.mxu0 0.0
      %1594 = vmatpush2.xpose.msra.mxu0 0.0
      %1595 = vmatprep.mubr.f32.mxu0 0.0
      %1596 = vmatmul.mubr.f32.gmra.mxu0 %v1526
      %v1597 = vpop.f32.mrf.mxu0
      %v1598 = vadd.f32 0.0, %v1597
      %v1599 = vpop.f32.mrf.mxu0
      %1600 = vdwg.mxu0
      %v1602 = vsel %vm1524, %v1359, 0
      %v1605 = vsel %vm1524, %v1440, 0
      %1607 = vmatprep.subr.mxu0 0.0
      %1608 = vmatpush1.xpose.msra.mxu0 0.0
      %1609 = vmatprep.subr.mxu0 0.0
      %1610 = vmatpush1.xpose.msra.mxu0 0.0
      %1611 = vmatprep.subr.mxu0 0.0
      %1612 = vmatpush1.xpose.msra.mxu0 0.0
      %1613 = vmatprep.subr.mxu0 0.0
      %1614 = vmatpush1.xpose.msra.mxu0 0.0
      %1615 = vmatprep.subr.mxu0 0.0
      %1616 = vmatpush1.xpose.msra.mxu0 0.0
      %1617 = vmatprep.subr.mxu0 0.0
      %1618 = vmatpush1.xpose.msra.mxu0 0.0
      %1619 = vmatprep.subr.mxu0 0.0
      %1620 = vmatpush1.xpose.msra.mxu0 0.0
      %1621 = vmatprep.subr.mxu0 0.0
      %1622 = vmatpush1.xpose.msra.mxu0 0.0
      %1623 = vmatprep.subr.mxu0 0.0
      %1624 = vmatpush1.xpose.msra.mxu0 0.0
      %1625 = vmatprep.subr.mxu0 0.0
      %1626 = vmatpush1.xpose.msra.mxu0 0.0
      %1627 = vmatprep.subr.mxu0 0.0
      %1628 = vmatpush1.xpose.msra.mxu0 0.0
      %1629 = vmatprep.subr.mxu0 0.0
      %1630 = vmatpush1.xpose.msra.mxu0 0.0
      %1631 = vmatprep.subr.mxu0 0.0
      %1632 = vmatpush1.xpose.msra.mxu0 0.0
      %1633 = vmatprep.subr.mxu0 0.0
      %1634 = vmatpush1.xpose.msra.mxu0 0.0
      %1635 = vmatprep.subr.mxu0 0.0
      %1636 = vmatpush1.xpose.msra.mxu0 0.0
      %1637 = vmatprep.subr.mxu0 0.0
      %1638 = vmatpush1.xpose.msra.mxu0 %v1605
      %1639 = vmatprep.subr.mxu0 0.0
      %1640 = vmatpush2.xpose.msra.mxu0 0.0
      %1641 = vmatprep.subr.mxu0 0.0
      %1642 = vmatpush2.xpose.msra.mxu0 0.0
      %1643 = vmatprep.subr.mxu0 0.0
      %1644 = vmatpush2.xpose.msra.mxu0 0.0
      %1645 = vmatprep.subr.mxu0 0.0
      %1646 = vmatpush2.xpose.msra.mxu0 0.0
      %1647 = vmatprep.subr.mxu0 0.0
      %1648 = vmatpush2.xpose.msra.mxu0 0.0
      %1649 = vmatprep.subr.mxu0 0.0
      %1650 = vmatpush2.xpose.msra.mxu0 0.0
      %1651 = vmatprep.subr.mxu0 0.0
      %1652 = vmatpush2.xpose.msra.mxu0 0.0
      %1653 = vmatprep.subr.mxu0 0.0
      %1654 = vmatpush2.xpose.msra.mxu0 0.0
      %1655 = vmatprep.subr.mxu0 0.0
      %1656 = vmatpush2.xpose.msra.mxu0 0.0
      %1657 = vmatprep.subr.mxu0 0.0
      %1658 = vmatpush2.xpose.msra.mxu0 0.0
      %1659 = vmatprep.subr.mxu0 0.0
      %1660 = vmatpush2.xpose.msra.mxu0 0.0
      %1661 = vmatprep.subr.mxu0 0.0
      %1662 = vmatpush2.xpose.msra.mxu0 0.0
      %1663 = vmatprep.subr.mxu0 0.0
      %1664 = vmatpush2.xpose.msra.mxu0 0.0
      %1665 = vmatprep.subr.mxu0 0.0
      %1666 = vmatpush2.xpose.msra.mxu0 0.0
      %1667 = vmatprep.subr.mxu0 0.0
      %1668 = vmatpush2.xpose.msra.mxu0 0.0
      %1669 = vmatprep.subr.mxu0 0.0
      %1670 = vmatpush2.xpose.msra.mxu0 0.0
      %1671 = vmatprep.mubr.f32.mxu0 0.0
      %1672 = vmatmul.mubr.f32.gmra.mxu0 %v1602
      %v1673 = vpop.f32.mrf.mxu0
      %v1674 = vadd.f32 0.0, %v1673
      %v1675 = vpop.f32.mrf.mxu0
      %1676 = vdwg.mxu0
      %v1677 = vmul.f32 %v1598, 0.17677669
      %v1678 = vmul.f32 %v1674, 0.17677669
      %vm1679 = vcmask 64512
      %v1680 = vsel %vm1679, %v1677, -inf
      %1681 = vmax.xlane.f32.xlu0 %v1680
      %v1682 = vpop.xlane.xlu0 %1681
      %v1683 = vsel %vm1679, %v1678, -inf
      %1684 = vmax.xlane.f32.xlu0 %v1683
      %v1685 = vpop.xlane.xlu0 %1684
      %v1686 = vsub.f32 %v1677, %v1682
      %v1687 = vsub.f32 %v1678, %v1685
      %v1688 = vmul.f32 %v1686, 1.442695
      %v1689 = vpow.pop %v1688
      %v1690 = vmul.f32 %v1687, 1.442695
      %v1691 = vpow.pop %v1690
      %v1692 = vsel %vm1679, %v1689, 0.0
      %1693 = vadd.xlane.f32.xlu0 %v1692
      %v1694 = vpop.xlane.xlu0 %1693
      %v1695 = vsel %vm1679, %v1691, 0.0
      %1696 = vadd.xlane.f32.xlu0 %v1695
      %v1697 = vpop.xlane.xlu0 %1696
      %v1698 = vrcp.pop %v1694
      %v1699 = vrcp.pop %v1697
      %v1700 = vmul.f32 %v1689, %v1698
      %v1701 = vmul.f32 %v1691, %v1699
      %v1703 = vsel %vm1679, %v1700, 0
      %1705 = vmatprep.subr.mxu0 0.0
      %1706 = vmatpush1.msra.mxu0 0.0
      %1707 = vmatprep.subr.mxu0 0.0
      %1708 = vmatpush1.msra.mxu0 0.0
      %1709 = vmatprep.subr.mxu0 0.0
      %1710 = vmatpush1.msra.mxu0 0.0
      %1711 = vmatprep.subr.mxu0 0.0
      %1712 = vmatpush1.msra.mxu0 0.0
      %1713 = vmatprep.subr.mxu0 0.0
      %1714 = vmatpush1.msra.mxu0 0.0
      %1715 = vmatprep.subr.mxu0 0.0
      %1716 = vmatpush1.msra.mxu0 0.0
      %1717 = vmatprep.subr.mxu0 0.0
      %1718 = vmatpush1.msra.mxu0 0.0
      %1719 = vmatprep.subr.mxu0 0.0
      %1720 = vmatpush1.msra.mxu0 0.0
      %1721 = vmatprep.subr.mxu0 0.0
      %1722 = vmatpush1.msra.mxu0 0.0
      %1723 = vmatprep.subr.mxu0 0.0
      %1724 = vmatpush1.msra.mxu0 0.0
      %1725 = vmatprep.subr.mxu0 0.0
      %1726 = vmatpush1.msra.mxu0 0.0
      %1727 = vmatprep.subr.mxu0 0.0
      %1728 = vmatpush1.msra.mxu0 0.0
      %1729 = vmatprep.subr.mxu0 0.0
      %1730 = vmatpush1.msra.mxu0 0.0
      %1731 = vmatprep.subr.mxu0 0.0
      %1732 = vmatpush1.msra.mxu0 0.0
      %1733 = vmatprep.subr.mxu0 0.0
      %1734 = vmatpush1.msra.mxu0 0.0
      %1735 = vmatprep.subr.mxu0 0.0
      %1736 = vmatpush1.msra.mxu0 %v1516
      %1737 = vmatprep.subr.mxu0 0.0
      %1738 = vmatpush2.msra.mxu0 0.0
      %1739 = vmatprep.subr.mxu0 0.0
      %1740 = vmatpush2.msra.mxu0 0.0
      %1741 = vmatprep.subr.mxu0 0.0
      %1742 = vmatpush2.msra.mxu0 0.0
      %1743 = vmatprep.subr.mxu0 0.0
      %1744 = vmatpush2.msra.mxu0 0.0
      %1745 = vmatprep.subr.mxu0 0.0
      %1746 = vmatpush2.msra.mxu0 0.0
      %1747 = vmatprep.subr.mxu0 0.0
      %1748 = vmatpush2.msra.mxu0 0.0
      %1749 = vmatprep.subr.mxu0 0.0
      %1750 = vmatpush2.msra.mxu0 0.0
      %1751 = vmatprep.subr.mxu0 0.0
      %1752 = vmatpush2.msra.mxu0 0.0
      %1753 = vmatprep.subr.mxu0 0.0
      %1754 = vmatpush2.msra.mxu0 0.0
      %1755 = vmatprep.subr.mxu0 0.0
      %1756 = vmatpush2.msra.mxu0 0.0
      %1757 = vmatprep.subr.mxu0 0.0
      %1758 = vmatpush2.msra.mxu0 0.0
      %1759 = vmatprep.subr.mxu0 0.0
      %1760 = vmatpush2.msra.mxu0 0.0
      %1761 = vmatprep.subr.mxu0 0.0
      %1762 = vmatpush2.msra.mxu0 0.0
      %1763 = vmatprep.subr.mxu0 0.0
      %1764 = vmatpush2.msra.mxu0 0.0
      %1765 = vmatprep.subr.mxu0 0.0
      %1766 = vmatpush2.msra.mxu0 0.0
      %1767 = vmatprep.subr.mxu0 0.0
      %1768 = vmatpush2.msra.mxu0 0.0
      %1769 = vmatprep.mubr.f32.mxu0 0.0
      %1770 = vmatmul.mubr.f32.gmra.mxu0 %v1703
      %v1771 = vpop.f32.mrf.mxu0
      %v1772 = vadd.f32 0.0, %v1771
      %v1773 = vpop.f32.mrf.mxu0
      %1774 = vdwg.mxu0
      %v1776 = vsel %vm1679, %v1701, 0
      %1778 = vmatprep.subr.mxu0 0.0
      %1779 = vmatpush1.msra.mxu0 0.0
      %1780 = vmatprep.subr.mxu0 0.0
      %1781 = vmatpush1.msra.mxu0 0.0
      %1782 = vmatprep.subr.mxu0 0.0
      %1783 = vmatpush1.msra.mxu0 0.0
      %1784 = vmatprep.subr.mxu0 0.0
      %1785 = vmatpush1.msra.mxu0 0.0
      %1786 = vmatprep.subr.mxu0 0.0
      %1787 = vmatpush1.msra.mxu0 0.0
      %1788 = vmatprep.subr.mxu0 0.0
      %1789 = vmatpush1.msra.mxu0 0.0
      %1790 = vmatprep.subr.mxu0 0.0
      %1791 = vmatpush1.msra.mxu0 0.0
      %1792 = vmatprep.subr.mxu0 0.0
      %1793 = vmatpush1.msra.mxu0 0.0
      %1794 = vmatprep.subr.mxu0 0.0
      %1795 = vmatpush1.msra.mxu0 0.0
      %1796 = vmatprep.subr.mxu0 0.0
      %1797 = vmatpush1.msra.mxu0 0.0
      %1798 = vmatprep.subr.mxu0 0.0
      %1799 = vmatpush1.msra.mxu0 0.0
      %1800 = vmatprep.subr.mxu0 0.0
      %1801 = vmatpush1.msra.mxu0 0.0
      %1802 = vmatprep.subr.mxu0 0.0
      %1803 = vmatpush1.msra.mxu0 0.0
      %1804 = vmatprep.subr.mxu0 0.0
      %1805 = vmatpush1.msra.mxu0 0.0
      %1806 = vmatprep.subr.mxu0 0.0
      %1807 = vmatpush1.msra.mxu0 0.0
      %1808 = vmatprep.subr.mxu0 0.0
      %1809 = vmatpush1.msra.mxu0 %v1521
      %1810 = vmatprep.subr.mxu0 0.0
      %1811 = vmatpush2.msra.mxu0 0.0
      %1812 = vmatprep.subr.mxu0 0.0
      %1813 = vmatpush2.msra.mxu0 0.0
      %1814 = vmatprep.subr.mxu0 0.0
      %1815 = vmatpush2.msra.mxu0 0.0
      %1816 = vmatprep.subr.mxu0 0.0
      %1817 = vmatpush2.msra.mxu0 0.0
      %1818 = vmatprep.subr.mxu0 0.0
      %1819 = vmatpush2.msra.mxu0 0.0
      %1820 = vmatprep.subr.mxu0 0.0
      %1821 = vmatpush2.msra.mxu0 0.0
      %1822 = vmatprep.subr.mxu0 0.0
      %1823 = vmatpush2.msra.mxu0 0.0
      %1824 = vmatprep.subr.mxu0 0.0
      %1825 = vmatpush2.msra.mxu0 0.0
      %1826 = vmatprep.subr.mxu0 0.0
      %1827 = vmatpush2.msra.mxu0 0.0
      %1828 = vmatprep.subr.mxu0 0.0
      %1829 = vmatpush2.msra.mxu0 0.0
      %1830 = vmatprep.subr.mxu0 0.0
      %1831 = vmatpush2.msra.mxu0 0.0
      %1832 = vmatprep.subr.mxu0 0.0
      %1833 = vmatpush2.msra.mxu0 0.0
      %1834 = vmatprep.subr.mxu0 0.0
      %1835 = vmatpush2.msra.mxu0 0.0
      %1836 = vmatprep.subr.mxu0 0.0
      %1837 = vmatpush2.msra.mxu0 0.0
      %1838 = vmatprep.subr.mxu0 0.0
      %1839 = vmatpush2.msra.mxu0 0.0
      %1840 = vmatprep.subr.mxu0 0.0
      %1841 = vmatpush2.msra.mxu0 0.0
      %1842 = vmatprep.mubr.f32.mxu0 0.0
      %1843 = vmatmul.mubr.f32.gmra.mxu0 %v1776
      %v1844 = vpop.f32.mrf.mxu0
      %v1845 = vadd.f32 0.0, %v1844
      %v1846 = vpop.f32.mrf.mxu0
      %1847 = vdwg.mxu0
      %v1849 = vlaneseq
      %v1850 = vshrl.u32 %v1849, 7
      %v1851 = vsub.s32 0, %v1850
      %v1852 = vrot.slane %v1126, %v1851
      %1854 = vmatprep.subr.mxu0 0.0
      %1855 = vmatpush1.msra.mxu0 %v1092
      %1856 = vmatprep.subr.mxu0 0.0
      %1857 = vmatpush1.msra.mxu0 %v1091
      %1858 = vmatprep.subr.mxu0 0.0
      %1859 = vmatpush1.msra.mxu0 %v1090
      %1860 = vmatprep.subr.mxu0 0.0
      %1861 = vmatpush1.msra.mxu0 %v1089
      %1862 = vmatprep.subr.mxu0 0.0
      %1863 = vmatpush1.msra.mxu0 %v1088
      %1864 = vmatprep.subr.mxu0 0.0
      %1865 = vmatpush1.msra.mxu0 %v1087
      %1866 = vmatprep.subr.mxu0 0.0
      %1867 = vmatpush1.msra.mxu0 %v1086
      %1868 = vmatprep.subr.mxu0 0.0
      %1869 = vmatpush1.msra.mxu0 %v1085
      %1870 = vmatprep.subr.mxu0 0.0
      %1871 = vmatpush1.msra.mxu0 %v1084
      %1872 = vmatprep.subr.mxu0 0.0
      %1873 = vmatpush1.msra.mxu0 %v1083
      %1874 = vmatprep.subr.mxu0 0.0
      %1875 = vmatpush1.msra.mxu0 %v1082
      %1876 = vmatprep.subr.mxu0 0.0
      %1877 = vmatpush1.msra.mxu0 %v1081
      %1878 = vmatprep.subr.mxu0 0.0
      %1879 = vmatpush1.msra.mxu0 %v1080
      %1880 = vmatprep.subr.mxu0 0.0
      %1881 = vmatpush1.msra.mxu0 %v1079
      %1882 = vmatprep.subr.mxu0 0.0
      %1883 = vmatpush1.msra.mxu0 %v1078
      %1884 = vmatprep.subr.mxu0 0.0
      %1885 = vmatpush1.msra.mxu0 %v1077
      %1886 = vmatprep.subr.mxu0 0.0
      %1887 = vmatpush2.msra.mxu0 0.0
      %1888 = vmatprep.subr.mxu0 0.0
      %1889 = vmatpush2.msra.mxu0 0.0
      %1890 = vmatprep.subr.mxu0 0.0
      %1891 = vmatpush2.msra.mxu0 0.0
      %1892 = vmatprep.subr.mxu0 0.0
      %1893 = vmatpush2.msra.mxu0 0.0
      %1894 = vmatprep.subr.mxu0 0.0
      %1895 = vmatpush2.msra.mxu0 0.0
      %1896 = vmatprep.subr.mxu0 0.0
      %1897 = vmatpush2.msra.mxu0 0.0
      %1898 = vmatprep.subr.mxu0 0.0
      %1899 = vmatpush2.msra.mxu0 0.0
      %1900 = vmatprep.subr.mxu0 0.0
      %1901 = vmatpush2.msra.mxu0 0.0
      %1902 = vmatprep.subr.mxu0 0.0
      %1903 = vmatpush2.msra.mxu0 0.0
      %1904 = vmatprep.subr.mxu0 0.0
      %1905 = vmatpush2.msra.mxu0 0.0
      %1906 = vmatprep.subr.mxu0 0.0
      %1907 = vmatpush2.msra.mxu0 0.0
      %1908 = vmatprep.subr.mxu0 0.0
      %1909 = vmatpush2.msra.mxu0 0.0
      %1910 = vmatprep.subr.mxu0 0.0
      %1911 = vmatpush2.msra.mxu0 0.0
      %1912 = vmatprep.subr.mxu0 0.0
      %1913 = vmatpush2.msra.mxu0 0.0
      %1914 = vmatprep.subr.mxu0 0.0
      %1915 = vmatpush2.msra.mxu0 0.0
      %1916 = vmatprep.subr.mxu0 0.0
      %1917 = vmatpush2.msra.mxu0 0.0
      %1918 = vmatprep.mubr.f32.mxu0 0.0
      %1919 = vmatmul.mubr.f32.gmra.mxu0 %v1059
      %v1920 = vpop.f32.mrf.mxu0
      %v1921 = vadd.f32 %v1852, %v1920
      %v1922 = vpop.f32.mrf.mxu0
      %1923 = vmatprep.mubr.f32.mxu0 0.0
      %1924 = vmatmul.mubr.f32.gmra.mxu0 %v1060
      %v1925 = vpop.f32.mrf.mxu0
      %v1926 = vadd.f32 %v1852, %v1925
      %v1927 = vpop.f32.mrf.mxu0
      %1928 = vdwg.mxu0
      %v1930 = vlaneseq
      %v1931 = vshrl.u32 %v1930, 7
      %v1932 = vsub.s32 0, %v1931
      %v1933 = vrot.slane %v1194, %v1932
      %1935 = vmatprep.subr.mxu0 0.0
      %1936 = vmatpush1.msra.mxu0 %v1160
      %1937 = vmatprep.subr.mxu0 0.0
      %1938 = vmatpush1.msra.mxu0 %v1159
      %1939 = vmatprep.subr.mxu0 0.0
      %1940 = vmatpush1.msra.mxu0 %v1158
      %1941 = vmatprep.subr.mxu0 0.0
      %1942 = vmatpush1.msra.mxu0 %v1157
      %1943 = vmatprep.subr.mxu0 0.0
      %1944 = vmatpush1.msra.mxu0 %v1156
      %1945 = vmatprep.subr.mxu0 0.0
      %1946 = vmatpush1.msra.mxu0 %v1155
      %1947 = vmatprep.subr.mxu0 0.0
      %1948 = vmatpush1.msra.mxu0 %v1154
      %1949 = vmatprep.subr.mxu0 0.0
      %1950 = vmatpush1.msra.mxu0 %v1153
      %1951 = vmatprep.subr.mxu0 0.0
      %1952 = vmatpush1.msra.mxu0 %v1152
      %1953 = vmatprep.subr.mxu0 0.0
      %1954 = vmatpush1.msra.mxu0 %v1151
      %1955 = vmatprep.subr.mxu0 0.0
      %1956 = vmatpush1.msra.mxu0 %v1150
      %1957 = vmatprep.subr.mxu0 0.0
      %1958 = vmatpush1.msra.mxu0 %v1149
      %1959 = vmatprep.subr.mxu0 0.0
      %1960 = vmatpush1.msra.mxu0 %v1148
      %1961 = vmatprep.subr.mxu0 0.0
      %1962 = vmatpush1.msra.mxu0 %v1147
      %1963 = vmatprep.subr.mxu0 0.0
      %1964 = vmatpush1.msra.mxu0 %v1146
      %1965 = vmatprep.subr.mxu0 0.0
      %1966 = vmatpush1.msra.mxu0 %v1145
      %1967 = vmatprep.subr.mxu0 0.0
      %1968 = vmatpush2.msra.mxu0 0.0
      %1969 = vmatprep.subr.mxu0 0.0
      %1970 = vmatpush2.msra.mxu0 0.0
      %1971 = vmatprep.subr.mxu0 0.0
      %1972 = vmatpush2.msra.mxu0 0.0
      %1973 = vmatprep.subr.mxu0 0.0
      %1974 = vmatpush2.msra.mxu0 0.0
      %1975 = vmatprep.subr.mxu0 0.0
      %1976 = vmatpush2.msra.mxu0 0.0
      %1977 = vmatprep.subr.mxu0 0.0
      %1978 = vmatpush2.msra.mxu0 0.0
      %1979 = vmatprep.subr.mxu0 0.0
      %1980 = vmatpush2.msra.mxu0 0.0
      %1981 = vmatprep.subr.mxu0 0.0
      %1982 = vmatpush2.msra.mxu0 0.0
      %1983 = vmatprep.subr.mxu0 0.0
      %1984 = vmatpush2.msra.mxu0 0.0
      %1985 = vmatprep.subr.mxu0 0.0
      %1986 = vmatpush2.msra.mxu0 0.0
      %1987 = vmatprep.subr.mxu0 0.0
      %1988 = vmatpush2.msra.mxu0 0.0
      %1989 = vmatprep.subr.mxu0 0.0
      %1990 = vmatpush2.msra.mxu0 0.0
      %1991 = vmatprep.subr.mxu0 0.0
      %1992 = vmatpush2.msra.mxu0 0.0
      %1993 = vmatprep.subr.mxu0 0.0
      %1994 = vmatpush2.msra.mxu0 0.0
      %1995 = vmatprep.subr.mxu0 0.0
      %1996 = vmatpush2.msra.mxu0 0.0
      %1997 = vmatprep.subr.mxu0 0.0
      %1998 = vmatpush2.msra.mxu0 0.0
      %1999 = vmatprep.mubr.f32.mxu0 0.0
      %2000 = vmatmul.mubr.f32.gmra.mxu0 %v1059
      %v2001 = vpop.f32.mrf.mxu0
      %v2002 = vadd.f32 %v1933, %v2001
      %v2003 = vpop.f32.mrf.mxu0
      %2004 = vmatprep.mubr.f32.mxu0 0.0
      %2005 = vmatmul.mubr.f32.gmra.mxu0 %v1060
      %v2006 = vpop.f32.mrf.mxu0
      %v2007 = vadd.f32 %v1933, %v2006
      %v2008 = vpop.f32.mrf.mxu0
      %2009 = vdwg.mxu0
      %v2011 = vlaneseq
      %v2012 = vshrl.u32 %v2011, 7
      %v2013 = vsub.s32 0, %v2012
      %v2014 = vrot.slane %v1262, %v2013
      %2016 = vmatprep.subr.mxu0 0.0
      %2017 = vmatpush1.msra.mxu0 %v1228
      %2018 = vmatprep.subr.mxu0 0.0
      %2019 = vmatpush1.msra.mxu0 %v1227
      %2020 = vmatprep.subr.mxu0 0.0
      %2021 = vmatpush1.msra.mxu0 %v1226
      %2022 = vmatprep.subr.mxu0 0.0
      %2023 = vmatpush1.msra.mxu0 %v1225
      %2024 = vmatprep.subr.mxu0 0.0
      %2025 = vmatpush1.msra.mxu0 %v1224
      %2026 = vmatprep.subr.mxu0 0.0
      %2027 = vmatpush1.msra.mxu0 %v1223
      %2028 = vmatprep.subr.mxu0 0.0
      %2029 = vmatpush1.msra.mxu0 %v1222
      %2030 = vmatprep.subr.mxu0 0.0
      %2031 = vmatpush1.msra.mxu0 %v1221
      %2032 = vmatprep.subr.mxu0 0.0
      %2033 = vmatpush1.msra.mxu0 %v1220
      %2034 = vmatprep.subr.mxu0 0.0
      %2035 = vmatpush1.msra.mxu0 %v1219
      %2036 = vmatprep.subr.mxu0 0.0
      %2037 = vmatpush1.msra.mxu0 %v1218
      %2038 = vmatprep.subr.mxu0 0.0
      %2039 = vmatpush1.msra.mxu0 %v1217
      %2040 = vmatprep.subr.mxu0 0.0
      %2041 = vmatpush1.msra.mxu0 %v1216
      %2042 = vmatprep.subr.mxu0 0.0
      %2043 = vmatpush1.msra.mxu0 %v1215
      %2044 = vmatprep.subr.mxu0 0.0
      %2045 = vmatpush1.msra.mxu0 %v1214
      %2046 = vmatprep.subr.mxu0 0.0
      %2047 = vmatpush1.msra.mxu0 %v1213
      %2048 = vmatprep.subr.mxu0 0.0
      %2049 = vmatpush2.msra.mxu0 0.0
      %2050 = vmatprep.subr.mxu0 0.0
      %2051 = vmatpush2.msra.mxu0 0.0
      %2052 = vmatprep.subr.mxu0 0.0
      %2053 = vmatpush2.msra.mxu0 0.0
      %2054 = vmatprep.subr.mxu0 0.0
      %2055 = vmatpush2.msra.mxu0 0.0
      %2056 = vmatprep.subr.mxu0 0.0
      %2057 = vmatpush2.msra.mxu0 0.0
      %2058 = vmatprep.subr.mxu0 0.0
      %2059 = vmatpush2.msra.mxu0 0.0
      %2060 = vmatprep.subr.mxu0 0.0
      %2061 = vmatpush2.msra.mxu0 0.0
      %2062 = vmatprep.subr.mxu0 0.0
      %2063 = vmatpush2.msra.mxu0 0.0
      %2064 = vmatprep.subr.mxu0 0.0
      %2065 = vmatpush2.msra.mxu0 0.0
      %2066 = vmatprep.subr.mxu0 0.0
      %2067 = vmatpush2.msra.mxu0 0.0
      %2068 = vmatprep.subr.mxu0 0.0
      %2069 = vmatpush2.msra.mxu0 0.0
      %2070 = vmatprep.subr.mxu0 0.0
      %2071 = vmatpush2.msra.mxu0 0.0
      %2072 = vmatprep.subr.mxu0 0.0
      %2073 = vmatpush2.msra.mxu0 0.0
      %2074 = vmatprep.subr.mxu0 0.0
      %2075 = vmatpush2.msra.mxu0 0.0
      %2076 = vmatprep.subr.mxu0 0.0
      %2077 = vmatpush2.msra.mxu0 0.0
      %2078 = vmatprep.subr.mxu0 0.0
      %2079 = vmatpush2.msra.mxu0 0.0
      %2080 = vmatprep.mubr.f32.mxu0 0.0
      %2081 = vmatmul.mubr.f32.gmra.mxu0 %v1059
      %v2082 = vpop.f32.mrf.mxu0
      %v2083 = vadd.f32 %v2014, %v2082
      %v2084 = vpop.f32.mrf.mxu0
      %2085 = vmatprep.mubr.f32.mxu0 0.0
      %2086 = vmatmul.mubr.f32.gmra.mxu0 %v1060
      %v2087 = vpop.f32.mrf.mxu0
      %v2088 = vadd.f32 %v2014, %v2087
      %v2089 = vpop.f32.mrf.mxu0
      %2090 = vdwg.mxu0
      %v2092 = vsel %vm1524, %v1921, 0
      %v2095 = vsel %vm1524, %v2002, 0
      %2097 = vmatprep.subr.mxu0 0.0
      %2098 = vmatpush1.xpose.msra.mxu0 0.0
      %2099 = vmatprep.subr.mxu0 0.0
      %2100 = vmatpush1.xpose.msra.mxu0 0.0
      %2101 = vmatprep.subr.mxu0 0.0
      %2102 = vmatpush1.xpose.msra.mxu0 0.0
      %2103 = vmatprep.subr.mxu0 0.0
      %2104 = vmatpush1.xpose.msra.mxu0 0.0
      %2105 = vmatprep.subr.mxu0 0.0
      %2106 = vmatpush1.xpose.msra.mxu0 0.0
      %2107 = vmatprep.subr.mxu0 0.0
      %2108 = vmatpush1.xpose.msra.mxu0 0.0
      %2109 = vmatprep.subr.mxu0 0.0
      %2110 = vmatpush1.xpose.msra.mxu0 0.0
      %2111 = vmatprep.subr.mxu0 0.0
      %2112 = vmatpush1.xpose.msra.mxu0 0.0
      %2113 = vmatprep.subr.mxu0 0.0
      %2114 = vmatpush1.xpose.msra.mxu0 0.0
      %2115 = vmatprep.subr.mxu0 0.0
      %2116 = vmatpush1.xpose.msra.mxu0 0.0
      %2117 = vmatprep.subr.mxu0 0.0
      %2118 = vmatpush1.xpose.msra.mxu0 0.0
      %2119 = vmatprep.subr.mxu0 0.0
      %2120 = vmatpush1.xpose.msra.mxu0 0.0
      %2121 = vmatprep.subr.mxu0 0.0
      %2122 = vmatpush1.xpose.msra.mxu0 0.0
      %2123 = vmatprep.subr.mxu0 0.0
      %2124 = vmatpush1.xpose.msra.mxu0 0.0
      %2125 = vmatprep.subr.mxu0 0.0
      %2126 = vmatpush1.xpose.msra.mxu0 0.0
      %2127 = vmatprep.subr.mxu0 0.0
      %2128 = vmatpush1.xpose.msra.mxu0 %v2095
      %2129 = vmatprep.subr.mxu0 0.0
      %2130 = vmatpush2.xpose.msra.mxu0 0.0
      %2131 = vmatprep.subr.mxu0 0.0
      %2132 = vmatpush2.xpose.msra.mxu0 0.0
      %2133 = vmatprep.subr.mxu0 0.0
      %2134 = vmatpush2.xpose.msra.mxu0 0.0
      %2135 = vmatprep.subr.mxu0 0.0
      %2136 = vmatpush2.xpose.msra.mxu0 0.0
      %2137 = vmatprep.subr.mxu0 0.0
      %2138 = vmatpush2.xpose.msra.mxu0 0.0
      %2139 = vmatprep.subr.mxu0 0.0
      %2140 = vmatpush2.xpose.msra.mxu0 0.0
      %2141 = vmatprep.subr.mxu0 0.0
      %2142 = vmatpush2.xpose.msra.mxu0 0.0
      %2143 = vmatprep.subr.mxu0 0.0
      %2144 = vmatpush2.xpose.msra.mxu0 0.0
      %2145 = vmatprep.subr.mxu0 0.0
      %2146 = vmatpush2.xpose.msra.mxu0 0.0
      %2147 = vmatprep.subr.mxu0 0.0
      %2148 = vmatpush2.xpose.msra.mxu0 0.0
      %2149 = vmatprep.subr.mxu0 0.0
      %2150 = vmatpush2.xpose.msra.mxu0 0.0
      %2151 = vmatprep.subr.mxu0 0.0
      %2152 = vmatpush2.xpose.msra.mxu0 0.0
      %2153 = vmatprep.subr.mxu0 0.0
      %2154 = vmatpush2.xpose.msra.mxu0 0.0
      %2155 = vmatprep.subr.mxu0 0.0
      %2156 = vmatpush2.xpose.msra.mxu0 0.0
      %2157 = vmatprep.subr.mxu0 0.0
      %2158 = vmatpush2.xpose.msra.mxu0 0.0
      %2159 = vmatprep.subr.mxu0 0.0
      %2160 = vmatpush2.xpose.msra.mxu0 0.0
      %2161 = vmatprep.mubr.f32.mxu0 0.0
      %2162 = vmatmul.mubr.f32.gmra.mxu0 %v2092
      %v2163 = vpop.f32.mrf.mxu0
      %v2164 = vadd.f32 0.0, %v2163
      %v2165 = vpop.f32.mrf.mxu0
      %2166 = vdwg.mxu0
      %v2168 = vsel %vm1524, %v1926, 0
      %v2171 = vsel %vm1524, %v2007, 0
      %2173 = vmatprep.subr.mxu0 0.0
      %2174 = vmatpush1.xpose.msra.mxu0 0.0
      %2175 = vmatprep.subr.mxu0 0.0
      %2176 = vmatpush1.xpose.msra.mxu0 0.0
      %2177 = vmatprep.subr.mxu0 0.0
      %2178 = vmatpush1.xpose.msra.mxu0 0.0
      %2179 = vmatprep.subr.mxu0 0.0
      %2180 = vmatpush1.xpose.msra.mxu0 0.0
      %2181 = vmatprep.subr.mxu0 0.0
      %2182 = vmatpush1.xpose.msra.mxu0 0.0
      %2183 = vmatprep.subr.mxu0 0.0
      %2184 = vmatpush1.xpose.msra.mxu0 0.0
      %2185 = vmatprep.subr.mxu0 0.0
      %2186 = vmatpush1.xpose.msra.mxu0 0.0
      %2187 = vmatprep.subr.mxu0 0.0
      %2188 = vmatpush1.xpose.msra.mxu0 0.0
      %2189 = vmatprep.subr.mxu0 0.0
      %2190 = vmatpush1.xpose.msra.mxu0 0.0
      %2191 = vmatprep.subr.mxu0 0.0
      %2192 = vmatpush1.xpose.msra.mxu0 0.0
      %2193 = vmatprep.subr.mxu0 0.0
      %2194 = vmatpush1.xpose.msra.mxu0 0.0
      %2195 = vmatprep.subr.mxu0 0.0
      %2196 = vmatpush1.xpose.msra.mxu0 0.0
      %2197 = vmatprep.subr.mxu0 0.0
      %2198 = vmatpush1.xpose.msra.mxu0 0.0
      %2199 = vmatprep.subr.mxu0 0.0
      %2200 = vmatpush1.xpose.msra.mxu0 0.0
      %2201 = vmatprep.subr.mxu0 0.0
      %2202 = vmatpush1.xpose.msra.mxu0 0.0
      %2203 = vmatprep.subr.mxu0 0.0
      %2204 = vmatpush1.xpose.msra.mxu0 %v2171
      %2205 = vmatprep.subr.mxu0 0.0
      %2206 = vmatpush2.xpose.msra.mxu0 0.0
      %2207 = vmatprep.subr.mxu0 0.0
      %2208 = vmatpush2.xpose.msra.mxu0 0.0
      %2209 = vmatprep.subr.mxu0 0.0
      %2210 = vmatpush2.xpose.msra.mxu0 0.0
      %2211 = vmatprep.subr.mxu0 0.0
      %2212 = vmatpush2.xpose.msra.mxu0 0.0
      %2213 = vmatprep.subr.mxu0 0.0
      %2214 = vmatpush2.xpose.msra.mxu0 0.0
      %2215 = vmatprep.subr.mxu0 0.0
      %2216 = vmatpush2.xpose.msra.mxu0 0.0
      %2217 = vmatprep.subr.mxu0 0.0
      %2218 = vmatpush2.xpose.msra.mxu0 0.0
      %2219 = vmatprep.subr.mxu0 0.0
      %2220 = vmatpush2.xpose.msra.mxu0 0.0
      %2221 = vmatprep.subr.mxu0 0.0
      %2222 = vmatpush2.xpose.msra.mxu0 0.0
      %2223 = vmatprep.subr.mxu0 0.0
      %2224 = vmatpush2.xpose.msra.mxu0 0.0
      %2225 = vmatprep.subr.mxu0 0.0
      %2226 = vmatpush2.xpose.msra.mxu0 0.0
      %2227 = vmatprep.subr.mxu0 0.0
      %2228 = vmatpush2.xpose.msra.mxu0 0.0
      %2229 = vmatprep.subr.mxu0 0.0
      %2230 = vmatpush2.xpose.msra.mxu0 0.0
      %2231 = vmatprep.subr.mxu0 0.0
      %2232 = vmatpush2.xpose.msra.mxu0 0.0
      %2233 = vmatprep.subr.mxu0 0.0
      %2234 = vmatpush2.xpose.msra.mxu0 0.0
      %2235 = vmatprep.subr.mxu0 0.0
      %2236 = vmatpush2.xpose.msra.mxu0 0.0
      %2237 = vmatprep.mubr.f32.mxu0 0.0
      %2238 = vmatmul.mubr.f32.gmra.mxu0 %v2168
      %v2239 = vpop.f32.mrf.mxu0
      %v2240 = vadd.f32 0.0, %v2239
      %v2241 = vpop.f32.mrf.mxu0
      %2242 = vdwg.mxu0
      %v2243 = vmul.f32 %v2164, 0.17677669
      %v2244 = vmul.f32 %v2240, 0.17677669
      %v2245 = vsel %vm1679, %v2243, -inf
      %2246 = vmax.xlane.f32.xlu0 %v2245
      %v2247 = vpop.xlane.xlu0 %2246
      %v2248 = vsel %vm1679, %v2244, -inf
      %2249 = vmax.xlane.f32.xlu0 %v2248
      %v2250 = vpop.xlane.xlu0 %2249
      %v2251 = vsub.f32 %v2243, %v2247
      %v2252 = vsub.f32 %v2244, %v2250
      %v2253 = vmul.f32 %v2251, 1.442695
      %v2254 = vpow.pop %v2253
      %v2255 = vmul.f32 %v2252, 1.442695
      %v2256 = vpow.pop %v2255
      %v2257 = vsel %vm1679, %v2254, 0.0
      %2258 = vadd.xlane.f32.xlu0 %v2257
      %v2259 = vpop.xlane.xlu0 %2258
      %v2260 = vsel %vm1679, %v2256, 0.0
      %2261 = vadd.xlane.f32.xlu0 %v2260
      %v2262 = vpop.xlane.xlu0 %2261
      %v2263 = vrcp.pop %v2259
      %v2264 = vrcp.pop %v2262
      %v2265 = vmul.f32 %v2254, %v2263
      %v2266 = vmul.f32 %v2256, %v2264
      %v2268 = vsel %vm1679, %v2265, 0
      %2270 = vmatprep.subr.mxu0 0.0
      %2271 = vmatpush1.msra.mxu0 0.0
      %2272 = vmatprep.subr.mxu0 0.0
      %2273 = vmatpush1.msra.mxu0 0.0
      %2274 = vmatprep.subr.mxu0 0.0
      %2275 = vmatpush1.msra.mxu0 0.0
      %2276 = vmatprep.subr.mxu0 0.0
      %2277 = vmatpush1.msra.mxu0 0.0
      %2278 = vmatprep.subr.mxu0 0.0
      %2279 = vmatpush1.msra.mxu0 0.0
      %2280 = vmatprep.subr.mxu0 0.0
      %2281 = vmatpush1.msra.mxu0 0.0
      %2282 = vmatprep.subr.mxu0 0.0
      %2283 = vmatpush1.msra.mxu0 0.0
      %2284 = vmatprep.subr.mxu0 0.0
      %2285 = vmatpush1.msra.mxu0 0.0
      %2286 = vmatprep.subr.mxu0 0.0
      %2287 = vmatpush1.msra.mxu0 0.0
      %2288 = vmatprep.subr.mxu0 0.0
      %2289 = vmatpush1.msra.mxu0 0.0
      %2290 = vmatprep.subr.mxu0 0.0
      %2291 = vmatpush1.msra.mxu0 0.0
      %2292 = vmatprep.subr.mxu0 0.0
      %2293 = vmatpush1.msra.mxu0 0.0
      %2294 = vmatprep.subr.mxu0 0.0
      %2295 = vmatpush1.msra.mxu0 0.0
      %2296 = vmatprep.subr.mxu0 0.0
      %2297 = vmatpush1.msra.mxu0 0.0
      %2298 = vmatprep.subr.mxu0 0.0
      %2299 = vmatpush1.msra.mxu0 0.0
      %2300 = vmatprep.subr.mxu0 0.0
      %2301 = vmatpush1.msra.mxu0 %v2083
      %2302 = vmatprep.subr.mxu0 0.0
      %2303 = vmatpush2.msra.mxu0 0.0
      %2304 = vmatprep.subr.mxu0 0.0
      %2305 = vmatpush2.msra.mxu0 0.0
      %2306 = vmatprep.subr.mxu0 0.0
      %2307 = vmatpush2.msra.mxu0 0.0
      %2308 = vmatprep.subr.mxu0 0.0
      %2309 = vmatpush2.msra.mxu0 0.0
      %2310 = vmatprep.subr.mxu0 0.0
      %2311 = vmatpush2.msra.mxu0 0.0
      %2312 = vmatprep.subr.mxu0 0.0
      %2313 = vmatpush2.msra.mxu0 0.0
      %2314 = vmatprep.subr.mxu0 0.0
      %2315 = vmatpush2.msra.mxu0 0.0
      %2316 = vmatprep.subr.mxu0 0.0
      %2317 = vmatpush2.msra.mxu0 0.0
      %2318 = vmatprep.subr.mxu0 0.0
      %2319 = vmatpush2.msra.mxu0 0.0
      %2320 = vmatprep.subr.mxu0 0.0
      %2321 = vmatpush2.msra.mxu0 0.0
      %2322 = vmatprep.subr.mxu0 0.0
      %2323 = vmatpush2.msra.mxu0 0.0
      %2324 = vmatprep.subr.mxu0 0.0
      %2325 = vmatpush2.msra.mxu0 0.0
      %2326 = vmatprep.subr.mxu0 0.0
      %2327 = vmatpush2.msra.mxu0 0.0
      %2328 = vmatprep.subr.mxu0 0.0
      %2329 = vmatpush2.msra.mxu0 0.0
      %2330 = vmatprep.subr.mxu0 0.0
      %2331 = vmatpush2.msra.mxu0 0.0
      %2332 = vmatprep.subr.mxu0 0.0
      %2333 = vmatpush2.msra.mxu0 0.0
      %2334 = vmatprep.mubr.f32.mxu0 0.0
      %2335 = vmatmul.mubr.f32.gmra.mxu0 %v2268
      %v2336 = vpop.f32.mrf.mxu0
      %v2337 = vadd.f32 0.0, %v2336
      %v2338 = vpop.f32.mrf.mxu0
      %2339 = vdwg.mxu0
      %v2341 = vsel %vm1679, %v2266, 0
      %2343 = vmatprep.subr.mxu0 0.0
      %2344 = vmatpush1.msra.mxu0 0.0
      %2345 = vmatprep.subr.mxu0 0.0
      %2346 = vmatpush1.msra.mxu0 0.0
      %2347 = vmatprep.subr.mxu0 0.0
      %2348 = vmatpush1.msra.mxu0 0.0
      %2349 = vmatprep.subr.mxu0 0.0
      %2350 = vmatpush1.msra.mxu0 0.0
      %2351 = vmatprep.subr.mxu0 0.0
      %2352 = vmatpush1.msra.mxu0 0.0
      %2353 = vmatprep.subr.mxu0 0.0
      %2354 = vmatpush1.msra.mxu0 0.0
      %2355 = vmatprep.subr.mxu0 0.0
      %2356 = vmatpush1.msra.mxu0 0.0
      %2357 = vmatprep.subr.mxu0 0.0
      %2358 = vmatpush1.msra.mxu0 0.0
      %2359 = vmatprep.subr.mxu0 0.0
      %2360 = vmatpush1.msra.mxu0 0.0
      %2361 = vmatprep.subr.mxu0 0.0
      %2362 = vmatpush1.msra.mxu0 0.0
      %2363 = vmatprep.subr.mxu0 0.0
      %2364 = vmatpush1.msra.mxu0 0.0
      %2365 = vmatprep.subr.mxu0 0.0
      %2366 = vmatpush1.msra.mxu0 0.0
      %2367 = vmatprep.subr.mxu0 0.0
      %2368 = vmatpush1.msra.mxu0 0.0
      %2369 = vmatprep.subr.mxu0 0.0
      %2370 = vmatpush1.msra.mxu0 0.0
      %2371 = vmatprep.subr.mxu0 0.0
      %2372 = vmatpush1.msra.mxu0 0.0
      %2373 = vmatprep.subr.mxu0 0.0
      %2374 = vmatpush1.msra.mxu0 %v2088
      %2375 = vmatprep.subr.mxu0 0.0
      %2376 = vmatpush2.msra.mxu0 0.0
      %2377 = vmatprep.subr.mxu0 0.0
      %2378 = vmatpush2.msra.mxu0 0.0
      %2379 = vmatprep.subr.mxu0 0.0
      %2380 = vmatpush2.msra.mxu0 0.0
      %2381 = vmatprep.subr.mxu0 0.0
      %2382 = vmatpush2.msra.mxu0 0.0
      %2383 = vmatprep.subr.mxu0 0.0
      %2384 = vmatpush2.msra.mxu0 0.0
      %2385 = vmatprep.subr.mxu0 0.0
      %2386 = vmatpush2.msra.mxu0 0.0
      %2387 = vmatprep.subr.mxu0 0.0
      %2388 = vmatpush2.msra.mxu0 0.0
      %2389 = vmatprep.subr.mxu0 0.0
      %2390 = vmatpush2.msra.mxu0 0.0
      %2391 = vmatprep.subr.mxu0 0.0
      %2392 = vmatpush2.msra.mxu0 0.0
      %2393 = vmatprep.subr.mxu0 0.0
      %2394 = vmatpush2.msra.mxu0 0.0
      %2395 = vmatprep.subr.mxu0 0.0
      %2396 = vmatpush2.msra.mxu0 0.0
      %2397 = vmatprep.subr.mxu0 0.0
      %2398 = vmatpush2.msra.mxu0 0.0
      %2399 = vmatprep.subr.mxu0 0.0
      %2400 = vmatpush2.msra.mxu0 0.0
      %2401 = vmatprep.subr.mxu0 0.0
      %2402 = vmatpush2.msra.mxu0 0.0
      %2403 = vmatprep.subr.mxu0 0.0
      %2404 = vmatpush2.msra.mxu0 0.0
      %2405 = vmatprep.subr.mxu0 0.0
      %2406 = vmatpush2.msra.mxu0 0.0
      %2407 = vmatprep.mubr.f32.mxu0 0.0
      %2408 = vmatmul.mubr.f32.gmra.mxu0 %v2341
      %v2409 = vpop.f32.mrf.mxu0
      %v2410 = vadd.f32 0.0, %v2409
      %v2411 = vpop.f32.mrf.mxu0
      %2412 = vdwg.mxu0
      %v2414 = vsel %vm1524, %v2337, 0
      %v2417 = vsel %vm1524, %v2410, 0
      %2419 = vmatprep.subr.mxu0 0.0
      %2420 = vmatpush1.msra.mxu0 0.0
      %2421 = vmatprep.subr.mxu0 0.0
      %2422 = vmatpush1.msra.mxu0 0.0
      %2423 = vmatprep.subr.mxu0 0.0
      %2424 = vmatpush1.msra.mxu0 0.0
      %2425 = vmatprep.subr.mxu0 0.0
      %2426 = vmatpush1.msra.mxu0 0.0
      %2427 = vmatprep.subr.mxu0 0.0
      %2428 = vmatpush1.msra.mxu0 0.0
      %2429 = vmatprep.subr.mxu0 0.0
      %2430 = vmatpush1.msra.mxu0 0.0
      %2431 = vmatprep.subr.mxu0 0.0
      %2432 = vmatpush1.msra.mxu0 0.0
      %2433 = vmatprep.subr.mxu0 0.0
      %2434 = vmatpush1.msra.mxu0 0.0
      %2435 = vmatprep.subr.mxu0 0.0
      %2436 = vmatpush1.msra.mxu0 0.0
      %2437 = vmatprep.subr.mxu0 0.0
      %2438 = vmatpush1.msra.mxu0 0.0
      %2439 = vmatprep.subr.mxu0 0.0
      %2440 = vmatpush1.msra.mxu0 0.0
      %2441 = vmatprep.subr.mxu0 0.0
      %2442 = vmatpush1.msra.mxu0 0.0
      %2443 = vmatprep.subr.mxu0 0.0
      %2444 = vmatpush1.msra.mxu0 %v1272
      %2445 = vmatprep.subr.mxu0 0.0
      %2446 = vmatpush1.msra.mxu0 %v1271
      %2447 = vmatprep.subr.mxu0 0.0
      %2448 = vmatpush1.msra.mxu0 %v1270
      %2449 = vmatprep.subr.mxu0 0.0
      %2450 = vmatpush1.msra.mxu0 %v1269
      %2451 = vmatprep.subr.mxu0 0.0
      %2452 = vmatpush2.msra.mxu0 0.0
      %2453 = vmatprep.subr.mxu0 0.0
      %2454 = vmatpush2.msra.mxu0 0.0
      %2455 = vmatprep.subr.mxu0 0.0
      %2456 = vmatpush2.msra.mxu0 0.0
      %2457 = vmatprep.subr.mxu0 0.0
      %2458 = vmatpush2.msra.mxu0 0.0
      %2459 = vmatprep.subr.mxu0 0.0
      %2460 = vmatpush2.msra.mxu0 0.0
      %2461 = vmatprep.subr.mxu0 0.0
      %2462 = vmatpush2.msra.mxu0 0.0
      %2463 = vmatprep.subr.mxu0 0.0
      %2464 = vmatpush2.msra.mxu0 0.0
      %2465 = vmatprep.subr.mxu0 0.0
      %2466 = vmatpush2.msra.mxu0 0.0
      %2467 = vmatprep.subr.mxu0 0.0
      %2468 = vmatpush2.msra.mxu0 0.0
      %2469 = vmatprep.subr.mxu0 0.0
      %2470 = vmatpush2.msra.mxu0 0.0
      %2471 = vmatprep.subr.mxu0 0.0
      %2472 = vmatpush2.msra.mxu0 0.0
      %2473 = vmatprep.subr.mxu0 0.0
      %2474 = vmatpush2.msra.mxu0 0.0
      %2475 = vmatprep.subr.mxu0 0.0
      %2476 = vmatpush2.msra.mxu0 0.0
      %2477 = vmatprep.subr.mxu0 0.0
      %2478 = vmatpush2.msra.mxu0 0.0
      %2479 = vmatprep.subr.mxu0 0.0
      %2480 = vmatpush2.msra.mxu0 0.0
      %2481 = vmatprep.subr.mxu0 0.0
      %2482 = vmatpush2.msra.mxu0 0.0
      %2483 = vmatprep.mubr.f32.mxu0 0.0
      %2484 = vmatmul.mubr.f32.gmra.mxu0 %v2414
      %v2485 = vpop.f32.mrf.mxu0
      %v2486 = vadd.f32 0.0, %v2485
      %v2487 = vpop.f32.mrf.mxu0
      %2488 = vmatprep.mubr.f32.mxu0 0.0
      %2489 = vmatmul.mubr.f32.gmra.mxu0 %v2417
      %v2490 = vpop.f32.mrf.mxu0
      %v2491 = vadd.f32 0.0, %v2490
      %v2492 = vpop.f32.mrf.mxu0
      %2493 = vdwg.mxu0
      %v2495 = vsel %vm1524, %v1772, 0
      %v2498 = vsel %vm1524, %v1845, 0
      %2500 = vmatprep.subr.mxu0 0.0
      %2501 = vmatpush1.msra.mxu0 0.0
      %2502 = vmatprep.subr.mxu0 0.0
      %2503 = vmatpush1.msra.mxu0 0.0
      %2504 = vmatprep.subr.mxu0 0.0
      %2505 = vmatpush1.msra.mxu0 0.0
      %2506 = vmatprep.subr.mxu0 0.0
      %2507 = vmatpush1.msra.mxu0 0.0
      %2508 = vmatprep.subr.mxu0 0.0
      %2509 = vmatpush1.msra.mxu0 0.0
      %2510 = vmatprep.subr.mxu0 0.0
      %2511 = vmatpush1.msra.mxu0 0.0
      %2512 = vmatprep.subr.mxu0 0.0
      %2513 = vmatpush1.msra.mxu0 0.0
      %2514 = vmatprep.subr.mxu0 0.0
      %2515 = vmatpush1.msra.mxu0 0.0
      %2516 = vmatprep.subr.mxu0 0.0
      %2517 = vmatpush1.msra.mxu0 0.0
      %2518 = vmatprep.subr.mxu0 0.0
      %2519 = vmatpush1.msra.mxu0 0.0
      %2520 = vmatprep.subr.mxu0 0.0
      %2521 = vmatpush1.msra.mxu0 0.0
      %2522 = vmatprep.subr.mxu0 0.0
      %2523 = vmatpush1.msra.mxu0 0.0
      %2524 = vmatprep.subr.mxu0 0.0
      %2525 = vmatpush1.msra.mxu0 %v1268
      %2526 = vmatprep.subr.mxu0 0.0
      %2527 = vmatpush1.msra.mxu0 %v1267
      %2528 = vmatprep.subr.mxu0 0.0
      %2529 = vmatpush1.msra.mxu0 %v1266
      %2530 = vmatprep.subr.mxu0 0.0
      %2531 = vmatpush1.msra.mxu0 %v1265
      %2532 = vmatprep.subr.mxu0 0.0
      %2533 = vmatpush2.msra.mxu0 0.0
      %2534 = vmatprep.subr.mxu0 0.0
      %2535 = vmatpush2.msra.mxu0 0.0
      %2536 = vmatprep.subr.mxu0 0.0
      %2537 = vmatpush2.msra.mxu0 0.0
      %2538 = vmatprep.subr.mxu0 0.0
      %2539 = vmatpush2.msra.mxu0 0.0
      %2540 = vmatprep.subr.mxu0 0.0
      %2541 = vmatpush2.msra.mxu0 0.0
      %2542 = vmatprep.subr.mxu0 0.0
      %2543 = vmatpush2.msra.mxu0 0.0
      %2544 = vmatprep.subr.mxu0 0.0
      %2545 = vmatpush2.msra.mxu0 0.0
      %2546 = vmatprep.subr.mxu0 0.0
      %2547 = vmatpush2.msra.mxu0 0.0
      %2548 = vmatprep.subr.mxu0 0.0
      %2549 = vmatpush2.msra.mxu0 0.0
      %2550 = vmatprep.subr.mxu0 0.0
      %2551 = vmatpush2.msra.mxu0 0.0
      %2552 = vmatprep.subr.mxu0 0.0
      %2553 = vmatpush2.msra.mxu0 0.0
      %2554 = vmatprep.subr.mxu0 0.0
      %2555 = vmatpush2.msra.mxu0 0.0
      %2556 = vmatprep.subr.mxu0 0.0
      %2557 = vmatpush2.msra.mxu0 0.0
      %2558 = vmatprep.subr.mxu0 0.0
      %2559 = vmatpush2.msra.mxu0 0.0
      %2560 = vmatprep.subr.mxu0 0.0
      %2561 = vmatpush2.msra.mxu0 0.0
      %2562 = vmatprep.subr.mxu0 0.0
      %2563 = vmatpush2.msra.mxu0 0.0
      %2564 = vmatprep.mubr.f32.mxu0 0.0
      %2565 = vmatmul.mubr.f32.gmra.mxu0 %v2495
      %v2566 = vpop.f32.mrf.mxu0
      %v2567 = vadd.f32 %v2486, %v2566
      %v2568 = vpop.f32.mrf.mxu0
      %2569 = vmatprep.mubr.f32.mxu0 0.0
      %2570 = vmatmul.mubr.f32.gmra.mxu0 %v2498
      %v2571 = vpop.f32.mrf.mxu0
      %v2572 = vadd.f32 %v2491, %v2571
      %v2573 = vpop.f32.mrf.mxu0
      %2574 = vdwg.mxu0
      %v2576 = vlaneseq
      %v2577 = vshrl.u32 %v2576, 7
      %v2578 = vsub.s32 0, %v2577
      %v2579 = vrot.slane %v1127, %v2578
      %2581 = vmatprep.subr.mxu0 0.0
      %2582 = vmatpush1.msra.mxu0 %v1108
      %2583 = vmatprep.subr.mxu0 0.0
      %2584 = vmatpush1.msra.mxu0 %v1107
      %2585 = vmatprep.subr.mxu0 0.0
      %2586 = vmatpush1.msra.mxu0 %v1106
      %2587 = vmatprep.subr.mxu0 0.0
      %2588 = vmatpush1.msra.mxu0 %v1105
      %2589 = vmatprep.subr.mxu0 0.0
      %2590 = vmatpush1.msra.mxu0 %v1104
      %2591 = vmatprep.subr.mxu0 0.0
      %2592 = vmatpush1.msra.mxu0 %v1103
      %2593 = vmatprep.subr.mxu0 0.0
      %2594 = vmatpush1.msra.mxu0 %v1102
      %2595 = vmatprep.subr.mxu0 0.0
      %2596 = vmatpush1.msra.mxu0 %v1101
      %2597 = vmatprep.subr.mxu0 0.0
      %2598 = vmatpush1.msra.mxu0 %v1100
      %2599 = vmatprep.subr.mxu0 0.0
      %2600 = vmatpush1.msra.mxu0 %v1099
      %2601 = vmatprep.subr.mxu0 0.0
      %2602 = vmatpush1.msra.mxu0 %v1098
      %2603 = vmatprep.subr.mxu0 0.0
      %2604 = vmatpush1.msra.mxu0 %v1097
      %2605 = vmatprep.subr.mxu0 0.0
      %2606 = vmatpush1.msra.mxu0 %v1096
      %2607 = vmatprep.subr.mxu0 0.0
      %2608 = vmatpush1.msra.mxu0 %v1095
      %2609 = vmatprep.subr.mxu0 0.0
      %2610 = vmatpush1.msra.mxu0 %v1094
      %2611 = vmatprep.subr.mxu0 0.0
      %2612 = vmatpush1.msra.mxu0 %v1093
      %2613 = vmatprep.subr.mxu0 0.0
      %2614 = vmatpush2.msra.mxu0 0.0
      %2615 = vmatprep.subr.mxu0 0.0
      %2616 = vmatpush2.msra.mxu0 0.0
      %2617 = vmatprep.subr.mxu0 0.0
      %2618 = vmatpush2.msra.mxu0 0.0
      %2619 = vmatprep.subr.mxu0 0.0
      %2620 = vmatpush2.msra.mxu0 0.0
      %2621 = vmatprep.subr.mxu0 0.0
      %2622 = vmatpush2.msra.mxu0 0.0
      %2623 = vmatprep.subr.mxu0 0.0
      %2624 = vmatpush2.msra.mxu0 0.0
      %2625 = vmatprep.subr.mxu0 0.0
      %2626 = vmatpush2.msra.mxu0 0.0
      %2627 = vmatprep.subr.mxu0 0.0
      %2628 = vmatpush2.msra.mxu0 0.0
      %2629 = vmatprep.subr.mxu0 0.0
      %2630 = vmatpush2.msra.mxu0 0.0
      %2631 = vmatprep.subr.mxu0 0.0
      %2632 = vmatpush2.msra.mxu0 0.0
      %2633 = vmatprep.subr.mxu0 0.0
      %2634 = vmatpush2.msra.mxu0 0.0
      %2635 = vmatprep.subr.mxu0 0.0
      %2636 = vmatpush2.msra.mxu0 0.0
      %2637 = vmatprep.subr.mxu0 0.0
      %2638 = vmatpush2.msra.mxu0 0.0
      %2639 = vmatprep.subr.mxu0 0.0
      %2640 = vmatpush2.msra.mxu0 0.0
      %2641 = vmatprep.subr.mxu0 0.0
      %2642 = vmatpush2.msra.mxu0 0.0
      %2643 = vmatprep.subr.mxu0 0.0
      %2644 = vmatpush2.msra.mxu0 0.0
      %2645 = vmatprep.mubr.f32.mxu0 0.0
      %2646 = vmatmul.mubr.f32.gmra.mxu0 %v1059
      %v2647 = vpop.f32.mrf.mxu0
      %v2648 = vadd.f32 %v2579, %v2647
      %v2649 = vpop.f32.mrf.mxu0
      %2650 = vmatprep.mubr.f32.mxu0 0.0
      %2651 = vmatmul.mubr.f32.gmra.mxu0 %v1060
      %v2652 = vpop.f32.mrf.mxu0
      %v2653 = vadd.f32 %v2579, %v2652
      %v2654 = vpop.f32.mrf.mxu0
      %2655 = vdwg.mxu0
      %v2657 = vlaneseq
      %v2658 = vshrl.u32 %v2657, 7
      %v2659 = vsub.s32 0, %v2658
      %v2660 = vrot.slane %v1195, %v2659
      %2662 = vmatprep.subr.mxu0 0.0
      %2663 = vmatpush1.msra.mxu0 %v1176
      %2664 = vmatprep.subr.mxu0 0.0
      %2665 = vmatpush1.msra.mxu0 %v1175
      %2666 = vmatprep.subr.mxu0 0.0
      %2667 = vmatpush1.msra.mxu0 %v1174
      %2668 = vmatprep.subr.mxu0 0.0
      %2669 = vmatpush1.msra.mxu0 %v1173
      %2670 = vmatprep.subr.mxu0 0.0
      %2671 = vmatpush1.msra.mxu0 %v1172
      %2672 = vmatprep.subr.mxu0 0.0
      %2673 = vmatpush1.msra.mxu0 %v1171
      %2674 = vmatprep.subr.mxu0 0.0
      %2675 = vmatpush1.msra.mxu0 %v1170
      %2676 = vmatprep.subr.mxu0 0.0
      %2677 = vmatpush1.msra.mxu0 %v1169
      %2678 = vmatprep.subr.mxu0 0.0
      %2679 = vmatpush1.msra.mxu0 %v1168
      %2680 = vmatprep.subr.mxu0 0.0
      %2681 = vmatpush1.msra.mxu0 %v1167
      %2682 = vmatprep.subr.mxu0 0.0
      %2683 = vmatpush1.msra.mxu0 %v1166
      %2684 = vmatprep.subr.mxu0 0.0
      %2685 = vmatpush1.msra.mxu0 %v1165
      %2686 = vmatprep.subr.mxu0 0.0
      %2687 = vmatpush1.msra.mxu0 %v1164
      %2688 = vmatprep.subr.mxu0 0.0
      %2689 = vmatpush1.msra.mxu0 %v1163
      %2690 = vmatprep.subr.mxu0 0.0
      %2691 = vmatpush1.msra.mxu0 %v1162
      %2692 = vmatprep.subr.mxu0 0.0
      %2693 = vmatpush1.msra.mxu0 %v1161
      %2694 = vmatprep.subr.mxu0 0.0
      %2695 = vmatpush2.msra.mxu0 0.0
      %2696 = vmatprep.subr.mxu0 0.0
      %2697 = vmatpush2.msra.mxu0 0.0
      %2698 = vmatprep.subr.mxu0 0.0
      %2699 = vmatpush2.msra.mxu0 0.0
      %2700 = vmatprep.subr.mxu0 0.0
      %2701 = vmatpush2.msra.mxu0 0.0
      %2702 = vmatprep.subr.mxu0 0.0
      %2703 = vmatpush2.msra.mxu0 0.0
      %2704 = vmatprep.subr.mxu0 0.0
      %2705 = vmatpush2.msra.mxu0 0.0
      %2706 = vmatprep.subr.mxu0 0.0
      %2707 = vmatpush2.msra.mxu0 0.0
      %2708 = vmatprep.subr.mxu0 0.0
      %2709 = vmatpush2.msra.mxu0 0.0
      %2710 = vmatprep.subr.mxu0 0.0
      %2711 = vmatpush2.msra.mxu0 0.0
      %2712 = vmatprep.subr.mxu0 0.0
      %2713 = vmatpush2.msra.mxu0 0.0
      %2714 = vmatprep.subr.mxu0 0.0
      %2715 = vmatpush2.msra.mxu0 0.0
      %2716 = vmatprep.subr.mxu0 0.0
      %2717 = vmatpush2.msra.mxu0 0.0
      %2718 = vmatprep.subr.mxu0 0.0
      %2719 = vmatpush2.msra.mxu0 0.0
      %2720 = vmatprep.subr.mxu0 0.0
      %2721 = vmatpush2.msra.mxu0 0.0
      %2722 = vmatprep.subr.mxu0 0.0
      %2723 = vmatpush2.msra.mxu0 0.0
      %2724 = vmatprep.subr.mxu0 0.0
      %2725 = vmatpush2.msra.mxu0 0.0
      %2726 = vmatprep.mubr.f32.mxu0 0.0
      %2727 = vmatmul.mubr.f32.gmra.mxu0 %v1059
      %v2728 = vpop.f32.mrf.mxu0
      %v2729 = vadd.f32 %v2660, %v2728
      %v2730 = vpop.f32.mrf.mxu0
      %2731 = vmatprep.mubr.f32.mxu0 0.0
      %2732 = vmatmul.mubr.f32.gmra.mxu0 %v1060
      %v2733 = vpop.f32.mrf.mxu0
      %v2734 = vadd.f32 %v2660, %v2733
      %v2735 = vpop.f32.mrf.mxu0
      %2736 = vdwg.mxu0
      %v2738 = vlaneseq
      %v2739 = vshrl.u32 %v2738, 7
      %v2740 = vsub.s32 0, %v2739
      %v2741 = vrot.slane %v1263, %v2740
      %2743 = vmatprep.subr.mxu0 0.0
      %2744 = vmatpush1.msra.mxu0 %v1244
      %2745 = vmatprep.subr.mxu0 0.0
      %2746 = vmatpush1.msra.mxu0 %v1243
      %2747 = vmatprep.subr.mxu0 0.0
      %2748 = vmatpush1.msra.mxu0 %v1242
      %2749 = vmatprep.subr.mxu0 0.0
      %2750 = vmatpush1.msra.mxu0 %v1241
      %2751 = vmatprep.subr.mxu0 0.0
      %2752 = vmatpush1.msra.mxu0 %v1240
      %2753 = vmatprep.subr.mxu0 0.0
      %2754 = vmatpush1.msra.mxu0 %v1239
      %2755 = vmatprep.subr.mxu0 0.0
      %2756 = vmatpush1.msra.mxu0 %v1238
      %2757 = vmatprep.subr.mxu0 0.0
      %2758 = vmatpush1.msra.mxu0 %v1237
      %2759 = vmatprep.subr.mxu0 0.0
      %2760 = vmatpush1.msra.mxu0 %v1236
      %2761 = vmatprep.subr.mxu0 0.0
      %2762 = vmatpush1.msra.mxu0 %v1235
      %2763 = vmatprep.subr.mxu0 0.0
      %2764 = vmatpush1.msra.mxu0 %v1234
      %2765 = vmatprep.subr.mxu0 0.0
      %2766 = vmatpush1.msra.mxu0 %v1233
      %2767 = vmatprep.subr.mxu0 0.0
      %2768 = vmatpush1.msra.mxu0 %v1232
      %2769 = vmatprep.subr.mxu0 0.0
      %2770 = vmatpush1.msra.mxu0 %v1231
      %2771 = vmatprep.subr.mxu0 0.0
      %2772 = vmatpush1.msra.mxu0 %v1230
      %2773 = vmatprep.subr.mxu0 0.0
      %2774 = vmatpush1.msra.mxu0 %v1229
      %2775 = vmatprep.subr.mxu0 0.0
      %2776 = vmatpush2.msra.mxu0 0.0
      %2777 = vmatprep.subr.mxu0 0.0
      %2778 = vmatpush2.msra.mxu0 0.0
      %2779 = vmatprep.subr.mxu0 0.0
      %2780 = vmatpush2.msra.mxu0 0.0
      %2781 = vmatprep.subr.mxu0 0.0
      %2782 = vmatpush2.msra.mxu0 0.0
      %2783 = vmatprep.subr.mxu0 0.0
      %2784 = vmatpush2.msra.mxu0 0.0
      %2785 = vmatprep.subr.mxu0 0.0
      %2786 = vmatpush2.msra.mxu0 0.0
      %2787 = vmatprep.subr.mxu0 0.0
      %2788 = vmatpush2.msra.mxu0 0.0
      %2789 = vmatprep.subr.mxu0 0.0
      %2790 = vmatpush2.msra.mxu0 0.0
      %2791 = vmatprep.subr.mxu0 0.0
      %2792 = vmatpush2.msra.mxu0 0.0
      %2793 = vmatprep.subr.mxu0 0.0
      %2794 = vmatpush2.msra.mxu0 0.0
      %2795 = vmatprep.subr.mxu0 0.0
      %2796 = vmatpush2.msra.mxu0 0.0
      %2797 = vmatprep.subr.mxu0 0.0
      %2798 = vmatpush2.msra.mxu0 0.0
      %2799 = vmatprep.subr.mxu0 0.0
      %2800 = vmatpush2.msra.mxu0 0.0
      %2801 = vmatprep.subr.mxu0 0.0
      %2802 = vmatpush2.msra.mxu0 0.0
      %2803 = vmatprep.subr.mxu0 0.0
      %2804 = vmatpush2.msra.mxu0 0.0
      %2805 = vmatprep.subr.mxu0 0.0
      %2806 = vmatpush2.msra.mxu0 0.0
      %2807 = vmatprep.mubr.f32.mxu0 0.0
      %2808 = vmatmul.mubr.f32.gmra.mxu0 %v1059
      %v2809 = vpop.f32.mrf.mxu0
      %v2810 = vadd.f32 %v2741, %v2809
      %v2811 = vpop.f32.mrf.mxu0
      %2812 = vmatprep.mubr.f32.mxu0 0.0
      %2813 = vmatmul.mubr.f32.gmra.mxu0 %v1060
      %v2814 = vpop.f32.mrf.mxu0
      %v2815 = vadd.f32 %v2741, %v2814
      %v2816 = vpop.f32.mrf.mxu0
      %2817 = vdwg.mxu0
      %v2819 = vsel %vm1524, %v2648, 0
      %v2822 = vsel %vm1524, %v2729, 0
      %2824 = vmatprep.subr.mxu0 0.0
      %2825 = vmatpush1.xpose.msra.mxu0 0.0
      %2826 = vmatprep.subr.mxu0 0.0
      %2827 = vmatpush1.xpose.msra.mxu0 0.0
      %2828 = vmatprep.subr.mxu0 0.0
      %2829 = vmatpush1.xpose.msra.mxu0 0.0
      %2830 = vmatprep.subr.mxu0 0.0
      %2831 = vmatpush1.xpose.msra.mxu0 0.0
      %2832 = vmatprep.subr.mxu0 0.0
      %2833 = vmatpush1.xpose.msra.mxu0 0.0
      %2834 = vmatprep.subr.mxu0 0.0
      %2835 = vmatpush1.xpose.msra.mxu0 0.0
      %2836 = vmatprep.subr.mxu0 0.0
      %2837 = vmatpush1.xpose.msra.mxu0 0.0
      %2838 = vmatprep.subr.mxu0 0.0
      %2839 = vmatpush1.xpose.msra.mxu0 0.0
      %2840 = vmatprep.subr.mxu0 0.0
      %2841 = vmatpush1.xpose.msra.mxu0 0.0
      %2842 = vmatprep.subr.mxu0 0.0
      %2843 = vmatpush1.xpose.msra.mxu0 0.0
      %2844 = vmatprep.subr.mxu0 0.0
      %2845 = vmatpush1.xpose.msra.mxu0 0.0
      %2846 = vmatprep.subr.mxu0 0.0
      %2847 = vmatpush1.xpose.msra.mxu0 0.0
      %2848 = vmatprep.subr.mxu0 0.0
      %2849 = vmatpush1.xpose.msra.mxu0 0.0
      %2850 = vmatprep.subr.mxu0 0.0
      %2851 = vmatpush1.xpose.msra.mxu0 0.0
      %2852 = vmatprep.subr.mxu0 0.0
      %2853 = vmatpush1.xpose.msra.mxu0 0.0
      %2854 = vmatprep.subr.mxu0 0.0
      %2855 = vmatpush1.xpose.msra.mxu0 %v2822
      %2856 = vmatprep.subr.mxu0 0.0
      %2857 = vmatpush2.xpose.msra.mxu0 0.0
      %2858 = vmatprep.subr.mxu0 0.0
      %2859 = vmatpush2.xpose.msra.mxu0 0.0
      %2860 = vmatprep.subr.mxu0 0.0
      %2861 = vmatpush2.xpose.msra.mxu0 0.0
      %2862 = vmatprep.subr.mxu0 0.0
      %2863 = vmatpush2.xpose.msra.mxu0 0.0
      %2864 = vmatprep.subr.mxu0 0.0
      %2865 = vmatpush2.xpose.msra.mxu0 0.0
      %2866 = vmatprep.subr.mxu0 0.0
      %2867 = vmatpush2.xpose.msra.mxu0 0.0
      %2868 = vmatprep.subr.mxu0 0.0
      %2869 = vmatpush2.xpose.msra.mxu0 0.0
      %2870 = vmatprep.subr.mxu0 0.0
      %2871 = vmatpush2.xpose.msra.mxu0 0.0
      %2872 = vmatprep.subr.mxu0 0.0
      %2873 = vmatpush2.xpose.msra.mxu0 0.0
      %2874 = vmatprep.subr.mxu0 0.0
      %2875 = vmatpush2.xpose.msra.mxu0 0.0
      %2876 = vmatprep.subr.mxu0 0.0
      %2877 = vmatpush2.xpose.msra.mxu0 0.0
      %2878 = vmatprep.subr.mxu0 0.0
      %2879 = vmatpush2.xpose.msra.mxu0 0.0
      %2880 = vmatprep.subr.mxu0 0.0
      %2881 = vmatpush2.xpose.msra.mxu0 0.0
      %2882 = vmatprep.subr.mxu0 0.0
      %2883 = vmatpush2.xpose.msra.mxu0 0.0
      %2884 = vmatprep.subr.mxu0 0.0
      %2885 = vmatpush2.xpose.msra.mxu0 0.0
      %2886 = vmatprep.subr.mxu0 0.0
      %2887 = vmatpush2.xpose.msra.mxu0 0.0
      %2888 = vmatprep.mubr.f32.mxu0 0.0
      %2889 = vmatmul.mubr.f32.gmra.mxu0 %v2819
      %v2890 = vpop.f32.mrf.mxu0
      %v2891 = vadd.f32 0.0, %v2890
      %v2892 = vpop.f32.mrf.mxu0
      %2893 = vdwg.mxu0
      %v2895 = vsel %vm1524, %v2653, 0
      %v2898 = vsel %vm1524, %v2734, 0
      %2900 = vmatprep.subr.mxu0 0.0
      %2901 = vmatpush1.xpose.msra.mxu0 0.0
      %2902 = vmatprep.subr.mxu0 0.0
      %2903 = vmatpush1.xpose.msra.mxu0 0.0
      %2904 = vmatprep.subr.mxu0 0.0
      %2905 = vmatpush1.xpose.msra.mxu0 0.0
      %2906 = vmatprep.subr.mxu0 0.0
      %2907 = vmatpush1.xpose.msra.mxu0 0.0
      %2908 = vmatprep.subr.mxu0 0.0
      %2909 = vmatpush1.xpose.msra.mxu0 0.0
      %2910 = vmatprep.subr.mxu0 0.0
      %2911 = vmatpush1.xpose.msra.mxu0 0.0
      %2912 = vmatprep.subr.mxu0 0.0
      %2913 = vmatpush1.xpose.msra.mxu0 0.0
      %2914 = vmatprep.subr.mxu0 0.0
      %2915 = vmatpush1.xpose.msra.mxu0 0.0
      %2916 = vmatprep.subr.mxu0 0.0
      %2917 = vmatpush1.xpose.msra.mxu0 0.0
      %2918 = vmatprep.subr.mxu0 0.0
      %2919 = vmatpush1.xpose.msra.mxu0 0.0
      %2920 = vmatprep.subr.mxu0 0.0
      %2921 = vmatpush1.xpose.msra.mxu0 0.0
      %2922 = vmatprep.subr.mxu0 0.0
      %2923 = vmatpush1.xpose.msra.mxu0 0.0
      %2924 = vmatprep.subr.mxu0 0.0
      %2925 = vmatpush1.xpose.msra.mxu0 0.0
      %2926 = vmatprep.subr.mxu0 0.0
      %2927 = vmatpush1.xpose.msra.mxu0 0.0
      %2928 = vmatprep.subr.mxu0 0.0
      %2929 = vmatpush1.xpose.msra.mxu0 0.0
      %2930 = vmatprep.subr.mxu0 0.0
      %2931 = vmatpush1.xpose.msra.mxu0 %v2898
      %2932 = vmatprep.subr.mxu0 0.0
      %2933 = vmatpush2.xpose.msra.mxu0 0.0
      %2934 = vmatprep.subr.mxu0 0.0
      %2935 = vmatpush2.xpose.msra.mxu0 0.0
      %2936 = vmatprep.subr.mxu0 0.0
      %2937 = vmatpush2.xpose.msra.mxu0 0.0
      %2938 = vmatprep.subr.mxu0 0.0
      %2939 = vmatpush2.xpose.msra.mxu0 0.0
      %2940 = vmatprep.subr.mxu0 0.0
      %2941 = vmatpush2.xpose.msra.mxu0 0.0
      %2942 = vmatprep.subr.mxu0 0.0
      %2943 = vmatpush2.xpose.msra.mxu0 0.0
      %2944 = vmatprep.subr.mxu0 0.0
      %2945 = vmatpush2.xpose.msra.mxu0 0.0
      %2946 = vmatprep.subr.mxu0 0.0
      %2947 = vmatpush2.xpose.msra.mxu0 0.0
      %2948 = vmatprep.subr.mxu0 0.0
      %2949 = vmatpush2.xpose.msra.mxu0 0.0
      %2950 = vmatprep.subr.mxu0 0.0
      %2951 = vmatpush2.xpose.msra.mxu0 0.0
      %2952 = vmatprep.subr.mxu0 0.0
      %2953 = vmatpush2.xpose.msra.mxu0 0.0
      %2954 = vmatprep.subr.mxu0 0.0
      %2955 = vmatpush2.xpose.msra.mxu0 0.0
      %2956 = vmatprep.subr.mxu0 0.0
      %2957 = vmatpush2.xpose.msra.mxu0 0.0
      %2958 = vmatprep.subr.mxu0 0.0
      %2959 = vmatpush2.xpose.msra.mxu0 0.0
      %2960 = vmatprep.subr.mxu0 0.0
      %2961 = vmatpush2.xpose.msra.mxu0 0.0
      %2962 = vmatprep.subr.mxu0 0.0
      %2963 = vmatpush2.xpose.msra.mxu0 0.0
      %2964 = vmatprep.mubr.f32.mxu0 0.0
      %2965 = vmatmul.mubr.f32.gmra.mxu0 %v2895
      %v2966 = vpop.f32.mrf.mxu0
      %v2967 = vadd.f32 0.0, %v2966
      %v2968 = vpop.f32.mrf.mxu0
      %2969 = vdwg.mxu0
      %v2970 = vmul.f32 %v2891, 0.17677669
      %v2971 = vmul.f32 %v2967, 0.17677669
      %v2972 = vsel %vm1679, %v2970, -inf
      %2973 = vmax.xlane.f32.xlu0 %v2972
      %v2974 = vpop.xlane.xlu0 %2973
      %v2975 = vsel %vm1679, %v2971, -inf
      %2976 = vmax.xlane.f32.xlu0 %v2975
      %v2977 = vpop.xlane.xlu0 %2976
      %v2978 = vsub.f32 %v2970, %v2974
      %v2979 = vsub.f32 %v2971, %v2977
      %v2980 = vmul.f32 %v2978, 1.442695
      %v2981 = vpow.pop %v2980
      %v2982 = vmul.f32 %v2979, 1.442695
      %v2983 = vpow.pop %v2982
      %v2984 = vsel %vm1679, %v2981, 0.0
      %2985 = vadd.xlane.f32.xlu0 %v2984
      %v2986 = vpop.xlane.xlu0 %2985
      %v2987 = vsel %vm1679, %v2983, 0.0
      %2988 = vadd.xlane.f32.xlu0 %v2987
      %v2989 = vpop.xlane.xlu0 %2988
      %v2990 = vrcp.pop %v2986
      %v2991 = vrcp.pop %v2989
      %v2992 = vmul.f32 %v2981, %v2990
      %v2993 = vmul.f32 %v2983, %v2991
      %v2995 = vsel %vm1679, %v2992, 0
      %2997 = vmatprep.subr.mxu0 0.0
      %2998 = vmatpush1.msra.mxu0 0.0
      %2999 = vmatprep.subr.mxu0 0.0
      %3000 = vmatpush1.msra.mxu0 0.0
      %3001 = vmatprep.subr.mxu0 0.0
      %3002 = vmatpush1.msra.mxu0 0.0
      %3003 = vmatprep.subr.mxu0 0.0
      %3004 = vmatpush1.msra.mxu0 0.0
      %3005 = vmatprep.subr.mxu0 0.0
      %3006 = vmatpush1.msra.mxu0 0.0
      %3007 = vmatprep.subr.mxu0 0.0
      %3008 = vmatpush1.msra.mxu0 0.0
      %3009 = vmatprep.subr.mxu0 0.0
      %3010 = vmatpush1.msra.mxu0 0.0
      %3011 = vmatprep.subr.mxu0 0.0
      %3012 = vmatpush1.msra.mxu0 0.0
      %3013 = vmatprep.subr.mxu0 0.0
      %3014 = vmatpush1.msra.mxu0 0.0
      %3015 = vmatprep.subr.mxu0 0.0
      %3016 = vmatpush1.msra.mxu0 0.0
      %3017 = vmatprep.subr.mxu0 0.0
      %3018 = vmatpush1.msra.mxu0 0.0
      %3019 = vmatprep.subr.mxu0 0.0
      %3020 = vmatpush1.msra.mxu0 0.0
      %3021 = vmatprep.subr.mxu0 0.0
      %3022 = vmatpush1.msra.mxu0 0.0
      %3023 = vmatprep.subr.mxu0 0.0
      %3024 = vmatpush1.msra.mxu0 0.0
      %3025 = vmatprep.subr.mxu0 0.0
      %3026 = vmatpush1.msra.mxu0 0.0
      %3027 = vmatprep.subr.mxu0 0.0
      %3028 = vmatpush1.msra.mxu0 %v2810
      %3029 = vmatprep.subr.mxu0 0.0
      %3030 = vmatpush2.msra.mxu0 0.0
      %3031 = vmatprep.subr.mxu0 0.0
      %3032 = vmatpush2.msra.mxu0 0.0
      %3033 = vmatprep.subr.mxu0 0.0
      %3034 = vmatpush2.msra.mxu0 0.0
      %3035 = vmatprep.subr.mxu0 0.0
      %3036 = vmatpush2.msra.mxu0 0.0
      %3037 = vmatprep.subr.mxu0 0.0
      %3038 = vmatpush2.msra.mxu0 0.0
      %3039 = vmatprep.subr.mxu0 0.0
      %3040 = vmatpush2.msra.mxu0 0.0
      %3041 = vmatprep.subr.mxu0 0.0
      %3042 = vmatpush2.msra.mxu0 0.0
      %3043 = vmatprep.subr.mxu0 0.0
      %3044 = vmatpush2.msra.mxu0 0.0
      %3045 = vmatprep.subr.mxu0 0.0
      %3046 = vmatpush2.msra.mxu0 0.0
      %3047 = vmatprep.subr.mxu0 0.0
      %3048 = vmatpush2.msra.mxu0 0.0
      %3049 = vmatprep.subr.mxu0 0.0
      %3050 = vmatpush2.msra.mxu0 0.0
      %3051 = vmatprep.subr.mxu0 0.0
      %3052 = vmatpush2.msra.mxu0 0.0
      %3053 = vmatprep.subr.mxu0 0.0
      %3054 = vmatpush2.msra.mxu0 0.0
      %3055 = vmatprep.subr.mxu0 0.0
      %3056 = vmatpush2.msra.mxu0 0.0
      %3057 = vmatprep.subr.mxu0 0.0
      %3058 = vmatpush2.msra.mxu0 0.0
      %3059 = vmatprep.subr.mxu0 0.0
      %3060 = vmatpush2.msra.mxu0 0.0
      %3061 = vmatprep.mubr.f32.mxu0 0.0
      %3062 = vmatmul.mubr.f32.gmra.mxu0 %v2995
      %v3063 = vpop.f32.mrf.mxu0
      %v3064 = vadd.f32 0.0, %v3063
      %v3065 = vpop.f32.mrf.mxu0
      %3066 = vdwg.mxu0
      %v3068 = vsel %vm1679, %v2993, 0
      %3070 = vmatprep.subr.mxu0 0.0
      %3071 = vmatpush1.msra.mxu0 0.0
      %3072 = vmatprep.subr.mxu0 0.0
      %3073 = vmatpush1.msra.mxu0 0.0
      %3074 = vmatprep.subr.mxu0 0.0
      %3075 = vmatpush1.msra.mxu0 0.0
      %3076 = vmatprep.subr.mxu0 0.0
      %3077 = vmatpush1.msra.mxu0 0.0
      %3078 = vmatprep.subr.mxu0 0.0
      %3079 = vmatpush1.msra.mxu0 0.0
      %3080 = vmatprep.subr.mxu0 0.0
      %3081 = vmatpush1.msra.mxu0 0.0
      %3082 = vmatprep.subr.mxu0 0.0
      %3083 = vmatpush1.msra.mxu0 0.0
      %3084 = vmatprep.subr.mxu0 0.0
      %3085 = vmatpush1.msra.mxu0 0.0
      %3086 = vmatprep.subr.mxu0 0.0
      %3087 = vmatpush1.msra.mxu0 0.0
      %3088 = vmatprep.subr.mxu0 0.0
      %3089 = vmatpush1.msra.mxu0 0.0
      %3090 = vmatprep.subr.mxu0 0.0
      %3091 = vmatpush1.msra.mxu0 0.0
      %3092 = vmatprep.subr.mxu0 0.0
      %3093 = vmatpush1.msra.mxu0 0.0
      %3094 = vmatprep.subr.mxu0 0.0
      %3095 = vmatpush1.msra.mxu0 0.0
      %3096 = vmatprep.subr.mxu0 0.0
      %3097 = vmatpush1.msra.mxu0 0.0
      %3098 = vmatprep.subr.mxu0 0.0
      %3099 = vmatpush1.msra.mxu0 0.0
      %3100 = vmatprep.subr.mxu0 0.0
      %3101 = vmatpush1.msra.mxu0 %v2815
      %3102 = vmatprep.subr.mxu0 0.0
      %3103 = vmatpush2.msra.mxu0 0.0
      %3104 = vmatprep.subr.mxu0 0.0
      %3105 = vmatpush2.msra.mxu0 0.0
      %3106 = vmatprep.subr.mxu0 0.0
      %3107 = vmatpush2.msra.mxu0 0.0
      %3108 = vmatprep.subr.mxu0 0.0
      %3109 = vmatpush2.msra.mxu0 0.0
      %3110 = vmatprep.subr.mxu0 0.0
      %3111 = vmatpush2.msra.mxu0 0.0
      %3112 = vmatprep.subr.mxu0 0.0
      %3113 = vmatpush2.msra.mxu0 0.0
      %3114 = vmatprep.subr.mxu0 0.0
      %3115 = vmatpush2.msra.mxu0 0.0
      %3116 = vmatprep.subr.mxu0 0.0
      %3117 = vmatpush2.msra.mxu0 0.0
      %3118 = vmatprep.subr.mxu0 0.0
      %3119 = vmatpush2.msra.mxu0 0.0
      %3120 = vmatprep.subr.mxu0 0.0
      %3121 = vmatpush2.msra.mxu0 0.0
      %3122 = vmatprep.subr.mxu0 0.0
      %3123 = vmatpush2.msra.mxu0 0.0
      %3124 = vmatprep.subr.mxu0 0.0
      %3125 = vmatpush2.msra.mxu0 0.0
      %3126 = vmatprep.subr.mxu0 0.0
      %3127 = vmatpush2.msra.mxu0 0.0
      %3128 = vmatprep.subr.mxu0 0.0
      %3129 = vmatpush2.msra.mxu0 0.0
      %3130 = vmatprep.subr.mxu0 0.0
      %3131 = vmatpush2.msra.mxu0 0.0
      %3132 = vmatprep.subr.mxu0 0.0
      %3133 = vmatpush2.msra.mxu0 0.0
      %3134 = vmatprep.mubr.f32.mxu0 0.0
      %3135 = vmatmul.mubr.f32.gmra.mxu0 %v3068
      %v3136 = vpop.f32.mrf.mxu0
      %v3137 = vadd.f32 0.0, %v3136
      %v3138 = vpop.f32.mrf.mxu0
      %3139 = vdwg.mxu0
      %v3141 = vsel %vm1524, %v3064, 0
      %v3144 = vsel %vm1524, %v3137, 0
      %3146 = vmatprep.subr.mxu0 0.0
      %3147 = vmatpush1.msra.mxu0 0.0
      %3148 = vmatprep.subr.mxu0 0.0
      %3149 = vmatpush1.msra.mxu0 0.0
      %3150 = vmatprep.subr.mxu0 0.0
      %3151 = vmatpush1.msra.mxu0 0.0
      %3152 = vmatprep.subr.mxu0 0.0
      %3153 = vmatpush1.msra.mxu0 0.0
      %3154 = vmatprep.subr.mxu0 0.0
      %3155 = vmatpush1.msra.mxu0 0.0
      %3156 = vmatprep.subr.mxu0 0.0
      %3157 = vmatpush1.msra.mxu0 0.0
      %3158 = vmatprep.subr.mxu0 0.0
      %3159 = vmatpush1.msra.mxu0 0.0
      %3160 = vmatprep.subr.mxu0 0.0
      %3161 = vmatpush1.msra.mxu0 0.0
      %3162 = vmatprep.subr.mxu0 0.0
      %3163 = vmatpush1.msra.mxu0 0.0
      %3164 = vmatprep.subr.mxu0 0.0
      %3165 = vmatpush1.msra.mxu0 0.0
      %3166 = vmatprep.subr.mxu0 0.0
      %3167 = vmatpush1.msra.mxu0 0.0
      %3168 = vmatprep.subr.mxu0 0.0
      %3169 = vmatpush1.msra.mxu0 0.0
      %3170 = vmatprep.subr.mxu0 0.0
      %3171 = vmatpush1.msra.mxu0 %v1276
      %3172 = vmatprep.subr.mxu0 0.0
      %3173 = vmatpush1.msra.mxu0 %v1275
      %3174 = vmatprep.subr.mxu0 0.0
      %3175 = vmatpush1.msra.mxu0 %v1274
      %3176 = vmatprep.subr.mxu0 0.0
      %3177 = vmatpush1.msra.mxu0 %v1273
      %3178 = vmatprep.subr.mxu0 0.0
      %3179 = vmatpush2.msra.mxu0 0.0
      %3180 = vmatprep.subr.mxu0 0.0
      %3181 = vmatpush2.msra.mxu0 0.0
      %3182 = vmatprep.subr.mxu0 0.0
      %3183 = vmatpush2.msra.mxu0 0.0
      %3184 = vmatprep.subr.mxu0 0.0
      %3185 = vmatpush2.msra.mxu0 0.0
      %3186 = vmatprep.subr.mxu0 0.0
      %3187 = vmatpush2.msra.mxu0 0.0
      %3188 = vmatprep.subr.mxu0 0.0
      %3189 = vmatpush2.msra.mxu0 0.0
      %3190 = vmatprep.subr.mxu0 0.0
      %3191 = vmatpush2.msra.mxu0 0.0
      %3192 = vmatprep.subr.mxu0 0.0
      %3193 = vmatpush2.msra.mxu0 0.0
      %3194 = vmatprep.subr.mxu0 0.0
      %3195 = vmatpush2.msra.mxu0 0.0
      %3196 = vmatprep.subr.mxu0 0.0
      %3197 = vmatpush2.msra.mxu0 0.0
      %3198 = vmatprep.subr.mxu0 0.0
      %3199 = vmatpush2.msra.mxu0 0.0
      %3200 = vmatprep.subr.mxu0 0.0
      %3201 = vmatpush2.msra.mxu0 0.0
      %3202 = vmatprep.subr.mxu0 0.0
      %3203 = vmatpush2.msra.mxu0 0.0
      %3204 = vmatprep.subr.mxu0 0.0
      %3205 = vmatpush2.msra.mxu0 0.0
      %3206 = vmatprep.subr.mxu0 0.0
      %3207 = vmatpush2.msra.mxu0 0.0
      %3208 = vmatprep.subr.mxu0 0.0
      %3209 = vmatpush2.msra.mxu0 0.0
      %3210 = vmatprep.mubr.f32.mxu0 0.0
      %3211 = vmatmul.mubr.f32.gmra.mxu0 %v3141
      %v3212 = vpop.f32.mrf.mxu0
      %v3213 = vadd.f32 0.0, %v3212
      %v3214 = vpop.f32.mrf.mxu0
      %3215 = vmatprep.mubr.f32.mxu0 0.0
      %3216 = vmatmul.mubr.f32.gmra.mxu0 %v3144
      %v3217 = vpop.f32.mrf.mxu0
      %v3218 = vadd.f32 0.0, %v3217
      %v3219 = vpop.f32.mrf.mxu0
      %3220 = vdwg.mxu0
      %v3221 = vadd.f32 %v2567, %v3213
      %v3222 = vadd.f32 %v2572, %v3218
      %v3224 = vlaneseq
      %v3225 = vshrl.u32 %v3224, 7
      %v3226 = vsub.s32 0, %v3225
      %v3227 = vrot.slane %v1128, %v3226
      %3229 = vmatprep.subr.mxu0 0.0
      %3230 = vmatpush1.msra.mxu0 %v1124
      %3231 = vmatprep.subr.mxu0 0.0
      %3232 = vmatpush1.msra.mxu0 %v1123
      %3233 = vmatprep.subr.mxu0 0.0
      %3234 = vmatpush1.msra.mxu0 %v1122
      %3235 = vmatprep.subr.mxu0 0.0
      %3236 = vmatpush1.msra.mxu0 %v1121
      %3237 = vmatprep.subr.mxu0 0.0
      %3238 = vmatpush1.msra.mxu0 %v1120
      %3239 = vmatprep.subr.mxu0 0.0
      %3240 = vmatpush1.msra.mxu0 %v1119
      %3241 = vmatprep.subr.mxu0 0.0
      %3242 = vmatpush1.msra.mxu0 %v1118
      %3243 = vmatprep.subr.mxu0 0.0
      %3244 = vmatpush1.msra.mxu0 %v1117
      %3245 = vmatprep.subr.mxu0 0.0
      %3246 = vmatpush1.msra.mxu0 %v1116
      %3247 = vmatprep.subr.mxu0 0.0
      %3248 = vmatpush1.msra.mxu0 %v1115
      %3249 = vmatprep.subr.mxu0 0.0
      %3250 = vmatpush1.msra.mxu0 %v1114
      %3251 = vmatprep.subr.mxu0 0.0
      %3252 = vmatpush1.msra.mxu0 %v1113
      %3253 = vmatprep.subr.mxu0 0.0
      %3254 = vmatpush1.msra.mxu0 %v1112
      %3255 = vmatprep.subr.mxu0 0.0
      %3256 = vmatpush1.msra.mxu0 %v1111
      %3257 = vmatprep.subr.mxu0 0.0
      %3258 = vmatpush1.msra.mxu0 %v1110
      %3259 = vmatprep.subr.mxu0 0.0
      %3260 = vmatpush1.msra.mxu0 %v1109
      %3261 = vmatprep.subr.mxu0 0.0
      %3262 = vmatpush2.msra.mxu0 0.0
      %3263 = vmatprep.subr.mxu0 0.0
      %3264 = vmatpush2.msra.mxu0 0.0
      %3265 = vmatprep.subr.mxu0 0.0
      %3266 = vmatpush2.msra.mxu0 0.0
      %3267 = vmatprep.subr.mxu0 0.0
      %3268 = vmatpush2.msra.mxu0 0.0
      %3269 = vmatprep.subr.mxu0 0.0
      %3270 = vmatpush2.msra.mxu0 0.0
      %3271 = vmatprep.subr.mxu0 0.0
      %3272 = vmatpush2.msra.mxu0 0.0
      %3273 = vmatprep.subr.mxu0 0.0
      %3274 = vmatpush2.msra.mxu0 0.0
      %3275 = vmatprep.subr.mxu0 0.0
      %3276 = vmatpush2.msra.mxu0 0.0
      %3277 = vmatprep.subr.mxu0 0.0
      %3278 = vmatpush2.msra.mxu0 0.0
      %3279 = vmatprep.subr.mxu0 0.0
      %3280 = vmatpush2.msra.mxu0 0.0
      %3281 = vmatprep.subr.mxu0 0.0
      %3282 = vmatpush2.msra.mxu0 0.0
      %3283 = vmatprep.subr.mxu0 0.0
      %3284 = vmatpush2.msra.mxu0 0.0
      %3285 = vmatprep.subr.mxu0 0.0
      %3286 = vmatpush2.msra.mxu0 0.0
      %3287 = vmatprep.subr.mxu0 0.0
      %3288 = vmatpush2.msra.mxu0 0.0
      %3289 = vmatprep.subr.mxu0 0.0
      %3290 = vmatpush2.msra.mxu0 0.0
      %3291 = vmatprep.subr.mxu0 0.0
      %3292 = vmatpush2.msra.mxu0 0.0
      %3293 = vmatprep.mubr.f32.mxu0 0.0
      %3294 = vmatmul.mubr.f32.gmra.mxu0 %v1059
      %v3295 = vpop.f32.mrf.mxu0
      %v3296 = vadd.f32 %v3227, %v3295
      %v3297 = vpop.f32.mrf.mxu0
      %3298 = vmatprep.mubr.f32.mxu0 0.0
      %3299 = vmatmul.mubr.f32.gmra.mxu0 %v1060
      %v3300 = vpop.f32.mrf.mxu0
      %v3301 = vadd.f32 %v3227, %v3300
      %v3302 = vpop.f32.mrf.mxu0
      %3303 = vdwg.mxu0
      %v3305 = vlaneseq
      %v3306 = vshrl.u32 %v3305, 7
      %v3307 = vsub.s32 0, %v3306
      %v3308 = vrot.slane %v1196, %v3307
      %3310 = vmatprep.subr.mxu0 0.0
      %3311 = vmatpush1.msra.mxu0 %v1192
      %3312 = vmatprep.subr.mxu0 0.0
      %3313 = vmatpush1.msra.mxu0 %v1191
      %3314 = vmatprep.subr.mxu0 0.0
      %3315 = vmatpush1.msra.mxu0 %v1190
      %3316 = vmatprep.subr.mxu0 0.0
      %3317 = vmatpush1.msra.mxu0 %v1189
      %3318 = vmatprep.subr.mxu0 0.0
      %3319 = vmatpush1.msra.mxu0 %v1188
      %3320 = vmatprep.subr.mxu0 0.0
      %3321 = vmatpush1.msra.mxu0 %v1187
      %3322 = vmatprep.subr.mxu0 0.0
      %3323 = vmatpush1.msra.mxu0 %v1186
      %3324 = vmatprep.subr.mxu0 0.0
      %3325 = vmatpush1.msra.mxu0 %v1185
      %3326 = vmatprep.subr.mxu0 0.0
      %3327 = vmatpush1.msra.mxu0 %v1184
      %3328 = vmatprep.subr.mxu0 0.0
      %3329 = vmatpush1.msra.mxu0 %v1183
      %3330 = vmatprep.subr.mxu0 0.0
      %3331 = vmatpush1.msra.mxu0 %v1182
      %3332 = vmatprep.subr.mxu0 0.0
      %3333 = vmatpush1.msra.mxu0 %v1181
      %3334 = vmatprep.subr.mxu0 0.0
      %3335 = vmatpush1.msra.mxu0 %v1180
      %3336 = vmatprep.subr.mxu0 0.0
      %3337 = vmatpush1.msra.mxu0 %v1179
      %3338 = vmatprep.subr.mxu0 0.0
      %3339 = vmatpush1.msra.mxu0 %v1178
      %3340 = vmatprep.subr.mxu0 0.0
      %3341 = vmatpush1.msra.mxu0 %v1177
      %3342 = vmatprep.subr.mxu0 0.0
      %3343 = vmatpush2.msra.mxu0 0.0
      %3344 = vmatprep.subr.mxu0 0.0
      %3345 = vmatpush2.msra.mxu0 0.0
      %3346 = vmatprep.subr.mxu0 0.0
      %3347 = vmatpush2.msra.mxu0 0.0
      %3348 = vmatprep.subr.mxu0 0.0
      %3349 = vmatpush2.msra.mxu0 0.0
      %3350 = vmatprep.subr.mxu0 0.0
      %3351 = vmatpush2.msra.mxu0 0.0
      %3352 = vmatprep.subr.mxu0 0.0
      %3353 = vmatpush2.msra.mxu0 0.0
      %3354 = vmatprep.subr.mxu0 0.0
      %3355 = vmatpush2.msra.mxu0 0.0
      %3356 = vmatprep.subr.mxu0 0.0
      %3357 = vmatpush2.msra.mxu0 0.0
      %3358 = vmatprep.subr.mxu0 0.0
      %3359 = vmatpush2.msra.mxu0 0.0
      %3360 = vmatprep.subr.mxu0 0.0
      %3361 = vmatpush2.msra.mxu0 0.0
      %3362 = vmatprep.subr.mxu0 0.0
      %3363 = vmatpush2.msra.mxu0 0.0
      %3364 = vmatprep.subr.mxu0 0.0
      %3365 = vmatpush2.msra.mxu0 0.0
      %3366 = vmatprep.subr.mxu0 0.0
      %3367 = vmatpush2.msra.mxu0 0.0
      %3368 = vmatprep.subr.mxu0 0.0
      %3369 = vmatpush2.msra.mxu0 0.0
      %3370 = vmatprep.subr.mxu0 0.0
      %3371 = vmatpush2.msra.mxu0 0.0
      %3372 = vmatprep.subr.mxu0 0.0
      %3373 = vmatpush2.msra.mxu0 0.0
      %3374 = vmatprep.mubr.f32.mxu0 0.0
      %3375 = vmatmul.mubr.f32.gmra.mxu0 %v1059
      %v3376 = vpop.f32.mrf.mxu0
      %v3377 = vadd.f32 %v3308, %v3376
      %v3378 = vpop.f32.mrf.mxu0
      %3379 = vmatprep.mubr.f32.mxu0 0.0
      %3380 = vmatmul.mubr.f32.gmra.mxu0 %v1060
      %v3381 = vpop.f32.mrf.mxu0
      %v3382 = vadd.f32 %v3308, %v3381
      %v3383 = vpop.f32.mrf.mxu0
      %3384 = vdwg.mxu0
      %v3386 = vlaneseq
      %v3387 = vshrl.u32 %v3386, 7
      %v3388 = vsub.s32 0, %v3387
      %v3389 = vrot.slane %v1264, %v3388
      %3391 = vmatprep.subr.mxu0 0.0
      %3392 = vmatpush1.msra.mxu0 %v1260
      %3393 = vmatprep.subr.mxu0 0.0
      %3394 = vmatpush1.msra.mxu0 %v1259
      %3395 = vmatprep.subr.mxu0 0.0
      %3396 = vmatpush1.msra.mxu0 %v1258
      %3397 = vmatprep.subr.mxu0 0.0
      %3398 = vmatpush1.msra.mxu0 %v1257
      %3399 = vmatprep.subr.mxu0 0.0
      %3400 = vmatpush1.msra.mxu0 %v1256
      %3401 = vmatprep.subr.mxu0 0.0
      %3402 = vmatpush1.msra.mxu0 %v1255
      %3403 = vmatprep.subr.mxu0 0.0
      %3404 = vmatpush1.msra.mxu0 %v1254
      %3405 = vmatprep.subr.mxu0 0.0
      %3406 = vmatpush1.msra.mxu0 %v1253
      %3407 = vmatprep.subr.mxu0 0.0
      %3408 = vmatpush1.msra.mxu0 %v1252
      %3409 = vmatprep.subr.mxu0 0.0
      %3410 = vmatpush1.msra.mxu0 %v1251
      %3411 = vmatprep.subr.mxu0 0.0
      %3412 = vmatpush1.msra.mxu0 %v1250
      %3413 = vmatprep.subr.mxu0 0.0
      %3414 = vmatpush1.msra.mxu0 %v1249
      %3415 = vmatprep.subr.mxu0 0.0
      %3416 = vmatpush1.msra.mxu0 %v1248
      %3417 = vmatprep.subr.mxu0 0.0
      %3418 = vmatpush1.msra.mxu0 %v1247
      %3419 = vmatprep.subr.mxu0 0.0
      %3420 = vmatpush1.msra.mxu0 %v1246
      %3421 = vmatprep.subr.mxu0 0.0
      %3422 = vmatpush1.msra.mxu0 %v1245
      %3423 = vmatprep.subr.mxu0 0.0
      %3424 = vmatpush2.msra.mxu0 0.0
      %3425 = vmatprep.subr.mxu0 0.0
      %3426 = vmatpush2.msra.mxu0 0.0
      %3427 = vmatprep.subr.mxu0 0.0
      %3428 = vmatpush2.msra.mxu0 0.0
      %3429 = vmatprep.subr.mxu0 0.0
      %3430 = vmatpush2.msra.mxu0 0.0
      %3431 = vmatprep.subr.mxu0 0.0
      %3432 = vmatpush2.msra.mxu0 0.0
      %3433 = vmatprep.subr.mxu0 0.0
      %3434 = vmatpush2.msra.mxu0 0.0
      %3435 = vmatprep.subr.mxu0 0.0
      %3436 = vmatpush2.msra.mxu0 0.0
      %3437 = vmatprep.subr.mxu0 0.0
      %3438 = vmatpush2.msra.mxu0 0.0
      %3439 = vmatprep.subr.mxu0 0.0
      %3440 = vmatpush2.msra.mxu0 0.0
      %3441 = vmatprep.subr.mxu0 0.0
      %3442 = vmatpush2.msra.mxu0 0.0
      %3443 = vmatprep.subr.mxu0 0.0
      %3444 = vmatpush2.msra.mxu0 0.0
      %3445 = vmatprep.subr.mxu0 0.0
      %3446 = vmatpush2.msra.mxu0 0.0
      %3447 = vmatprep.subr.mxu0 0.0
      %3448 = vmatpush2.msra.mxu0 0.0
      %3449 = vmatprep.subr.mxu0 0.0
      %3450 = vmatpush2.msra.mxu0 0.0
      %3451 = vmatprep.subr.mxu0 0.0
      %3452 = vmatpush2.msra.mxu0 0.0
      %3453 = vmatprep.subr.mxu0 0.0
      %3454 = vmatpush2.msra.mxu0 0.0
      %3455 = vmatprep.mubr.f32.mxu0 0.0
      %3456 = vmatmul.mubr.f32.gmra.mxu0 %v1059
      %v3457 = vpop.f32.mrf.mxu0
      %v3458 = vadd.f32 %v3389, %v3457
      %v3459 = vpop.f32.mrf.mxu0
      %3460 = vmatprep.mubr.f32.mxu0 0.0
      %3461 = vmatmul.mubr.f32.gmra.mxu0 %v1060
      %v3462 = vpop.f32.mrf.mxu0
      %v3463 = vadd.f32 %v3389, %v3462
      %v3464 = vpop.f32.mrf.mxu0
      %3465 = vdwg.mxu0
      %v3467 = vsel %vm1524, %v3296, 0
      %v3470 = vsel %vm1524, %v3377, 0
      %3472 = vmatprep.subr.mxu0 0.0
      %3473 = vmatpush1.xpose.msra.mxu0 0.0
      %3474 = vmatprep.subr.mxu0 0.0
      %3475 = vmatpush1.xpose.msra.mxu0 0.0
      %3476 = vmatprep.subr.mxu0 0.0
      %3477 = vmatpush1.xpose.msra.mxu0 0.0
      %3478 = vmatprep.subr.mxu0 0.0
      %3479 = vmatpush1.xpose.msra.mxu0 0.0
      %3480 = vmatprep.subr.mxu0 0.0
      %3481 = vmatpush1.xpose.msra.mxu0 0.0
      %3482 = vmatprep.subr.mxu0 0.0
      %3483 = vmatpush1.xpose.msra.mxu0 0.0
      %3484 = vmatprep.subr.mxu0 0.0
      %3485 = vmatpush1.xpose.msra.mxu0 0.0
      %3486 = vmatprep.subr.mxu0 0.0
      %3487 = vmatpush1.xpose.msra.mxu0 0.0
      %3488 = vmatprep.subr.mxu0 0.0
      %3489 = vmatpush1.xpose.msra.mxu0 0.0
      %3490 = vmatprep.subr.mxu0 0.0
      %3491 = vmatpush1.xpose.msra.mxu0 0.0
      %3492 = vmatprep.subr.mxu0 0.0
      %3493 = vmatpush1.xpose.msra.mxu0 0.0
      %3494 = vmatprep.subr.mxu0 0.0
      %3495 = vmatpush1.xpose.msra.mxu0 0.0
      %3496 = vmatprep.subr.mxu0 0.0
      %3497 = vmatpush1.xpose.msra.mxu0 0.0
      %3498 = vmatprep.subr.mxu0 0.0
      %3499 = vmatpush1.xpose.msra.mxu0 0.0
      %3500 = vmatprep.subr.mxu0 0.0
      %3501 = vmatpush1.xpose.msra.mxu0 0.0
      %3502 = vmatprep.subr.mxu0 0.0
      %3503 = vmatpush1.xpose.msra.mxu0 %v3470
      %3504 = vmatprep.subr.mxu0 0.0
      %3505 = vmatpush2.xpose.msra.mxu0 0.0
      %3506 = vmatprep.subr.mxu0 0.0
      %3507 = vmatpush2.xpose.msra.mxu0 0.0
      %3508 = vmatprep.subr.mxu0 0.0
      %3509 = vmatpush2.xpose.msra.mxu0 0.0
      %3510 = vmatprep.subr.mxu0 0.0
      %3511 = vmatpush2.xpose.msra.mxu0 0.0
      %3512 = vmatprep.subr.mxu0 0.0
      %3513 = vmatpush2.xpose.msra.mxu0 0.0
      %3514 = vmatprep.subr.mxu0 0.0
      %3515 = vmatpush2.xpose.msra.mxu0 0.0
      %3516 = vmatprep.subr.mxu0 0.0
      %3517 = vmatpush2.xpose.msra.mxu0 0.0
      %3518 = vmatprep.subr.mxu0 0.0
      %3519 = vmatpush2.xpose.msra.mxu0 0.0
      %3520 = vmatprep.subr.mxu0 0.0
      %3521 = vmatpush2.xpose.msra.mxu0 0.0
      %3522 = vmatprep.subr.mxu0 0.0
      %3523 = vmatpush2.xpose.msra.mxu0 0.0
      %3524 = vmatprep.subr.mxu0 0.0
      %3525 = vmatpush2.xpose.msra.mxu0 0.0
      %3526 = vmatprep.subr.mxu0 0.0
      %3527 = vmatpush2.xpose.msra.mxu0 0.0
      %3528 = vmatprep.subr.mxu0 0.0
      %3529 = vmatpush2.xpose.msra.mxu0 0.0
      %3530 = vmatprep.subr.mxu0 0.0
      %3531 = vmatpush2.xpose.msra.mxu0 0.0
      %3532 = vmatprep.subr.mxu0 0.0
      %3533 = vmatpush2.xpose.msra.mxu0 0.0
      %3534 = vmatprep.subr.mxu0 0.0
      %3535 = vmatpush2.xpose.msra.mxu0 0.0
      %3536 = vmatprep.mubr.f32.mxu0 0.0
      %3537 = vmatmul.mubr.f32.gmra.mxu0 %v3467
      %v3538 = vpop.f32.mrf.mxu0
      %v3539 = vadd.f32 0.0, %v3538
      %v3540 = vpop.f32.mrf.mxu0
      %3541 = vdwg.mxu0
      %v3543 = vsel %vm1524, %v3301, 0
      %v3546 = vsel %vm1524, %v3382, 0
      %3548 = vmatprep.subr.mxu0 0.0
      %3549 = vmatpush1.xpose.msra.mxu0 0.0
      %3550 = vmatprep.subr.mxu0 0.0
      %3551 = vmatpush1.xpose.msra.mxu0 0.0
      %3552 = vmatprep.subr.mxu0 0.0
      %3553 = vmatpush1.xpose.msra.mxu0 0.0
      %3554 = vmatprep.subr.mxu0 0.0
      %3555 = vmatpush1.xpose.msra.mxu0 0.0
      %3556 = vmatprep.subr.mxu0 0.0
      %3557 = vmatpush1.xpose.msra.mxu0 0.0
      %3558 = vmatprep.subr.mxu0 0.0
      %3559 = vmatpush1.xpose.msra.mxu0 0.0
      %3560 = vmatprep.subr.mxu0 0.0
      %3561 = vmatpush1.xpose.msra.mxu0 0.0
      %3562 = vmatprep.subr.mxu0 0.0
      %3563 = vmatpush1.xpose.msra.mxu0 0.0
      %3564 = vmatprep.subr.mxu0 0.0
      %3565 = vmatpush1.xpose.msra.mxu0 0.0
      %3566 = vmatprep.subr.mxu0 0.0
      %3567 = vmatpush1.xpose.msra.mxu0 0.0
      %3568 = vmatprep.subr.mxu0 0.0
      %3569 = vmatpush1.xpose.msra.mxu0 0.0
      %3570 = vmatprep.subr.mxu0 0.0
      %3571 = vmatpush1.xpose.msra.mxu0 0.0
      %3572 = vmatprep.subr.mxu0 0.0
      %3573 = vmatpush1.xpose.msra.mxu0 0.0
      %3574 = vmatprep.subr.mxu0 0.0
      %3575 = vmatpush1.xpose.msra.mxu0 0.0
      %3576 = vmatprep.subr.mxu0 0.0
      %3577 = vmatpush1.xpose.msra.mxu0 0.0
      %3578 = vmatprep.subr.mxu0 0.0
      %3579 = vmatpush1.xpose.msra.mxu0 %v3546
      %3580 = vmatprep.subr.mxu0 0.0
      %3581 = vmatpush2.xpose.msra.mxu0 0.0
      %3582 = vmatprep.subr.mxu0 0.0
      %3583 = vmatpush2.xpose.msra.mxu0 0.0
      %3584 = vmatprep.subr.mxu0 0.0
      %3585 = vmatpush2.xpose.msra.mxu0 0.0
      %3586 = vmatprep.subr.mxu0 0.0
      %3587 = vmatpush2.xpose.msra.mxu0 0.0
      %3588 = vmatprep.subr.mxu0 0.0
      %3589 = vmatpush2.xpose.msra.mxu0 0.0
      %3590 = vmatprep.subr.mxu0 0.0
      %3591 = vmatpush2.xpose.msra.mxu0 0.0
      %3592 = vmatprep.subr.mxu0 0.0
      %3593 = vmatpush2.xpose.msra.mxu0 0.0
      %3594 = vmatprep.subr.mxu0 0.0
      %3595 = vmatpush2.xpose.msra.mxu0 0.0
      %3596 = vmatprep.subr.mxu0 0.0
      %3597 = vmatpush2.xpose.msra.mxu0 0.0
      %3598 = vmatprep.subr.mxu0 0.0
      %3599 = vmatpush2.xpose.msra.mxu0 0.0
      %3600 = vmatprep.subr.mxu0 0.0
      %3601 = vmatpush2.xpose.msra.mxu0 0.0
      %3602 = vmatprep.subr.mxu0 0.0
      %3603 = vmatpush2.xpose.msra.mxu0 0.0
      %3604 = vmatprep.subr.mxu0 0.0
      %3605 = vmatpush2.xpose.msra.mxu0 0.0
      %3606 = vmatprep.subr.mxu0 0.0
      %3607 = vmatpush2.xpose.msra.mxu0 0.0
      %3608 = vmatprep.subr.mxu0 0.0
      %3609 = vmatpush2.xpose.msra.mxu0 0.0
      %3610 = vmatprep.subr.mxu0 0.0
      %3611 = vmatpush2.xpose.msra.mxu0 0.0
      %3612 = vmatprep.mubr.f32.mxu0 0.0
      %3613 = vmatmul.mubr.f32.gmra.mxu0 %v3543
      %v3614 = vpop.f32.mrf.mxu0
      %v3615 = vadd.f32 0.0, %v3614
      %v3616 = vpop.f32.mrf.mxu0
      %3617 = vdwg.mxu0
      %v3618 = vmul.f32 %v3539, 0.17677669
      %v3619 = vmul.f32 %v3615, 0.17677669
      %v3620 = vsel %vm1679, %v3618, -inf
      %3621 = vmax.xlane.f32.xlu0 %v3620
      %v3622 = vpop.xlane.xlu0 %3621
      %v3623 = vsel %vm1679, %v3619, -inf
      %3624 = vmax.xlane.f32.xlu0 %v3623
      %v3625 = vpop.xlane.xlu0 %3624
      %v3626 = vsub.f32 %v3618, %v3622
      %v3627 = vsub.f32 %v3619, %v3625
      %v3628 = vmul.f32 %v3626, 1.442695
      %v3629 = vpow.pop %v3628
      %v3630 = vmul.f32 %v3627, 1.442695
      %v3631 = vpow.pop %v3630
      %v3632 = vsel %vm1679, %v3629, 0.0
      %3633 = vadd.xlane.f32.xlu0 %v3632
      %v3634 = vpop.xlane.xlu0 %3633
      %v3635 = vsel %vm1679, %v3631, 0.0
      %3636 = vadd.xlane.f32.xlu0 %v3635
      %v3637 = vpop.xlane.xlu0 %3636
      %v3638 = vrcp.pop %v3634
      %v3639 = vrcp.pop %v3637
      %v3640 = vmul.f32 %v3629, %v3638
      %v3641 = vmul.f32 %v3631, %v3639
      %v3643 = vsel %vm1679, %v3640, 0
      %3645 = vmatprep.subr.mxu0 0.0
      %3646 = vmatpush1.msra.mxu0 0.0
      %3647 = vmatprep.subr.mxu0 0.0
      %3648 = vmatpush1.msra.mxu0 0.0
      %3649 = vmatprep.subr.mxu0 0.0
      %3650 = vmatpush1.msra.mxu0 0.0
      %3651 = vmatprep.subr.mxu0 0.0
      %3652 = vmatpush1.msra.mxu0 0.0
      %3653 = vmatprep.subr.mxu0 0.0
      %3654 = vmatpush1.msra.mxu0 0.0
      %3655 = vmatprep.subr.mxu0 0.0
      %3656 = vmatpush1.msra.mxu0 0.0
      %3657 = vmatprep.subr.mxu0 0.0
      %3658 = vmatpush1.msra.mxu0 0.0
      %3659 = vmatprep.subr.mxu0 0.0
      %3660 = vmatpush1.msra.mxu0 0.0
      %3661 = vmatprep.subr.mxu0 0.0
      %3662 = vmatpush1.msra.mxu0 0.0
      %3663 = vmatprep.subr.mxu0 0.0
      %3664 = vmatpush1.msra.mxu0 0.0
      %3665 = vmatprep.subr.mxu0 0.0
      %3666 = vmatpush1.msra.mxu0 0.0
      %3667 = vmatprep.subr.mxu0 0.0
      %3668 = vmatpush1.msra.mxu0 0.0
      %3669 = vmatprep.subr.mxu0 0.0
      %3670 = vmatpush1.msra.mxu0 0.0
      %3671 = vmatprep.subr.mxu0 0.0
      %3672 = vmatpush1.msra.mxu0 0.0
      %3673 = vmatprep.subr.mxu0 0.0
      %3674 = vmatpush1.msra.mxu0 0.0
      %3675 = vmatprep.subr.mxu0 0.0
      %3676 = vmatpush1.msra.mxu0 %v3458
      %3677 = vmatprep.subr.mxu0 0.0
      %3678 = vmatpush2.msra.mxu0 0.0
      %3679 = vmatprep.subr.mxu0 0.0
      %3680 = vmatpush2.msra.mxu0 0.0
      %3681 = vmatprep.subr.mxu0 0.0
      %3682 = vmatpush2.msra.mxu0 0.0
      %3683 = vmatprep.subr.mxu0 0.0
      %3684 = vmatpush2.msra.mxu0 0.0
      %3685 = vmatprep.subr.mxu0 0.0
      %3686 = vmatpush2.msra.mxu0 0.0
      %3687 = vmatprep.subr.mxu0 0.0
      %3688 = vmatpush2.msra.mxu0 0.0
      %3689 = vmatprep.subr.mxu0 0.0
      %3690 = vmatpush2.msra.mxu0 0.0
      %3691 = vmatprep.subr.mxu0 0.0
      %3692 = vmatpush2.msra.mxu0 0.0
      %3693 = vmatprep.subr.mxu0 0.0
      %3694 = vmatpush2.msra.mxu0 0.0
      %3695 = vmatprep.subr.mxu0 0.0
      %3696 = vmatpush2.msra.mxu0 0.0
      %3697 = vmatprep.subr.mxu0 0.0
      %3698 = vmatpush2.msra.mxu0 0.0
      %3699 = vmatprep.subr.mxu0 0.0
      %3700 = vmatpush2.msra.mxu0 0.0
      %3701 = vmatprep.subr.mxu0 0.0
      %3702 = vmatpush2.msra.mxu0 0.0
      %3703 = vmatprep.subr.mxu0 0.0
      %3704 = vmatpush2.msra.mxu0 0.0
      %3705 = vmatprep.subr.mxu0 0.0
      %3706 = vmatpush2.msra.mxu0 0.0
      %3707 = vmatprep.subr.mxu0 0.0
      %3708 = vmatpush2.msra.mxu0 0.0
      %3709 = vmatprep.mubr.f32.mxu0 0.0
      %3710 = vmatmul.mubr.f32.gmra.mxu0 %v3643
      %v3711 = vpop.f32.mrf.mxu0
      %v3712 = vadd.f32 0.0, %v3711
      %v3713 = vpop.f32.mrf.mxu0
      %3714 = vdwg.mxu0
      %v3716 = vsel %vm1679, %v3641, 0
      %3718 = vmatprep.subr.mxu0 0.0
      %3719 = vmatpush1.msra.mxu0 0.0
      %3720 = vmatprep.subr.mxu0 0.0
      %3721 = vmatpush1.msra.mxu0 0.0
      %3722 = vmatprep.subr.mxu0 0.0
      %3723 = vmatpush1.msra.mxu0 0.0
      %3724 = vmatprep.subr.mxu0 0.0
      %3725 = vmatpush1.msra.mxu0 0.0
      %3726 = vmatprep.subr.mxu0 0.0
      %3727 = vmatpush1.msra.mxu0 0.0
      %3728 = vmatprep.subr.mxu0 0.0
      %3729 = vmatpush1.msra.mxu0 0.0
      %3730 = vmatprep.subr.mxu0 0.0
      %3731 = vmatpush1.msra.mxu0 0.0
      %3732 = vmatprep.subr.mxu0 0.0
      %3733 = vmatpush1.msra.mxu0 0.0
      %3734 = vmatprep.subr.mxu0 0.0
      %3735 = vmatpush1.msra.mxu0 0.0
      %3736 = vmatprep.subr.mxu0 0.0
      %3737 = vmatpush1.msra.mxu0 0.0
      %3738 = vmatprep.subr.mxu0 0.0
      %3739 = vmatpush1.msra.mxu0 0.0
      %3740 = vmatprep.subr.mxu0 0.0
      %3741 = vmatpush1.msra.mxu0 0.0
      %3742 = vmatprep.subr.mxu0 0.0
      %3743 = vmatpush1.msra.mxu0 0.0
      %3744 = vmatprep.subr.mxu0 0.0
      %3745 = vmatpush1.msra.mxu0 0.0
      %3746 = vmatprep.subr.mxu0 0.0
      %3747 = vmatpush1.msra.mxu0 0.0
      %3748 = vmatprep.subr.mxu0 0.0
      %3749 = vmatpush1.msra.mxu0 %v3463
      %3750 = vmatprep.subr.mxu0 0.0
      %3751 = vmatpush2.msra.mxu0 0.0
      %3752 = vmatprep.subr.mxu0 0.0
      %3753 = vmatpush2.msra.mxu0 0.0
      %3754 = vmatprep.subr.mxu0 0.0
      %3755 = vmatpush2.msra.mxu0 0.0
      %3756 = vmatprep.subr.mxu0 0.0
      %3757 = vmatpush2.msra.mxu0 0.0
      %3758 = vmatprep.subr.mxu0 0.0
      %3759 = vmatpush2.msra.mxu0 0.0
      %3760 = vmatprep.subr.mxu0 0.0
      %3761 = vmatpush2.msra.mxu0 0.0
      %3762 = vmatprep.subr.mxu0 0.0
      %3763 = vmatpush2.msra.mxu0 0.0
      %3764 = vmatprep.subr.mxu0 0.0
      %3765 = vmatpush2.msra.mxu0 0.0
      %3766 = vmatprep.subr.mxu0 0.0
      %3767 = vmatpush2.msra.mxu0 0.0
      %3768 = vmatprep.subr.mxu0 0.0
      %3769 = vmatpush2.msra.mxu0 0.0
      %3770 = vmatprep.subr.mxu0 0.0
      %3771 = vmatpush2.msra.mxu0 0.0
      %3772 = vmatprep.subr.mxu0 0.0
      %3773 = vmatpush2.msra.mxu0 0.0
      %3774 = vmatprep.subr.mxu0 0.0
      %3775 = vmatpush2.msra.mxu0 0.0
      %3776 = vmatprep.subr.mxu0 0.0
      %3777 = vmatpush2.msra.mxu0 0.0
      %3778 = vmatprep.subr.mxu0 0.0
      %3779 = vmatpush2.msra.mxu0 0.0
      %3780 = vmatprep.subr.mxu0 0.0
      %3781 = vmatpush2.msra.mxu0 0.0
      %3782 = vmatprep.mubr.f32.mxu0 0.0
      %3783 = vmatmul.mubr.f32.gmra.mxu0 %v3716
      %v3784 = vpop.f32.mrf.mxu0
      %v3785 = vadd.f32 0.0, %v3784
      %v3786 = vpop.f32.mrf.mxu0
      %3787 = vdwg.mxu0
      %v3789 = vsel %vm1524, %v3712, 0
      %v3792 = vsel %vm1524, %v3785, 0
      %3794 = vmatprep.subr.mxu0 0.0
      %3795 = vmatpush1.msra.mxu0 0.0
      %3796 = vmatprep.subr.mxu0 0.0
      %3797 = vmatpush1.msra.mxu0 0.0
      %3798 = vmatprep.subr.mxu0 0.0
      %3799 = vmatpush1.msra.mxu0 0.0
      %3800 = vmatprep.subr.mxu0 0.0
      %3801 = vmatpush1.msra.mxu0 0.0
      %3802 = vmatprep.subr.mxu0 0.0
      %3803 = vmatpush1.msra.mxu0 0.0
      %3804 = vmatprep.subr.mxu0 0.0
      %3805 = vmatpush1.msra.mxu0 0.0
      %3806 = vmatprep.subr.mxu0 0.0
      %3807 = vmatpush1.msra.mxu0 0.0
      %3808 = vmatprep.subr.mxu0 0.0
      %3809 = vmatpush1.msra.mxu0 0.0
      %3810 = vmatprep.subr.mxu0 0.0
      %3811 = vmatpush1.msra.mxu0 0.0
      %3812 = vmatprep.subr.mxu0 0.0
      %3813 = vmatpush1.msra.mxu0 0.0
      %3814 = vmatprep.subr.mxu0 0.0
      %3815 = vmatpush1.msra.mxu0 0.0
      %3816 = vmatprep.subr.mxu0 0.0
      %3817 = vmatpush1.msra.mxu0 0.0
      %3818 = vmatprep.subr.mxu0 0.0
      %3819 = vmatpush1.msra.mxu0 %v1280
      %3820 = vmatprep.subr.mxu0 0.0
      %3821 = vmatpush1.msra.mxu0 %v1279
      %3822 = vmatprep.subr.mxu0 0.0
      %3823 = vmatpush1.msra.mxu0 %v1278
      %3824 = vmatprep.subr.mxu0 0.0
      %3825 = vmatpush1.msra.mxu0 %v1277
      %3826 = vmatprep.subr.mxu0 0.0
      %3827 = vmatpush2.msra.mxu0 0.0
      %3828 = vmatprep.subr.mxu0 0.0
      %3829 = vmatpush2.msra.mxu0 0.0
      %3830 = vmatprep.subr.mxu0 0.0
      %3831 = vmatpush2.msra.mxu0 0.0
      %3832 = vmatprep.subr.mxu0 0.0
      %3833 = vmatpush2.msra.mxu0 0.0
      %3834 = vmatprep.subr.mxu0 0.0
      %3835 = vmatpush2.msra.mxu0 0.0
      %3836 = vmatprep.subr.mxu0 0.0
      %3837 = vmatpush2.msra.mxu0 0.0
      %3838 = vmatprep.subr.mxu0 0.0
      %3839 = vmatpush2.msra.mxu0 0.0
      %3840 = vmatprep.subr.mxu0 0.0
      %3841 = vmatpush2.msra.mxu0 0.0
      %3842 = vmatprep.subr.mxu0 0.0
      %3843 = vmatpush2.msra.mxu0 0.0
      %3844 = vmatprep.subr.mxu0 0.0
      %3845 = vmatpush2.msra.mxu0 0.0
      %3846 = vmatprep.subr.mxu0 0.0
      %3847 = vmatpush2.msra.mxu0 0.0
      %3848 = vmatprep.subr.mxu0 0.0
      %3849 = vmatpush2.msra.mxu0 0.0
      %3850 = vmatprep.subr.mxu0 0.0
      %3851 = vmatpush2.msra.mxu0 0.0
      %3852 = vmatprep.subr.mxu0 0.0
      %3853 = vmatpush2.msra.mxu0 0.0
      %3854 = vmatprep.subr.mxu0 0.0
      %3855 = vmatpush2.msra.mxu0 0.0
      %3856 = vmatprep.subr.mxu0 0.0
      %3857 = vmatpush2.msra.mxu0 0.0
      %3858 = vmatprep.mubr.f32.mxu0 0.0
      %3859 = vmatmul.mubr.f32.gmra.mxu0 %v3789
      %v3860 = vpop.f32.mrf.mxu0
      %v3861 = vadd.f32 0.0, %v3860
      %v3862 = vpop.f32.mrf.mxu0
      %3863 = vmatprep.mubr.f32.mxu0 0.0
      %3864 = vmatmul.mubr.f32.gmra.mxu0 %v3792
      %v3865 = vpop.f32.mrf.mxu0
      %v3866 = vadd.f32 0.0, %v3865
      %v3867 = vpop.f32.mrf.mxu0
      %3868 = vdwg.mxu0
      %v3869 = vadd.f32 %v3221, %v3861
      %v3870 = vadd.f32 %v3222, %v3866
      %v3871 = vadd.f32 %v1059, %v3869
      %v3872 = vadd.f32 %v1060, %v3870
      %v3873 = vld [vmem:[%s908] sm:$0x1]
      %v3875 = vlaneseq
      %v3876 = vshrl.u32 %v3875, 7
      %v3877 = vsub.s32 0, %v3876
      %v3878 = vrot.slane %v3873, %v3877
      %v3880 = vadd.f32 %v3871, %v3878
      %v3881 = vadd.f32 %v3872, %v3878
      %v3882 = vld [vmem:[%s911] sm:$0x1]
      %v3883 = vld [vmem:[%s914] sm:$0x1]
      %3884 = vadd.xlane.f32.xlu0 %v3880
      %v3885 = vpop.xlane.xlu0 %3884
      %3886 = vadd.xlane.f32.xlu0 %v3881
      %v3887 = vpop.xlane.xlu0 %3886
      %v3888 = vrcp.pop 128.0
      %v3889 = vmul.f32 %v3885, %v3888
      %v3890 = vmul.f32 %v3887, %v3888
      %v3891 = vsub.f32 %v3880, %v3889
      %v3892 = vsub.f32 %v3881, %v3890
      %v3893 = vmul.f32 %v3891, %v3891
      %v3894 = vmul.f32 %v3892, %v3892
      %3895 = vadd.xlane.f32.xlu0 %v3893
      %v3896 = vpop.xlane.xlu0 %3895
      %3897 = vadd.xlane.f32.xlu0 %v3894
      %v3898 = vpop.xlane.xlu0 %3897
      %v3899 = vmul.f32 %v3896, %v3888
      %v3900 = vmul.f32 %v3898, %v3888
      %v3901 = vadd.f32 %v3899, 1e-05
      %v3902 = vadd.f32 %v3900, 1e-05
      %v3903 = vrsqrt.pop %v3901
      %v3904 = vrsqrt.pop %v3902
      %v3905 = vmul.f32 %v3891, %v3903
      %v3906 = vmul.f32 %v3892, %v3904
      %v3908 = vlaneseq
      %v3909 = vshrl.u32 %v3908, 7
      %v3910 = vsub.s32 0, %v3909
      %v3911 = vrot.slane %v3882, %v3910
      %v3913 = vmul.f32 %v3905, %v3911
      %v3914 = vmul.f32 %v3906, %v3911
      %v3916 = vlaneseq
      %v3917 = vshrl.u32 %v3916, 7
      %v3918 = vsub.s32 0, %v3917
      %v3919 = vrot.slane %v3883, %v3918
      %v3921 = vadd.f32 %v3913, %v3919
      %v3922 = vadd.f32 %v3914, %v3919
      %v3923 = vld [vmem:[%s919] sm:$0xff]
      %v3924 = vld [vmem:[%s919 + $0x8] sm:$0xff]
      %v3925 = vld [vmem:[%s919 + $0x10] sm:$0xff]
      %v3926 = vld [vmem:[%s919 + $0x18] sm:$0xff]
      %v3927 = vld [vmem:[%s919 + $0x20] sm:$0xff]
      %v3928 = vld [vmem:[%s919 + $0x28] sm:$0xff]
      %v3929 = vld [vmem:[%s919 + $0x30] sm:$0xff]
      %v3930 = vld [vmem:[%s919 + $0x38] sm:$0xff]
      %v3931 = vld [vmem:[%s919 + $0x40] sm:$0xff]
      %v3932 = vld [vmem:[%s919 + $0x48] sm:$0xff]
      %v3933 = vld [vmem:[%s919 + $0x50] sm:$0xff]
      %v3934 = vld [vmem:[%s919 + $0x58] sm:$0xff]
      %v3935 = vld [vmem:[%s919 + $0x60] sm:$0xff]
      %v3936 = vld [vmem:[%s919 + $0x68] sm:$0xff]
      %v3937 = vld [vmem:[%s919 + $0x70] sm:$0xff]
      %v3938 = vld [vmem:[%s919 + $0x78] sm:$0xff]
      %v3939 = vld [vmem:[%s919 + $0x80] sm:$0xff]
      %v3940 = vld [vmem:[%s919 + $0x88] sm:$0xff]
      %v3941 = vld [vmem:[%s919 + $0x90] sm:$0xff]
      %v3942 = vld [vmem:[%s919 + $0x98] sm:$0xff]
      %v3943 = vld [vmem:[%s919 + $0xa0] sm:$0xff]
      %v3944 = vld [vmem:[%s919 + $0xa8] sm:$0xff]
      %v3945 = vld [vmem:[%s919 + $0xb0] sm:$0xff]
      %v3946 = vld [vmem:[%s919 + $0xb8] sm:$0xff]
      %v3947 = vld [vmem:[%s919 + $0xc0] sm:$0xff]
      %v3948 = vld [vmem:[%s919 + $0xc8] sm:$0xff]
      %v3949 = vld [vmem:[%s919 + $0xd0] sm:$0xff]
      %v3950 = vld [vmem:[%s919 + $0xd8] sm:$0xff]
      %v3951 = vld [vmem:[%s919 + $0xe0] sm:$0xff]
      %v3952 = vld [vmem:[%s919 + $0xe8] sm:$0xff]
      %v3953 = vld [vmem:[%s919 + $0xf0] sm:$0xff]
      %v3954 = vld [vmem:[%s919 + $0xf8] sm:$0xff]
      %v3955 = vld [vmem:[%s923] sm:$0x3]
      %v3957 = vlaneseq
      %v3958 = vshrl.u32 %v3957, 7
      %v3959 = vsub.s32 0, %v3958
      %v3960 = vrot.slane %v3955, %v3959
      %v3961 = vlaneseq
      %v3962 = vshrl.u32 %v3961, 7
      %v3963 = vsub.s32 1, %v3962
      %v3964 = vrot.slane %v3955, %v3963
      %3967 = vmatprep.subr.mxu0 %v3954
      %3968 = vmatpush1.msra.mxu0 %v3953
      %3969 = vmatprep.subr.mxu0 %v3952
      %3970 = vmatpush1.msra.mxu0 %v3951
      %3971 = vmatprep.subr.mxu0 %v3950
      %3972 = vmatpush1.msra.mxu0 %v3949
      %3973 = vmatprep.subr.mxu0 %v3948
      %3974 = vmatpush1.msra.mxu0 %v3947
      %3975 = vmatprep.subr.mxu0 %v3946
      %3976 = vmatpush1.msra.mxu0 %v3945
      %3977 = vmatprep.subr.mxu0 %v3944
      %3978 = vmatpush1.msra.mxu0 %v3943
      %3979 = vmatprep.subr.mxu0 %v3942
      %3980 = vmatpush1.msra.mxu0 %v3941
      %3981 = vmatprep.subr.mxu0 %v3940
      %3982 = vmatpush1.msra.mxu0 %v3939
      %3983 = vmatprep.subr.mxu0 %v3938
      %3984 = vmatpush1.msra.mxu0 %v3937
      %3985 = vmatprep.subr.mxu0 %v3936
      %3986 = vmatpush1.msra.mxu0 %v3935
      %3987 = vmatprep.subr.mxu0 %v3934
      %3988 = vmatpush1.msra.mxu0 %v3933
      %3989 = vmatprep.subr.mxu0 %v3932
      %3990 = vmatpush1.msra.mxu0 %v3931
      %3991 = vmatprep.subr.mxu0 %v3930
      %3992 = vmatpush1.msra.mxu0 %v3929
      %3993 = vmatprep.subr.mxu0 %v3928
      %3994 = vmatpush1.msra.mxu0 %v3927
      %3995 = vmatprep.subr.mxu0 %v3926
      %3996 = vmatpush1.msra.mxu0 %v3925
      %3997 = vmatprep.subr.mxu0 %v3924
      %3998 = vmatpush1.msra.mxu0 %v3923
      %3999 = vmatprep.subr.mxu0 0.0
      %4000 = vmatpush2.msra.mxu0 0.0
      %4001 = vmatprep.subr.mxu0 0.0
      %4002 = vmatpush2.msra.mxu0 0.0
      %4003 = vmatprep.subr.mxu0 0.0
      %4004 = vmatpush2.msra.mxu0 0.0
      %4005 = vmatprep.subr.mxu0 0.0
      %4006 = vmatpush2.msra.mxu0 0.0
      %4007 = vmatprep.subr.mxu0 0.0
      %4008 = vmatpush2.msra.mxu0 0.0
      %4009 = vmatprep.subr.mxu0 0.0
      %4010 = vmatpush2.msra.mxu0 0.0
      %4011 = vmatprep.subr.mxu0 0.0
      %4012 = vmatpush2.msra.mxu0 0.0
      %4013 = vmatprep.subr.mxu0 0.0
      %4014 = vmatpush2.msra.mxu0 0.0
      %4015 = vmatprep.subr.mxu0 0.0
      %4016 = vmatpush2.msra.mxu0 0.0
      %4017 = vmatprep.subr.mxu0 0.0
      %4018 = vmatpush2.msra.mxu0 0.0
      %4019 = vmatprep.subr.mxu0 0.0
      %4020 = vmatpush2.msra.mxu0 0.0
      %4021 = vmatprep.subr.mxu0 0.0
      %4022 = vmatpush2.msra.mxu0 0.0
      %4023 = vmatprep.subr.mxu0 0.0
      %4024 = vmatpush2.msra.mxu0 0.0
      %4025 = vmatprep.subr.mxu0 0.0
      %4026 = vmatpush2.msra.mxu0 0.0
      %4027 = vmatprep.subr.mxu0 0.0
      %4028 = vmatpush2.msra.mxu0 0.0
      %4029 = vmatprep.subr.mxu0 0.0
      %4030 = vmatpush2.msra.mxu0 0.0
      %4031 = vmatprep.mubr.f32.mxu0 0.0
      %4032 = vmatmul.mubr.f32.gmra.mxu0 %v3921
      %v4033 = vpop.f32.mrf.mxu0
      %v4034 = vadd.f32 %v3960, %v4033
      %v4035 = vpop.f32.mrf.mxu0
      %v4036 = vadd.f32 %v3964, %v4035
      %4037 = vmatprep.mubr.f32.mxu0 0.0
      %4038 = vmatmul.mubr.f32.gmra.mxu0 %v3922
      %v4039 = vpop.f32.mrf.mxu0
      %v4040 = vadd.f32 %v3960, %v4039
      %v4041 = vpop.f32.mrf.mxu0
      %v4042 = vadd.f32 %v3964, %v4041
      %4043 = vdwg.mxu0
      %v4044 = vmax.f32 %v4034, 0.0
      %v4045 = vmax.f32 %v4036, 0.0
      %v4046 = vmax.f32 %v4040, 0.0
      %v4047 = vmax.f32 %v4042, 0.0
      %v4048 = vld [vmem:[%s928] sm:$0xff]
      %v4049 = vld [vmem:[%s928 + $0x8] sm:$0xff]
      %v4050 = vld [vmem:[%s928 + $0x10] sm:$0xff]
      %v4051 = vld [vmem:[%s928 + $0x18] sm:$0xff]
      %v4052 = vld [vmem:[%s928 + $0x20] sm:$0xff]
      %v4053 = vld [vmem:[%s928 + $0x28] sm:$0xff]
      %v4054 = vld [vmem:[%s928 + $0x30] sm:$0xff]
      %v4055 = vld [vmem:[%s928 + $0x38] sm:$0xff]
      %v4056 = vld [vmem:[%s928 + $0x40] sm:$0xff]
      %v4057 = vld [vmem:[%s928 + $0x48] sm:$0xff]
      %v4058 = vld [vmem:[%s928 + $0x50] sm:$0xff]
      %v4059 = vld [vmem:[%s928 + $0x58] sm:$0xff]
      %v4060 = vld [vmem:[%s928 + $0x60] sm:$0xff]
      %v4061 = vld [vmem:[%s928 + $0x68] sm:$0xff]
      %v4062 = vld [vmem:[%s928 + $0x70] sm:$0xff]
      %v4063 = vld [vmem:[%s928 + $0x78] sm:$0xff]
      %v4064 = vld [vmem:[%s928 + $0x80] sm:$0xff]
      %v4065 = vld [vmem:[%s928 + $0x88] sm:$0xff]
      %v4066 = vld [vmem:[%s928 + $0x90] sm:$0xff]
      %v4067 = vld [vmem:[%s928 + $0x98] sm:$0xff]
      %v4068 = vld [vmem:[%s928 + $0xa0] sm:$0xff]
      %v4069 = vld [vmem:[%s928 + $0xa8] sm:$0xff]
      %v4070 = vld [vmem:[%s928 + $0xb0] sm:$0xff]
      %v4071 = vld [vmem:[%s928 + $0xb8] sm:$0xff]
      %v4072 = vld [vmem:[%s928 + $0xc0] sm:$0xff]
      %v4073 = vld [vmem:[%s928 + $0xc8] sm:$0xff]
      %v4074 = vld [vmem:[%s928 + $0xd0] sm:$0xff]
      %v4075 = vld [vmem:[%s928 + $0xd8] sm:$0xff]
      %v4076 = vld [vmem:[%s928 + $0xe0] sm:$0xff]
      %v4077 = vld [vmem:[%s928 + $0xe8] sm:$0xff]
      %v4078 = vld [vmem:[%s928 + $0xf0] sm:$0xff]
      %v4079 = vld [vmem:[%s928 + $0xf8] sm:$0xff]
      %4080 = vmatprep.subr.mxu0 0.0
      %4081 = vmatpush1.msra.mxu0 %v4063
      %4082 = vmatprep.subr.mxu0 0.0
      %4083 = vmatpush1.msra.mxu0 %v4062
      %4084 = vmatprep.subr.mxu0 0.0
      %4085 = vmatpush1.msra.mxu0 %v4061
      %4086 = vmatprep.subr.mxu0 0.0
      %4087 = vmatpush1.msra.mxu0 %v4060
      %4088 = vmatprep.subr.mxu0 0.0
      %4089 = vmatpush1.msra.mxu0 %v4059
      %4090 = vmatprep.subr.mxu0 0.0
      %4091 = vmatpush1.msra.mxu0 %v4058
      %4092 = vmatprep.subr.mxu0 0.0
      %4093 = vmatpush1.msra.mxu0 %v4057
      %4094 = vmatprep.subr.mxu0 0.0
      %4095 = vmatpush1.msra.mxu0 %v4056
      %4096 = vmatprep.subr.mxu0 0.0
      %4097 = vmatpush1.msra.mxu0 %v4055
      %4098 = vmatprep.subr.mxu0 0.0
      %4099 = vmatpush1.msra.mxu0 %v4054
      %4100 = vmatprep.subr.mxu0 0.0
      %4101 = vmatpush1.msra.mxu0 %v4053
      %4102 = vmatprep.subr.mxu0 0.0
      %4103 = vmatpush1.msra.mxu0 %v4052
      %4104 = vmatprep.subr.mxu0 0.0
      %4105 = vmatpush1.msra.mxu0 %v4051
      %4106 = vmatprep.subr.mxu0 0.0
      %4107 = vmatpush1.msra.mxu0 %v4050
      %4108 = vmatprep.subr.mxu0 0.0
      %4109 = vmatpush1.msra.mxu0 %v4049
      %4110 = vmatprep.subr.mxu0 0.0
      %4111 = vmatpush1.msra.mxu0 %v4048
      %4112 = vmatprep.subr.mxu0 0.0
      %4113 = vmatpush2.msra.mxu0 %v4079
      %4114 = vmatprep.subr.mxu0 0.0
      %4115 = vmatpush2.msra.mxu0 %v4078
      %4116 = vmatprep.subr.mxu0 0.0
      %4117 = vmatpush2.msra.mxu0 %v4077
      %4118 = vmatprep.subr.mxu0 0.0
      %4119 = vmatpush2.msra.mxu0 %v4076
      %4120 = vmatprep.subr.mxu0 0.0
      %4121 = vmatpush2.msra.mxu0 %v4075
      %4122 = vmatprep.subr.mxu0 0.0
      %4123 = vmatpush2.msra.mxu0 %v4074
      %4124 = vmatprep.subr.mxu0 0.0
      %4125 = vmatpush2.msra.mxu0 %v4073
      %4126 = vmatprep.subr.mxu0 0.0
      %4127 = vmatpush2.msra.mxu0 %v4072
      %4128 = vmatprep.subr.mxu0 0.0
      %4129 = vmatpush2.msra.mxu0 %v4071
      %4130 = vmatprep.subr.mxu0 0.0
      %4131 = vmatpush2.msra.mxu0 %v4070
      %4132 = vmatprep.subr.mxu0 0.0
      %4133 = vmatpush2.msra.mxu0 %v4069
      %4134 = vmatprep.subr.mxu0 0.0
      %4135 = vmatpush2.msra.mxu0 %v4068
      %4136 = vmatprep.subr.mxu0 0.0
      %4137 = vmatpush2.msra.mxu0 %v4067
      %4138 = vmatprep.subr.mxu0 0.0
      %4139 = vmatpush2.msra.mxu0 %v4066
      %4140 = vmatprep.subr.mxu0 0.0
      %4141 = vmatpush2.msra.mxu0 %v4065
      %4142 = vmatprep.subr.mxu0 0.0
      %4143 = vmatpush2.msra.mxu0 %v4064
      %4144 = vmatprep.mubr.f32.mxu0 %v4045
      %4145 = vmatmul.mubr.f32.gmra.mxu0 %v4044
      %v4146 = vpop.f32.mrf.mxu0
      %v4147 = vadd.f32 0.0, %v4146
      %v4148 = vpop.f32.mrf.mxu0
      %4149 = vmatprep.mubr.f32.mxu0 %v4047
      %4150 = vmatmul.mubr.f32.gmra.mxu0 %v4046
      %v4151 = vpop.f32.mrf.mxu0
      %v4152 = vadd.f32 0.0, %v4151
      %v4153 = vpop.f32.mrf.mxu0
      %4154 = vdwg.mxu0
      %v4155 = vadd.f32 %v3921, %v4147
      %v4156 = vadd.f32 %v3922, %v4152
      %v4157 = vld [vmem:[%s931] sm:$0x1]
      %v4159 = vlaneseq
      %v4160 = vshrl.u32 %v4159, 7
      %v4161 = vsub.s32 0, %v4160
      %v4162 = vrot.slane %v4157, %v4161
      %v4164 = vadd.f32 %v4155, %v4162
      %v4165 = vadd.f32 %v4156, %v4162
      %v4166 = vld [vmem:[%s934] sm:$0x1]
      %v4167 = vld [vmem:[%s937] sm:$0x1]
      %4168 = vadd.xlane.f32.xlu0 %v4164
      %v4169 = vpop.xlane.xlu0 %4168
      %4170 = vadd.xlane.f32.xlu0 %v4165
      %v4171 = vpop.xlane.xlu0 %4170
      %v4172 = vmul.f32 %v4169, %v3888
      %v4173 = vmul.f32 %v4171, %v3888
      %v4174 = vsub.f32 %v4164, %v4172
      %v4175 = vsub.f32 %v4165, %v4173
      %v4176 = vmul.f32 %v4174, %v4174
      %v4177 = vmul.f32 %v4175, %v4175
      %4178 = vadd.xlane.f32.xlu0 %v4176
      %v4179 = vpop.xlane.xlu0 %4178
      %4180 = vadd.xlane.f32.xlu0 %v4177
      %v4181 = vpop.xlane.xlu0 %4180
      %v4182 = vmul.f32 %v4179, %v3888
      %v4183 = vmul.f32 %v4181, %v3888
      %v4184 = vadd.f32 %v4182, 1e-05
      %v4185 = vadd.f32 %v4183, 1e-05
      %v4186 = vrsqrt.pop %v4184
      %v4187 = vrsqrt.pop %v4185
      %v4188 = vmul.f32 %v4174, %v4186
      %v4189 = vmul.f32 %v4175, %v4187
      %v4191 = vlaneseq
      %v4192 = vshrl.u32 %v4191, 7
      %v4193 = vsub.s32 0, %v4192
      %v4194 = vrot.slane %v4166, %v4193
      %v4196 = vmul.f32 %v4188, %v4194
      %v4197 = vmul.f32 %v4189, %v4194
      %v4199 = vlaneseq
      %v4200 = vshrl.u32 %v4199, 7
      %v4201 = vsub.s32 0, %v4200
      %v4202 = vrot.slane %v4167, %v4201
      %v4204 = vadd.f32 %v4196, %v4202
      %v4205 = vadd.f32 %v4197, %v4202
      %v4206 = vmax.f32 %v4204, 0.0
      %v4207 = vmax.f32 %v4205, 0.0
      %4208 = vst [vmem:[#allocation2] sm:$0xff] %v4206
      %4209 = vst [vmem:[#allocation2 + $0x8] sm:$0xff] %v4207
      %p4210 = scmp.eq.s32.totalorder %s33, 1
      // Predicated region
      $region113: #{tpu_custom_call.1} parent=107 // pred_check
        %p4211 = pneg %p4210
      $region114: #{tpu_custom_call.1} parent=107 // pred_check_branch
        %4213 = sbr.rel (%p4211) target = $region116
      $region115: #{tpu_custom_call.1} parent=107 // pred_region
        %v4214 = vld [vmem:[%s20] sm:$0xff]
        %v4215 = vld [vmem:[%s20 + $0x8] sm:$0xff]
        %v4216 = vld [vmem:[%s20 + $0x10] sm:$0xff]
        %v4217 = vld [vmem:[%s20 + $0x18] sm:$0xff]
        %v4218 = vld [vmem:[%s20 + $0x20] sm:$0xff]
        %v4219 = vld [vmem:[%s20 + $0x28] sm:$0xff]
        %v4220 = vld [vmem:[%s20 + $0x30] sm:$0xff]
        %v4221 = vld [vmem:[%s20 + $0x38] sm:$0xff]
        %v4222 = vld [vmem:[%s20 + $0x40] sm:$0xff]
        %v4223 = vld [vmem:[%s20 + $0x48] sm:$0xff]
        %v4224 = vld [vmem:[%s20 + $0x50] sm:$0xff]
        %v4225 = vld [vmem:[%s20 + $0x58] sm:$0xff]
        %v4226 = vld [vmem:[%s20 + $0x60] sm:$0xff]
        %v4227 = vld [vmem:[%s20 + $0x68] sm:$0xff]
        %v4228 = vld [vmem:[%s20 + $0x70] sm:$0xff]
        %v4229 = vld [vmem:[%s20 + $0x78] sm:$0xff]
        %v4230 = vld [vmem:[%s21] sm:$0x1]
        %v4232 = vlaneseq
        %v4233 = vshrl.u32 %v4232, 7
        %v4234 = vsub.s32 0, %v4233
        %v4235 = vrot.slane %v4230, %v4234
        %4237 = vmatprep.subr.mxu0 0.0
        %4238 = vmatpush1.msra.mxu0 %v4229
        %4239 = vmatprep.subr.mxu0 0.0
        %4240 = vmatpush1.msra.mxu0 %v4228
        %4241 = vmatprep.subr.mxu0 0.0
        %4242 = vmatpush1.msra.mxu0 %v4227
        %4243 = vmatprep.subr.mxu0 0.0
        %4244 = vmatpush1.msra.mxu0 %v4226
        %4245 = vmatprep.subr.mxu0 0.0
        %4246 = vmatpush1.msra.mxu0 %v4225
        %4247 = vmatprep.subr.mxu0 0.0
        %4248 = vmatpush1.msra.mxu0 %v4224
        %4249 = vmatprep.subr.mxu0 0.0
        %4250 = vmatpush1.msra.mxu0 %v4223
        %4251 = vmatprep.subr.mxu0 0.0
        %4252 = vmatpush1.msra.mxu0 %v4222
        %4253 = vmatprep.subr.mxu0 0.0
        %4254 = vmatpush1.msra.mxu0 %v4221
        %4255 = vmatprep.subr.mxu0 0.0
        %4256 = vmatpush1.msra.mxu0 %v4220
        %4257 = vmatprep.subr.mxu0 0.0
        %4258 = vmatpush1.msra.mxu0 %v4219
        %4259 = vmatprep.subr.mxu0 0.0
        %4260 = vmatpush1.msra.mxu0 %v4218
        %4261 = vmatprep.subr.mxu0 0.0
        %4262 = vmatpush1.msra.mxu0 %v4217
        %4263 = vmatprep.subr.mxu0 0.0
        %4264 = vmatpush1.msra.mxu0 %v4216
        %4265 = vmatprep.subr.mxu0 0.0
        %4266 = vmatpush1.msra.mxu0 %v4215
        %4267 = vmatprep.subr.mxu0 0.0
        %4268 = vmatpush1.msra.mxu0 %v4214
        %4269 = vmatprep.subr.mxu0 0.0
        %4270 = vmatpush2.msra.mxu0 0.0
        %4271 = vmatprep.subr.mxu0 0.0
        %4272 = vmatpush2.msra.mxu0 0.0
        %4273 = vmatprep.subr.mxu0 0.0
        %4274 = vmatpush2.msra.mxu0 0.0
        %4275 = vmatprep.subr.mxu0 0.0
        %4276 = vmatpush2.msra.mxu0 0.0
        %4277 = vmatprep.subr.mxu0 0.0
        %4278 = vmatpush2.msra.mxu0 0.0
        %4279 = vmatprep.subr.mxu0 0.0
        %4280 = vmatpush2.msra.mxu0 0.0
        %4281 = vmatprep.subr.mxu0 0.0
        %4282 = vmatpush2.msra.mxu0 0.0
        %4283 = vmatprep.subr.mxu0 0.0
        %4284 = vmatpush2.msra.mxu0 0.0
        %4285 = vmatprep.subr.mxu0 0.0
        %4286 = vmatpush2.msra.mxu0 0.0
        %4287 = vmatprep.subr.mxu0 0.0
        %4288 = vmatpush2.msra.mxu0 0.0
        %4289 = vmatprep.subr.mxu0 0.0
        %4290 = vmatpush2.msra.mxu0 0.0
        %4291 = vmatprep.subr.mxu0 0.0
        %4292 = vmatpush2.msra.mxu0 0.0
        %4293 = vmatprep.subr.mxu0 0.0
        %4294 = vmatpush2.msra.mxu0 0.0
        %4295 = vmatprep.subr.mxu0 0.0
        %4296 = vmatpush2.msra.mxu0 0.0
        %4297 = vmatprep.subr.mxu0 0.0
        %4298 = vmatpush2.msra.mxu0 0.0
        %4299 = vmatprep.subr.mxu0 0.0
        %4300 = vmatpush2.msra.mxu0 0.0
        %4301 = vmatprep.mubr.f32.mxu0 0.0
        %4302 = vmatmul.mubr.f32.gmra.mxu0 %v4204
        %v4303 = vpop.f32.mrf.mxu0
        %v4304 = vadd.f32 %v4235, %v4303
        %v4305 = vpop.f32.mrf.mxu0
        %4306 = vmatprep.mubr.f32.mxu0 0.0
        %4307 = vmatmul.mubr.f32.gmra.mxu0 %v4205
        %v4308 = vpop.f32.mrf.mxu0
        %v4309 = vadd.f32 %v4235, %v4308
        %v4310 = vpop.f32.mrf.mxu0
        %4311 = vdwg.mxu0
        %v4312 = vmul.f32 %v4304, 0.5
        %v4313 = vmul.f32 %v4309, 0.5
        %v4314 = vtanh.pop %v4312
        %v4315 = vtanh.pop %v4313
        %v4316 = vadd.f32 %v4314, 1.0
        %v4317 = vadd.f32 %v4315, 1.0
        %v4318 = vmul.f32 %v4316, 0.5
        %v4319 = vmul.f32 %v4317, 0.5
        %4320 = vst.msk [vmem:[%s22] sm:$0xff] %vm1679, %v4318
        %4321 = vst.msk [vmem:[%s22 + $0x8] sm:$0xff] %vm1679, %v4319
      $region116: #{tpu_custom_call.1} parent=107 // pred_fallthru
        _
      // Predicated region
      $region117: #{tpu_custom_call.1} parent=107 // pred_check
        %p4322 = pneg %p593
      $region118: #{tpu_custom_call.1} parent=107 // pred_check_branch
        %4324 = sbr.rel (%p4322) target = $region120
      $region119: #{tpu_custom_call.1} parent=107 // pred_region
        _
      $region120: #{tpu_custom_call.1} parent=107 // pred_fallthru
        _
      // Predicated region
      $region121: #{tpu_custom_call.1} parent=107 // pred_check
        %p4325 = pneg %p593
      $region122: #{tpu_custom_call.1} parent=107 // pred_check_branch
        %4327 = sbr.rel (%p4325) target = $region124
      $region123: #{tpu_custom_call.1} parent=107 // pred_region
        _
      $region124: #{tpu_custom_call.1} parent=107 // pred_fallthru
        _
    $region108: #{tpu_custom_call.1} parent=5 // pred_fallthru
      _
    %p4328 = scmp.le.s32.totalorder 2, %s28
    // Predicated region
    $region125: #{tpu_custom_call.1} parent=5 // pred_check
      %p4329 = pneg %p4328
    $region126: #{tpu_custom_call.1} parent=5 // pred_check_branch
      %4331 = sbr.rel (%p4329) target = $region128
    $region127: #{tpu_custom_call.1} parent=5 // pred_region
      %s4332 = ssub.s32 %s28, 2
    $region128: #{tpu_custom_call.1} parent=5 // pred_fallthru
      _
  $region6: #{tpu_custom_call.1} parent=0 // loop_footer
    %s32 = sadd.s32 1, %s28
  $region7: #{tpu_custom_call.1} parent=0 // loop_footer_branch
    %27 = sbr.rel target = $region3
  $region8: #{tpu_custom_call.1} parent=0 // loop_exit
    _

</llo_original>
